<compile_context>
chip_gen: v5e
topology: v5e:2x2
jax: 0.10.0
libtpu: 0.0.40
codegen_flags: <defaults>
</compile_context>

<pallas_src>
import jax
import jax.numpy as jnp
from jax import lax
from jax.experimental import pallas as pl
from jax.experimental.pallas import tpu as pltpu

BINS = 10
GHMR_MU = 0.02
_LANES = 128
_CHUNK_ROWS = 16              # 16 rows = 2 f32 vregs / 1 packed bf16 vreg per load
_MAX_TILE_ROWS = 1024         # (1024,128) f32 block = 512 KiB; ~85% of HBM roofline
_NUM_PARALLEL_CHUNKS = 2      # leading "parallel" grid axis (v7x has 2 TCs); harmless elsewhere
_VMEM_LIMIT = 32 * 1024 * 1024
_MATCH_TILE_P = 1024          # prior-axis tile for the match kernel (bounds (O,TP) live VMEM)

# GHM bin edges (bins=10, momentum=0, loss_weight=1, standard GHM-paper losses).
_GHMC_EDGES = tuple(i / BINS for i in range(BINS)) + (1.0 + 1e-6,)
_GHMR_EDGES = tuple(i / BINS for i in range(BINS)) + (1.0e3,)
_GHMC_PAD_TGT = -1.0          # padded one-hot sentinel: g = |0.5 - (-1)| = 1.5 -> no bin


def _cdiv(a, b):
    return -(-a // b)


def _round_up(x, m):
    return _cdiv(x, m) * m


# ---------------------------------------------------------------------------
# Shared GHM helpers (in-kernel)
# ---------------------------------------------------------------------------

def _accumulate_bins(g, loss, edges, cnts, lsums):
    """10-bin count / loss-sum accumulation for one (16,128) chunk.

    Shared ">= edge" compares, per-bin XOR interval test and selects (no int casts,
    no per-bin mul).  NaN / out-of-range g (invalid or padded elements) fails every
    compare and therefore lands in no bin.  Accumulators stay full (8,128) vregs.
    """
    ge = [g >= e for e in edges]                              # BINS + 1 masks
    new_c, new_l = [], []
    for i in range(BINS):
        in_bin = jnp.logical_xor(ge[i], ge[i + 1])            # edges[i] <= g < edges[i+1]
        c_sel = jnp.where(in_bin, 1.0, 0.0)
        l_sel = jnp.where(in_bin, loss, 0.0)
        new_c.append(cnts[i] + c_sel[:8] + c_sel[8:])
        new_l.append(lsums[i] + l_sel[:8] + l_sel[8:])
    return tuple(new_c), tuple(new_l)


def _ghmc_chunk(pred, tgt_raw):
    """GHM-C per-chunk math: stable BCE-with-logits + gradient norm g."""
    tgt = tgt_raw.astype(jnp.float32)
    e = jnp.exp(-jnp.abs(pred))                               # one shared EUP transcendental
    denom = 1.0 + e
    sig = jnp.where(pred >= 0.0, 1.0, e) / denom              # stable sigmoid (exact divide)
    bce = jnp.maximum(pred, 0.0) - pred * tgt + jnp.log(denom)
    g = jnp.abs(sig - tgt)                                    # in [0,1]; 1.5 for padded sentinel
    return g, bce


def _ghmr_chunk(pred, tgt):
    """GHM-R per-chunk math: authentic smooth-L1 + gradient norm g (NaN tgt -> no bin)."""
    diff = pred - tgt
    rad = jnp.sqrt(diff * diff + GHMR_MU * GHMR_MU)
    loss = rad - GHMR_MU
    g = jnp.abs(diff) * pl.reciprocal(rad, approx=True)       # divide on the idle EUP
    return g, loss


def _make_ghm_kernel(chunk_fn, edges):
    """Streamed GHM kernel: grid = (parallel chunk, arbitrary tile); per-chunk partial
    (BINS, 8, 128) count / loss-sum accumulators live in the output blocks."""

    def kernel(pred_ref, tgt_ref, cnt_ref, lsum_ref):
        ti = pl.program_id(1)

        @pl.when(ti == 0)
        def _init():
            cnt_ref[...] = jnp.zeros_like(cnt_ref)
            lsum_ref[...] = jnp.zeros_like(lsum_ref)

        n_chunks = pred_ref.shape[0] // _CHUNK_ROWS

        def body(c, carry):
            cnts, lsums = carry
            r = pl.multiple_of(c * _CHUNK_ROWS, _CHUNK_ROWS)
            pred = pred_ref[pl.ds(r, _CHUNK_ROWS), :]
            tgt = tgt_ref[pl.ds(r, _CHUNK_ROWS), :]
            g, loss = chunk_fn(pred, tgt)
            return _accumulate_bins(g, loss, edges, cnts, lsums)

        zeros = tuple(jnp.zeros((8, _LANES), jnp.float32) for _ in range(BINS))
        cnts, lsums = lax.fori_loop(0, n_chunks, body, (zeros, zeros))
        for i in range(BINS):
            cnt_ref[0, i] = cnt_ref[0, i] + cnts[i]
            lsum_ref[0, i] = lsum_ref[0, i] + lsums[i]

    return kernel


_GHMC_KERNEL = _make_ghm_kernel(_ghmc_chunk, _GHMC_EDGES)
_GHMR_KERNEL = _make_ghm_kernel(_ghmr_chunk, _GHMR_EDGES)


# ---------------------------------------------------------------------------
# GHM wrappers (tiling, padding, finalize)
# ---------------------------------------------------------------------------

def _ghm_grid(n_elems):
    rows = _cdiv(n_elems, _LANES)
    tile_rows = min(_round_up(rows, 32), _MAX_TILE_ROWS)      # 32: safe for bf16/int8 packing
    num_tiles = _cdiv(rows, tile_rows)
    n_par = min(_NUM_PARALLEL_CHUNKS, num_tiles)
    n_seq = _cdiv(num_tiles, n_par)
    rows_pad = n_par * n_seq * tile_rows
    return tile_rows, n_par, n_seq, rows_pad


def _lane_dense(x_flat, rows_pad, pad_value):
    """Flat vector -> lane-dense (rows_pad, 128) slab, padded with a sentinel value."""
    # TODO(synk): jnp.pad copies the full array; a ragged last tile handled in-kernel
    #             would avoid the extra wrapper HBM pass.
    n = x_flat.shape[0]
    x = jnp.pad(x_flat, (0, rows_pad * _LANES - n), constant_values=pad_value)
    return x.reshape(rows_pad, _LANES)


def _onehot_slab(labels, num_classes, rows_pad):
    """bf16 one-hot target built directly at the padded lane-dense size (single pass,
    no construct-then-pad copy); padding uses the -1 sentinel (label_weight==1 implicit)."""
    m = labels.shape[0]
    n = m * num_classes
    total = rows_pad * _LANES
    idx = jnp.arange(total, dtype=jnp.int32)
    row = idx // num_classes
    col = idx - row * num_classes
    lab = jnp.take(labels.astype(jnp.int32), jnp.minimum(row, m - 1))
    onehot = jnp.where(col == lab, 1.0, 0.0)
    slab = jnp.where(idx < n, onehot, _GHMC_PAD_TGT)
    return slab.astype(jnp.bfloat16).reshape(rows_pad, _LANES)


def _ghm_pallas_call(kernel, pred2d, tgt2d, n_par, n_seq, tile_rows):
    def in_map(gi, ti):
        return (gi * n_seq + ti, 0)

    def out_map(gi, ti):
        return (gi, 0, 0, 0)

    return pl.pallas_call(
        kernel,
        out_shape=(jax.ShapeDtypeStruct((n_par, BINS, 8, _LANES), jnp.float32),
                   jax.ShapeDtypeStruct((n_par, BINS, 8, _LANES), jnp.float32)),
        grid=(n_par, n_seq),
        in_specs=[pl.BlockSpec((tile_rows, _LANES), in_map),
                  pl.BlockSpec((tile_rows, _LANES), in_map)],
        out_specs=(pl.BlockSpec((1, BINS, 8, _LANES), out_map),
                   pl.BlockSpec((1, BINS, 8, _LANES), out_map)),
        compiler_params=pltpu.CompilerParams(
            dimension_semantics=("parallel", "arbitrary"),
            vmem_limit_bytes=_VMEM_LIMIT),
    )(pred2d, tgt2d)


def _ghm_finalize(cnt, lsum):
    """loss = (1/n) * sum_i lsum_i / cnt_i over non-empty bins (the global `tot` of the
    reference GHM formulation cancels exactly).  Tiny merge in plain JAX."""
    c = jnp.sum(cnt, axis=(0, 2, 3))                          # (BINS,)
    l = jnp.sum(lsum, axis=(0, 2, 3))                         # (BINS,)
    has = c > 0.0
    n = jnp.sum(has.astype(jnp.float32))
    per_bin = jnp.where(has, l / jnp.maximum(c, 1.0), 0.0)
    return jnp.where(n > 0.0, jnp.sum(per_bin) / jnp.maximum(n, 1.0), 0.0)


def ghmc_pallas(logits, labels, num_classes):
    """GHM-C loss.  logits: (M, C) f32, labels: (M,) int class indices."""
    m, c = logits.shape
    n = m * c
    tile_rows, n_par, n_seq, rows_pad = _ghm_grid(n)
    pred2d = _lane_dense(logits.reshape(-1).astype(jnp.float32), rows_pad, 0.0)
    tgt2d = _onehot_slab(labels, num_classes, rows_pad)
    cnt, lsum = _ghm_pallas_call(_GHMC_KERNEL, pred2d, tgt2d, n_par, n_seq, tile_rows)
    return _ghm_finalize(cnt, lsum)


def ghmr_pallas(loc_p, loc_t, pos_mask):
    """GHM-R loss.  loc_p/loc_t: (M, 4) f32, pos_mask: (M,) bool of positive priors.
    Invalid/padded targets are NaN so they fall in no bin (no mask stream needed)."""
    m = loc_p.shape[0]
    n = m * 4
    tile_rows, n_par, n_seq, rows_pad = _ghm_grid(n)
    pred2d = _lane_dense(loc_p.reshape(-1).astype(jnp.float32), rows_pad, 0.0)
    tgt_m = jnp.where(pos_mask[:, None], loc_t.astype(jnp.float32), jnp.nan)
    tgt2d = _lane_dense(tgt_m.reshape(-1), rows_pad, float("nan"))
    cnt, lsum = _ghm_pallas_call(_GHMR_KERNEL, pred2d, tgt2d, n_par, n_seq, tile_rows)
    return _ghm_finalize(cnt, lsum)


# ---------------------------------------------------------------------------
# IoU matching kernel (batch-parallel, prior-axis tiled)
# ---------------------------------------------------------------------------

def _match_kernel(truths_ref, priors_ref, ovl_ref, bti_ref, bpi_ref, bpv_sc, bpidx_sc):
    """Per-image IoU over one prior chunk; best-gt-per-prior folded in-chunk,
    best-prior-per-gt kept as running max/argmax accumulators across chunks."""
    pc = pl.program_id(1)
    tp = ovl_ref.shape[-1]

    t = truths_ref[0]                                         # (O, 4) corner gt boxes
    tx1, ty1, tx2, ty2 = t[:, 0:1], t[:, 1:2], t[:, 2:3], t[:, 3:4]
    px1 = priors_ref[0:1, :]
    py1 = priors_ref[1:2, :]
    px2 = priors_ref[2:3, :]
    py2 = priors_ref[3:4, :]

    iw = jnp.maximum(jnp.minimum(tx2, px2) - jnp.maximum(tx1, px1), 0.0)
    ih = jnp.maximum(jnp.minimum(ty2, py2) - jnp.maximum(ty1, py1), 0.0)
    inter = iw * ih                                           # (O, TP)
    area_t = (tx2 - tx1) * (ty2 - ty1)                        # (O, 1)
    area_p = (px2 - px1) * (py2 - py1)                        # (1, TP)
    union = jnp.maximum(area_t + area_p - inter, 1e-12)
    iou = inter / union                                       # exact division (threshold safety)

    num_obj = iou.shape[0]

    # best gt per prior (entirely within this chunk)
    best_t = jnp.max(iou, axis=0, keepdims=True)              # (1, TP)
    io = lax.broadcasted_iota(jnp.int32, iou.shape, 0).astype(jnp.float32)
    bti = jnp.min(jnp.where(iou >= best_t, io, float(num_obj)), axis=0, keepdims=True)
    ovl_ref[...] = best_t.reshape(ovl_ref.shape)
    bti_ref[...] = bti.astype(jnp.int32).reshape(bti_ref.shape)

    # best prior per gt: running max / first-argmax across prior chunks
    @pl.when(pc == 0)
    def _init():
        bpv_sc[...] = jnp.full_like(bpv_sc, -1.0)
        bpidx_sc[...] = jnp.zeros_like(bpidx_sc)

    chunk_best = jnp.max(iou, axis=1, keepdims=True)          # (O, 1)
    ip = lax.broadcasted_iota(jnp.int32, iou.shape, 1).astype(jnp.float32)
    chunk_arg = jnp.min(jnp.where(iou >= chunk_best, ip, float(tp)), axis=1, keepdims=True)
    chunk_arg = chunk_arg + (pc * tp).astype(jnp.float32)     # global prior index

    better = chunk_best > bpv_sc[...]                         # strict: keep earliest chunk on ties
    bpv_sc[...] = jnp.where(better, chunk_best, bpv_sc[...])
    bpidx_sc[...] = jnp.where(better, chunk_arg, bpidx_sc[...])

    @pl.when(pc == pl.num_programs(1) - 1)
    def _fin():
        bpi_ref[...] = bpidx_sc[...].astype(jnp.int32).reshape(bpi_ref.shape)


def match_all_pallas(truths_all, priors_point):
    """Batched matching.  truths_all: (B, O, 4) corner gt; priors_point: (P, 4) corner.
    Returns best_truth_overlap (B,P) f32, best_truth_idx (B,P) i32, best_prior_idx (B,O) i32."""
    b, o, _ = truths_all.shape
    p = priors_point.shape[0]
    p_pad = _round_up(p, _LANES)                              # lane-dense outputs
    tp = min(_MATCH_TILE_P, p_pad)
    p_pad = _round_up(p_pad, tp)
    n_pc = p_pad // tp
    priors_t = jnp.pad(priors_point.T.astype(jnp.float32), ((0, 0), (0, p_pad - p)))

    ovl, bti, bpi = pl.pallas_call(
        _match_kernel,
        out_shape=(jax.ShapeDtypeStruct((b, 1, p_pad), jnp.float32),
                   jax.ShapeDtypeStruct((b, 1, p_pad), jnp.int32),
                   jax.ShapeDtypeStruct((b, o, 1), jnp.int32)),
        grid=(b, n_pc),
        in_specs=[pl.BlockSpec((1, o, 4), lambda bi, pi: (bi, 0, 0)),
                  pl.BlockSpec((4, tp), lambda bi, pi: (0, pi))],
        out_specs=(pl.BlockSpec((1, 1, tp), lambda bi, pi: (bi, 0, pi)),
                   pl.BlockSpec((1, 1, tp), lambda bi, pi: (bi, 0, pi)),
                   pl.BlockSpec((1, o, 1), lambda bi, pi: (bi, 0, 0))),
        scratch_shapes=[pltpu.VMEM((o, 1), jnp.float32),
                        pltpu.VMEM((o, 1), jnp.float32)],
        compiler_params=pltpu.CompilerParams(
            dimension_semantics=("parallel", "arbitrary"),
            vmem_limit_bytes=_VMEM_LIMIT),
    )(truths_all.astype(jnp.float32), priors_t)
    return ovl[:, 0, :p], bti[:, 0, :p], bpi[:, :, 0]


# ---------------------------------------------------------------------------
# SSD matching glue (plain JAX, vectorized over the batch)
# ---------------------------------------------------------------------------

def point_form(boxes):
    """(cx,cy,w,h) -> (x1,y1,x2,y2)."""
    return jnp.concatenate(
        [boxes[:, :2] - boxes[:, 2:] / 2.0, boxes[:, :2] + boxes[:, 2:] / 2.0], axis=1)


def encode_batch(matched, priors, variances):
    """matched: (B,P,4) corner-form gt; priors: (P,4) center-form."""
    pr = priors[None, :, :]
    g_cxcy = (matched[..., :2] + matched[..., 2:]) / 2.0 - pr[..., :2]
    g_cxcy = g_cxcy / (variances[0] * pr[..., 2:])
    g_wh = (matched[..., 2:] - matched[..., :2]) / pr[..., 2:]
    g_wh = jnp.log(g_wh) / variances[1]
    return jnp.concatenate([g_cxcy, g_wh], axis=-1)


def match_batch(threshold, truths_all, priors, variances, labels_all):
    """Whole-batch matching: returns loc_t (B,P,4) encoded targets, conf_t (B,P) int32."""
    num, num_objs = labels_all.shape
    ovl, bti, bpi = match_all_pallas(truths_all, point_form(priors))
    batch_ix = jnp.arange(num)

    best_truth_overlap = ovl.at[batch_ix[:, None], bpi].set(2.0)

    # TODO(synk): data-dependent sequential scatter best_truth_idx[best_prior_idx[j]] = j
    #             stays in plain JAX (exact last-write-wins order of the PyTorch loop),
    #             now as a single lax.fori_loop instead of an unrolled HLO chain.
    def _scatter(j, idx):
        return idx.at[batch_ix, bpi[:, j]].set(j)

    best_truth_idx = lax.fori_loop(0, num_objs, _scatter, bti)

    matches = jnp.take_along_axis(truths_all, best_truth_idx[:, :, None], axis=1)  # (B,P,4)
    conf = jnp.take_along_axis(labels_all, best_truth_idx, axis=1).astype(jnp.int32) + 1
    conf = jnp.where(best_truth_overlap < threshold, 0, conf)                      # background
    loc = encode_batch(matches, priors, variances)
    return loc, conf


# ---------------------------------------------------------------------------
# GHMMultiBoxLoss (forward only)
# ---------------------------------------------------------------------------

class GHMMultiBoxLossPallas:
    def __init__(self, num_classes, overlap_thresh, prior_for_matching, bkg_label,
                 neg_mining, neg_pos, neg_overlap, encode_target):
        self.num_classes = num_classes
        self.threshold = overlap_thresh
        self.background_label = bkg_label
        self.encode_target = encode_target
        self.use_prior_for_matching = prior_for_matching
        self.do_neg_mining = neg_mining          # unused by GHM forward (as in reference)
        self.negpos_ratio = neg_pos              # unused by GHM forward (as in reference)
        self.neg_overlap = neg_overlap           # unused by GHM forward (as in reference)
        self.variance = [0.1, 0.2]

    def __call__(self, predictions, priors, targets):
        loc_data, conf_data = predictions
        truths_all = targets[..., :4]            # (B, O, 4)
        labels_all = targets[..., 4]             # (B, O)

        loc_t, conf_t = match_batch(self.threshold, truths_all, priors,
                                    self.variance, labels_all)
        pos = conf_t > 0                         # (B, P) positive priors

        # GHM-R localization loss over positives (equivalent to the reference's
        # gather of positives: non-positives are excluded from every bin).
        loss_l = ghmr_pallas(loc_data.reshape(-1, 4), loc_t.reshape(-1, 4),
                             pos.reshape(-1))

        # GHM-C classification loss (one-hot target built from class indices,
        # label_weight == 1 implicit; GHM module bodies were not in the reference
        # file, standard GHM-paper losses assumed).
        loss_c = ghmc_pallas(conf_data.reshape(-1, self.num_classes),
                             conf_t.reshape(-1), self.num_classes)
        return loss_l, loss_c


# ---------------------------------------------------------------------------
# Demo
# ---------------------------------------------------------------------------

if __name__ == "__main__":
    key = jax.random.PRNGKey(0)
    num = 2            # batch size
    num_priors = 256
    num_classes = 8
    num_objs = 3

    k1, k2, k3, k4, k5, k6 = jax.random.split(key, 6)

    loc_data = jax.random.normal(k1, (num, num_priors, 4), jnp.float32) * 0.1
    conf_data = jax.random.normal(k2, (num, num_priors, num_classes), jnp.float32)

    # priors: (cx, cy, w, h)
    cxy = jax.random.uniform(k3, (num_priors, 2), minval=0.2, maxval=0.8)
    wh = jax.random.uniform(k4, (num_priors, 2), minval=0.1, maxval=0.3)
    priors = jnp.concatenate([cxy, wh], axis=1).astype(jnp.float32)

    # ground truth: corner-form boxes with positive width/height, labels in [0, C-2]
    t_cxy = jax.random.uniform(k5, (num, num_objs, 2), minval=0.3, maxval=0.7)
    t_wh = jax.random.uniform(k6, (num, num_objs, 2), minval=0.1, maxval=0.3)
    t_x1y1 = t_cxy - t_wh / 2.0
    t_x2y2 = t_cxy + t_wh / 2.0
    labels = (jnp.arange(num * num_objs, dtype=jnp.float32)
              .reshape(num, num_objs, 1) % (num_classes - 1))
    targets = jnp.concatenate([t_x1y1, t_x2y2, labels], axis=-1).astype(jnp.float32)

    criterion = GHMMultiBoxLossPallas(
        num_classes=num_classes, overlap_thresh=0.5, prior_for_matching=True,
        bkg_label=0, neg_mining=True, neg_pos=3, neg_overlap=0.5, encode_target=False)

    @jax.jit
    def loss_fn(loc, conf, pri, tgt):
        return criterion((loc, conf), pri, tgt)

    loss_l, loss_c = loss_fn(loc_data, conf_data, priors, targets)
    jax.block_until_ready((loss_l, loss_c))
    print("KERNEL_OK")
</pallas_src>

<mosaic_0001>
module attributes {stable_mosaic.version = 11 : i64} {
  func.func @_match_kernel(%arg0: i32, %arg1: i32, %arg2: memref<1x3x4xf32, #tpu.memory_space<vmem>>, %arg3: memref<4x256xf32, #tpu.memory_space<vmem>>, %arg4: memref<1x1x256xf32, #tpu.memory_space<vmem>>, %arg5: memref<1x1x256xi32, #tpu.memory_space<vmem>>, %arg6: memref<1x3x1xi32, #tpu.memory_space<vmem>>, %arg7: memref<3x1xf32, #tpu.memory_space<vmem>>, %arg8: memref<3x1xf32, #tpu.memory_space<vmem>>) attributes {dimension_semantics = [#tpu.dimension_semantics<parallel>, #tpu.dimension_semantics<arbitrary>], iteration_bounds = array<i64: 2, 1>, scalar_prefetch = 0 : i64, scratch_operands = 2 : i64, tpu.core_type = #tpu.core_type<tc>, window_params = [{transform_indices = @transform_0, window_bounds = array<i64: 1, 3, 4>}, {transform_indices = @transform_1, window_bounds = array<i64: 4, 256>}, {transform_indices = @transform_2, window_bounds = array<i64: 1, 1, 256>}, {transform_indices = @transform_3, window_bounds = array<i64: 1, 1, 256>}, {transform_indices = @transform_4, window_bounds = array<i64: 1, 3, 1>}]} {
    %c0 = arith.constant 0 : index
    %c0_0 = arith.constant 0 : index
    %c0_1 = arith.constant 0 : index
    %0 = vector.load %arg2[%c0, %c0_0, %c0_1] : memref<1x3x4xf32, #tpu.memory_space<vmem>>, vector<1x3x4xf32>
    %1 = vector.shape_cast %0 : vector<1x3x4xf32> to vector<3x4xf32>
    %2 = vector.extract_strided_slice %1 {offsets = [0, 0], sizes = [3, 1], strides = [1, 1]} : vector<3x4xf32> to vector<3x1xf32>
    %3 = vector.extract_strided_slice %1 {offsets = [0, 1], sizes = [3, 1], strides = [1, 1]} : vector<3x4xf32> to vector<3x1xf32>
    %4 = vector.extract_strided_slice %1 {offsets = [0, 2], sizes = [3, 1], strides = [1, 1]} : vector<3x4xf32> to vector<3x1xf32>
    %5 = vector.extract_strided_slice %1 {offsets = [0, 3], sizes = [3, 1], strides = [1, 1]} : vector<3x4xf32> to vector<3x1xf32>
    %c0_2 = arith.constant 0 : index
    %c0_3 = arith.constant 0 : index
    %6 = vector.load %arg3[%c0_2, %c0_3] : memref<4x256xf32, #tpu.memory_space<vmem>>, vector<1x256xf32>
    %c1 = arith.constant 1 : index
    %c0_4 = arith.constant 0 : index
    %7 = vector.load %arg3[%c1, %c0_4] : memref<4x256xf32, #tpu.memory_space<vmem>>, vector<1x256xf32>
    %c2 = arith.constant 2 : index
    %c0_5 = arith.constant 0 : index
    %8 = vector.load %arg3[%c2, %c0_5] : memref<4x256xf32, #tpu.memory_space<vmem>>, vector<1x256xf32>
    %c3 = arith.constant 3 : index
    %c0_6 = arith.constant 0 : index
    %9 = vector.load %arg3[%c3, %c0_6] : memref<4x256xf32, #tpu.memory_space<vmem>>, vector<1x256xf32>
    %10 = vector.broadcast %4 : vector<3x1xf32> to vector<3x256xf32>
    %11 = vector.broadcast %8 : vector<1x256xf32> to vector<3x256xf32>
    %12 = arith.minimumf %10, %11 : vector<3x256xf32>
    %13 = vector.broadcast %2 : vector<3x1xf32> to vector<3x256xf32>
    %14 = vector.broadcast %6 : vector<1x256xf32> to vector<3x256xf32>
    %15 = arith.maximumf %13, %14 : vector<3x256xf32>
    %16 = arith.subf %12, %15 : vector<3x256xf32>
    %cst = arith.constant 0.000000e+00 : f32
    %17 = vector.broadcast %cst : f32 to vector<3x256xf32>
    %18 = arith.maximumf %16, %17 : vector<3x256xf32>
    %19 = vector.broadcast %5 : vector<3x1xf32> to vector<3x256xf32>
    %20 = vector.broadcast %9 : vector<1x256xf32> to vector<3x256xf32>
    %21 = arith.minimumf %19, %20 : vector<3x256xf32>
    %22 = vector.broadcast %3 : vector<3x1xf32> to vector<3x256xf32>
    %23 = vector.broadcast %7 : vector<1x256xf32> to vector<3x256xf32>
    %24 = arith.maximumf %22, %23 : vector<3x256xf32>
    %25 = arith.subf %21, %24 : vector<3x256xf32>
    %cst_7 = arith.constant 0.000000e+00 : f32
    %26 = vector.broadcast %cst_7 : f32 to vector<3x256xf32>
    %27 = arith.maximumf %25, %26 : vector<3x256xf32>
    %28 = arith.mulf %18, %27 : vector<3x256xf32>
    %29 = arith.subf %4, %2 : vector<3x1xf32>
    %30 = arith.subf %5, %3 : vector<3x1xf32>
    %31 = arith.mulf %29, %30 : vector<3x1xf32>
    %32 = arith.subf %8, %6 : vector<1x256xf32>
    %33 = arith.subf %9, %7 : vector<1x256xf32>
    %34 = arith.mulf %32, %33 : vector<1x256xf32>
    %35 = vector.broadcast %31 : vector<3x1xf32> to vector<3x256xf32>
    %36 = vector.broadcast %34 : vector<1x256xf32> to vector<3x256xf32>
    %37 = arith.addf %35, %36 : vector<3x256xf32>
    %38 = arith.subf %37, %28 : vector<3x256xf32>
    %cst_8 = arith.constant 9.99999996E-13 : f32
    %39 = vector.broadcast %cst_8 : f32 to vector<3x256xf32>
    %40 = arith.maximumf %38, %39 : vector<3x256xf32>
    %41 = arith.divf %28, %40 : vector<3x256xf32>
    %cst_9 = arith.constant dense<0xFF800000> : vector<256xf32>
    %42 = vector.multi_reduction <maximumf>, %41, %cst_9 [0] : vector<3x256xf32> to vector<256xf32>
    %43 = vector.shape_cast %42 : vector<256xf32> to vector<1x256xf32>
    %44 = tpu.iota {dimensions = array<i32: 0>} : vector<3x256xi32>
    %45 = arith.sitofp %44 : vector<3x256xi32> to vector<3x256xf32>
    %46 = vector.broadcast %43 : vector<1x256xf32> to vector<3x256xf32>
    %47 = arith.cmpf oge, %41, %46 : vector<3x256xf32>
    %cst_10 = arith.constant 3.000000e+00 : f32
    %48 = vector.broadcast %cst_10 : f32 to vector<3x256xf32>
    %49 = arith.select %47, %45, %48 : vector<3x256xi1>, vector<3x256xf32>
    %cst_11 = arith.constant dense<0x7F800000> : vector<256xf32>
    %50 = vector.multi_reduction <minimumf>, %49, %cst_11 [0] : vector<3x256xf32> to vector<256xf32>
    %51 = vector.shape_cast %50 : vector<256xf32> to vector<1x256xf32>
    %52 = vector.shape_cast %43 : vector<1x256xf32> to vector<1x1x256xf32>
    %c0_12 = arith.constant 0 : index
    %c0_13 = arith.constant 0 : index
    %c0_14 = arith.constant 0 : index
    %53 = vector.load %arg4[%c0_12, %c0_13, %c0_14] : memref<1x1x256xf32, #tpu.memory_space<vmem>>, vector<1x1x256xf32>
    tpu.vector_store %arg4[%c0_12, %c0_13, %c0_14], %52 {strides = array<i32>} : memref<1x1x256xf32, #tpu.memory_space<vmem>>, vector<1x1x256xf32>,
    %54 = arith.fptosi %51 : vector<1x256xf32> to vector<1x256xi32>
    %55 = vector.shape_cast %54 : vector<1x256xi32> to vector<1x1x256xi32>
    %c0_15 = arith.constant 0 : index
    %c0_16 = arith.constant 0 : index
    %c0_17 = arith.constant 0 : index
    %56 = vector.load %arg5[%c0_15, %c0_16, %c0_17] : memref<1x1x256xi32, #tpu.memory_space<vmem>>, vector<1x1x256xi32>
    tpu.vector_store %arg5[%c0_15, %c0_16, %c0_17], %55 {strides = array<i32>} : memref<1x1x256xi32, #tpu.memory_space<vmem>>, vector<1x1x256xi32>,
    %c0_i32 = arith.constant 0 : i32
    %57 = arith.cmpi eq, %arg1, %c0_i32 : i32
    %58 = arith.extui %57 : i1 to i32
    %c0_i32_18 = arith.constant 0 : i32
    %59 = arith.cmpi ne, %58, %c0_i32_18 : i32
    scf.if %59 {
      %cst_34 = arith.constant -1.000000e+00 : f32
      %85 = vector.broadcast %cst_34 : f32 to vector<3x1xf32>
      %c0_35 = arith.constant 0 : index
      %c0_36 = arith.constant 0 : index
      %86 = vector.load %arg7[%c0_35, %c0_36] : memref<3x1xf32, #tpu.memory_space<vmem>>, vector<3x1xf32>
      tpu.vector_store %arg7[%c0_35, %c0_36], %85 {strides = array<i32>} : memref<3x1xf32, #tpu.memory_space<vmem>>, vector<3x1xf32>,
      %cst_37 = arith.constant 0.000000e+00 : f32
      %87 = vector.broadcast %cst_37 : f32 to vector<3x1xf32>
      %c0_38 = arith.constant 0 : index
      %c0_39 = arith.constant 0 : index
      %88 = vector.load %arg8[%c0_38, %c0_39] : memref<3x1xf32, #tpu.memory_space<vmem>>, vector<3x1xf32>
      tpu.vector_store %arg8[%c0_38, %c0_39], %87 {strides = array<i32>} : memref<3x1xf32, #tpu.memory_space<vmem>>, vector<3x1xf32>,
    } else {
    }
    %cst_19 = arith.constant dense<0xFF800000> : vector<3xf32>
    %60 = vector.multi_reduction <maximumf>, %41, %cst_19 [1] : vector<3x256xf32> to vector<3xf32>
    %61 = vector.shape_cast %60 : vector<3xf32> to vector<3x1xf32>
    %62 = tpu.iota {dimensions = array<i32: 1>} : vector<3x256xi32>
    %63 = arith.sitofp %62 : vector<3x256xi32> to vector<3x256xf32>
    %64 = vector.broadcast %61 : vector<3x1xf32> to vector<3x256xf32>
    %65 = arith.cmpf oge, %41, %64 : vector<3x256xf32>
    %cst_20 = arith.constant 2.560000e+02 : f32
    %66 = vector.broadcast %cst_20 : f32 to vector<3x256xf32>
    %67 = arith.select %65, %63, %66 : vector<3x256xi1>, vector<3x256xf32>
    %cst_21 = arith.constant dense<0x7F800000> : vector<3xf32>
    %68 = vector.multi_reduction <minimumf>, %67, %cst_21 [1] : vector<3x256xf32> to vector<3xf32>
    %69 = vector.shape_cast %68 : vector<3xf32> to vector<3x1xf32>
    %c256_i32 = arith.constant 256 : i32
    %70 = arith.muli %arg1, %c256_i32 : i32
    %71 = arith.sitofp %70 : i32 to f32
    %72 = vector.broadcast %71 : f32 to vector<3x1xf32>
    %73 = arith.addf %69, %72 : vector<3x1xf32>
    %c0_22 = arith.constant 0 : index
    %c0_23 = arith.constant 0 : index
    %74 = vector.load %arg7[%c0_22, %c0_23] : memref<3x1xf32, #tpu.memory_space<vmem>>, vector<3x1xf32>
    %75 = arith.cmpf ogt, %61, %74 : vector<3x1xf32>
    %c0_24 = arith.constant 0 : index
    %c0_25 = arith.constant 0 : index
    %76 = vector.load %arg7[%c0_24, %c0_25] : memref<3x1xf32, #tpu.memory_space<vmem>>, vector<3x1xf32>
    %77 = arith.select %75, %61, %76 : vector<3x1xi1>, vector<3x1xf32>
    %c0_26 = arith.constant 0 : index
    %c0_27 = arith.constant 0 : index
    %78 = vector.load %arg7[%c0_26, %c0_27] : memref<3x1xf32, #tpu.memory_space<vmem>>, vector<3x1xf32>
    tpu.vector_store %arg7[%c0_26, %c0_27], %77 {strides = array<i32>} : memref<3x1xf32, #tpu.memory_space<vmem>>, vector<3x1xf32>,
    %c0_28 = arith.constant 0 : index
    %c0_29 = arith.constant 0 : index
    %79 = vector.load %arg8[%c0_28, %c0_29] : memref<3x1xf32, #tpu.memory_space<vmem>>, vector<3x1xf32>
    %80 = arith.select %75, %73, %79 : vector<3x1xi1>, vector<3x1xf32>
    %c0_30 = arith.constant 0 : index
    %c0_31 = arith.constant 0 : index
    %81 = vector.load %arg8[%c0_30, %c0_31] : memref<3x1xf32, #tpu.memory_space<vmem>>, vector<3x1xf32>
    tpu.vector_store %arg8[%c0_30, %c0_31], %80 {strides = array<i32>} : memref<3x1xf32, #tpu.memory_space<vmem>>, vector<3x1xf32>,
    %c0_i32_32 = arith.constant 0 : i32
    %82 = arith.cmpi eq, %arg1, %c0_i32_32 : i32
    %83 = arith.extui %82 : i1 to i32
    %c0_i32_33 = arith.constant 0 : i32
    %84 = arith.cmpi ne, %83, %c0_i32_33 : i32
    scf.if %84 {
      %c0_34 = arith.constant 0 : index
      %c0_35 = arith.constant 0 : index
      %85 = vector.load %arg8[%c0_34, %c0_35] : memref<3x1xf32, #tpu.memory_space<vmem>>, vector<3x1xf32>
      %86 = arith.fptosi %85 : vector<3x1xf32> to vector<3x1xi32>
      %87 = vector.shape_cast %86 : vector<3x1xi32> to vector<1x3x1xi32>
      %c0_36 = arith.constant 0 : index
      %c0_37 = arith.constant 0 : index
      %c0_38 = arith.constant 0 : index
      %88 = vector.load %arg6[%c0_36, %c0_37, %c0_38] : memref<1x3x1xi32, #tpu.memory_space<vmem>>, vector<1x3x1xi32>
      tpu.vector_store %arg6[%c0_36, %c0_37, %c0_38], %87 {strides = array<i32>} : memref<1x3x1xi32, #tpu.memory_space<vmem>>, vector<1x3x1xi32>,
    } else {
    }
    return
  }
  func.func @transform_0(%arg0: i32, %arg1: i32) -> (i32, i32, i32) {
    %c0_i32 = arith.constant 0 : i32
    %c0_i32_0 = arith.constant 0 : i32
    %c0_i32_1 = arith.constant 0 : i32
    return %arg0, %c0_i32, %c0_i32_0 : i32, i32, i32
  }
  func.func @transform_1(%arg0: i32, %arg1: i32) -> (i32, i32) {
    %c0_i32 = arith.constant 0 : i32
    %c0_i32_0 = arith.constant 0 : i32
    return %c0_i32, %arg1 : i32, i32
  }
  func.func @transform_2(%arg0: i32, %arg1: i32) -> (i32, i32, i32) {
    %c0_i32 = arith.constant 0 : i32
    %c0_i32_0 = arith.constant 0 : i32
    return %arg0, %c0_i32, %arg1 : i32, i32, i32
  }
  func.func @transform_3(%arg0: i32, %arg1: i32) -> (i32, i32, i32) {
    %c0_i32 = arith.constant 0 : i32
    %c0_i32_0 = arith.constant 0 : i32
    return %arg0, %c0_i32, %arg1 : i32, i32, i32
  }
  func.func @transform_4(%arg0: i32, %arg1: i32) -> (i32, i32, i32) {
    %c0_i32 = arith.constant 0 : i32
    %c0_i32_0 = arith.constant 0 : i32
    %c0_i32_1 = arith.constant 0 : i32
    return %arg0, %c0_i32, %c0_i32_0 : i32, i32, i32
  }
}

module attributes {stable_mosaic.version = 11 : i64} {
  func.func @kernel(%arg0: i32, %arg1: i32, %arg2: memref<32x128xf32, #tpu.memory_space<vmem>>, %arg3: memref<32x128xf32, #tpu.memory_space<vmem>>, %arg4: memref<1x10x8x128xf32, #tpu.memory_space<vmem>>, %arg5: memref<1x10x8x128xf32, #tpu.memory_space<vmem>>) attributes {dimension_semantics = [#tpu.dimension_semantics<parallel>, #tpu.dimension_semantics<arbitrary>], iteration_bounds = array<i64: 1, 1>, scalar_prefetch = 0 : i64, scratch_operands = 0 : i64, tpu.core_type = #tpu.core_type<tc>, window_params = [{transform_indices = @transform_0, window_bounds = array<i64: 32, 128>}, {transform_indices = @transform_1, window_bounds = array<i64: 32, 128>}, {transform_indices = @transform_2, window_bounds = array<i64: 1, 10, 8, 128>}, {transform_indices = @transform_3, window_bounds = array<i64: 1, 10, 8, 128>}]} {
    %c0_i32 = arith.constant 0 : i32
    %0 = arith.cmpi eq, %arg1, %c0_i32 : i32
    %1 = arith.extui %0 : i1 to i32
    %c0_i32_0 = arith.constant 0 : i32
    %2 = arith.cmpi ne, %1, %c0_i32_0 : i32
    scf.if %2 {
      %cst_162 = arith.constant 0.000000e+00 : f32
      %135 = vector.broadcast %cst_162 : f32 to vector<1x10x8x128xf32>
      %c0_163 = arith.constant 0 : index
      %c0_164 = arith.constant 0 : index
      %c0_165 = arith.constant 0 : index
      %c0_166 = arith.constant 0 : index
      %136 = vector.load %arg4[%c0_163, %c0_164, %c0_165, %c0_166] : memref<1x10x8x128xf32, #tpu.memory_space<vmem>>, vector<1x10x8x128xf32>
      tpu.vector_store %arg4[%c0_163, %c0_164, %c0_165, %c0_166], %135 {strides = array<i32>} : memref<1x10x8x128xf32, #tpu.memory_space<vmem>>, vector<1x10x8x128xf32>,
      %cst_167 = arith.constant 0.000000e+00 : f32
      %137 = vector.broadcast %cst_167 : f32 to vector<1x10x8x128xf32>
      %c0_168 = arith.constant 0 : index
      %c0_169 = arith.constant 0 : index
      %c0_170 = arith.constant 0 : index
      %c0_171 = arith.constant 0 : index
      %138 = vector.load %arg5[%c0_168, %c0_169, %c0_170, %c0_171] : memref<1x10x8x128xf32, #tpu.memory_space<vmem>>, vector<1x10x8x128xf32>
      tpu.vector_store %arg5[%c0_168, %c0_169, %c0_170, %c0_171], %137 {strides = array<i32>} : memref<1x10x8x128xf32, #tpu.memory_space<vmem>>, vector<1x10x8x128xf32>,
    } else {
    }
    %cst = arith.constant 0.000000e+00 : f32
    %3 = vector.broadcast %cst : f32 to vector<8x128xf32>
    %cst_1 = arith.constant 0.000000e+00 : f32
    %4 = vector.broadcast %cst_1 : f32 to vector<8x128xf32>
    %cst_2 = arith.constant 0.000000e+00 : f32
    %5 = vector.broadcast %cst_2 : f32 to vector<8x128xf32>
    %cst_3 = arith.constant 0.000000e+00 : f32
    %6 = vector.broadcast %cst_3 : f32 to vector<8x128xf32>
    %cst_4 = arith.constant 0.000000e+00 : f32
    %7 = vector.broadcast %cst_4 : f32 to vector<8x128xf32>
    %cst_5 = arith.constant 0.000000e+00 : f32
    %8 = vector.broadcast %cst_5 : f32 to vector<8x128xf32>
    %cst_6 = arith.constant 0.000000e+00 : f32
    %9 = vector.broadcast %cst_6 : f32 to vector<8x128xf32>
    %cst_7 = arith.constant 0.000000e+00 : f32
    %10 = vector.broadcast %cst_7 : f32 to vector<8x128xf32>
    %cst_8 = arith.constant 0.000000e+00 : f32
    %11 = vector.broadcast %cst_8 : f32 to vector<8x128xf32>
    %cst_9 = arith.constant 0.000000e+00 : f32
    %12 = vector.broadcast %cst_9 : f32 to vector<8x128xf32>
    %c0_i32_10 = arith.constant 0 : i32
    %c2_i32 = arith.constant 2 : i32
    %13 = arith.addi %c0_i32_10, %c2_i32 : i32
    %c1_i32 = arith.constant 1 : i32
    %14:20 = scf.for %arg6 = %c0_i32_10 to %13 step %c1_i32 iter_args(%arg7 = %3, %arg8 = %4, %arg9 = %5, %arg10 = %6, %arg11 = %7, %arg12 = %8, %arg13 = %9, %arg14 = %10, %arg15 = %11, %arg16 = %12, %arg17 = %3, %arg18 = %4, %arg19 = %5, %arg20 = %6, %arg21 = %7, %arg22 = %8, %arg23 = %9, %arg24 = %10, %arg25 = %11, %arg26 = %12) -> (vector<8x128xf32>, vector<8x128xf32>, vector<8x128xf32>, vector<8x128xf32>, vector<8x128xf32>, vector<8x128xf32>, vector<8x128xf32>, vector<8x128xf32>, vector<8x128xf32>, vector<8x128xf32>, vector<8x128xf32>, vector<8x128xf32>, vector<8x128xf32>, vector<8x128xf32>, vector<8x128xf32>, vector<8x128xf32>, vector<8x128xf32>, vector<8x128xf32>, vector<8x128xf32>, vector<8x128xf32>)  : i32 {
      %c16_i32 = arith.constant 16 : i32
      %135 = arith.muli %arg6, %c16_i32 : i32
      %136 = tpu.assume_multiple %135, 16 : i32
      %137 = arith.index_cast %136 : i32 to index
      %c0_162 = arith.constant 0 : index
      %138 = vector.load %arg2[%137, %c0_162] : memref<32x128xf32, #tpu.memory_space<vmem>>, vector<16x128xf32>
      %139 = arith.index_cast %136 : i32 to index
      %c0_163 = arith.constant 0 : index
      %140 = vector.load %arg3[%139, %c0_163] : memref<32x128xf32, #tpu.memory_space<vmem>>, vector<16x128xf32>
      %141 = arith.subf %138, %140 : vector<16x128xf32>
      %142 = arith.mulf %141, %141 : vector<16x128xf32>
      %cst_164 = arith.constant 4.000000e-04 : f32
      %143 = vector.broadcast %cst_164 : f32 to vector<16x128xf32>
      %144 = arith.addf %142, %143 : vector<16x128xf32>
      %145 = math.sqrt %144 : vector<16x128xf32>
      %cst_165 = arith.constant 2.000000e-02 : f32
      %146 = vector.broadcast %cst_165 : f32 to vector<16x128xf32>
      %147 = arith.subf %145, %146 : vector<16x128xf32>
      %148 = math.absf %141 : vector<16x128xf32>
      %149 = tpu.reciprocal %145 {approx = true} : vector<16x128xf32> -> vector<16x128xf32>
      %150 = arith.mulf %148, %149 : vector<16x128xf32>
      %cst_166 = arith.constant 0.000000e+00 : f32
      %151 = vector.broadcast %cst_166 : f32 to vector<16x128xf32>
      %152 = arith.cmpf oge, %150, %151 : vector<16x128xf32>
      %cst_167 = arith.constant 1.000000e-01 : f32
      %153 = vector.broadcast %cst_167 : f32 to vector<16x128xf32>
      %154 = arith.cmpf oge, %150, %153 : vector<16x128xf32>
      %cst_168 = arith.constant 2.000000e-01 : f32
      %155 = vector.broadcast %cst_168 : f32 to vector<16x128xf32>
      %156 = arith.cmpf oge, %150, %155 : vector<16x128xf32>
      %cst_169 = arith.constant 3.000000e-01 : f32
      %157 = vector.broadcast %cst_169 : f32 to vector<16x128xf32>
      %158 = arith.cmpf oge, %150, %157 : vector<16x128xf32>
      %cst_170 = arith.constant 4.000000e-01 : f32
      %159 = vector.broadcast %cst_170 : f32 to vector<16x128xf32>
      %160 = arith.cmpf oge, %150, %159 : vector<16x128xf32>
      %cst_171 = arith.constant 5.000000e-01 : f32
      %161 = vector.broadcast %cst_171 : f32 to vector<16x128xf32>
      %162 = arith.cmpf oge, %150, %161 : vector<16x128xf32>
      %cst_172 = arith.constant 6.000000e-01 : f32
      %163 = vector.broadcast %cst_172 : f32 to vector<16x128xf32>
      %164 = arith.cmpf oge, %150, %163 : vector<16x128xf32>
      %cst_173 = arith.constant 0.699999988 : f32
      %165 = vector.broadcast %cst_173 : f32 to vector<16x128xf32>
      %166 = arith.cmpf oge, %150, %165 : vector<16x128xf32>
      %cst_174 = arith.constant 8.000000e-01 : f32
      %167 = vector.broadcast %cst_174 : f32 to vector<16x128xf32>
      %168 = arith.cmpf oge, %150, %167 : vector<16x128xf32>
      %cst_175 = arith.constant 0.899999976 : f32
      %169 = vector.broadcast %cst_175 : f32 to vector<16x128xf32>
      %170 = arith.cmpf oge, %150, %169 : vector<16x128xf32>
      %cst_176 = arith.constant 1.000000e+03 : f32
      %171 = vector.broadcast %cst_176 : f32 to vector<16x128xf32>
      %172 = arith.cmpf oge, %150, %171 : vector<16x128xf32>
      %173 = arith.xori %152, %154 : vector<16x128xi1>
      %cst_177 = arith.constant 1.000000e+00 : f32
      %cst_178 = arith.constant 0.000000e+00 : f32
      %174 = vector.broadcast %cst_177 : f32 to vector<16x128xf32>
      %175 = vector.broadcast %cst_178 : f32 to vector<16x128xf32>
      %176 = arith.select %173, %174, %175 : vector<16x128xi1>, vector<16x128xf32>
      %cst_179 = arith.constant 0.000000e+00 : f32
      %177 = vector.broadcast %cst_179 : f32 to vector<16x128xf32>
      %178 = arith.select %173, %147, %177 : vector<16x128xi1>, vector<16x128xf32>
      %179 = vector.extract_strided_slice %176 {offsets = [0, 0], sizes = [8, 128], strides = [1, 1]} : vector<16x128xf32> to vector<8x128xf32>
      %180 = arith.addf %arg7, %179 : vector<8x128xf32>
      %181 = vector.extract_strided_slice %176 {offsets = [8, 0], sizes = [8, 128], strides = [1, 1]} : vector<16x128xf32> to vector<8x128xf32>
      %182 = arith.addf %180, %181 : vector<8x128xf32>
      %183 = vector.extract_strided_slice %178 {offsets = [0, 0], sizes = [8, 128], strides = [1, 1]} : vector<16x128xf32> to vector<8x128xf32>
      %184 = arith.addf %arg17, %183 : vector<8x128xf32>
      %185 = vector.extract_strided_slice %178 {offsets = [8, 0], sizes = [8, 128], strides = [1, 1]} : vector<16x128xf32> to vector<8x128xf32>
      %186 = arith.addf %184, %185 : vector<8x128xf32>
      %187 = arith.xori %154, %156 : vector<16x128xi1>
      %cst_180 = arith.constant 1.000000e+00 : f32
      %cst_181 = arith.constant 0.000000e+00 : f32
      %188 = vector.broadcast %cst_180 : f32 to vector<16x128xf32>
      %189 = vector.broadcast %cst_181 : f32 to vector<16x128xf32>
      %190 = arith.select %187, %188, %189 : vector<16x128xi1>, vector<16x128xf32>
      %cst_182 = arith.constant 0.000000e+00 : f32
      %191 = vector.broadcast %cst_182 : f32 to vector<16x128xf32>
      %192 = arith.select %187, %147, %191 : vector<16x128xi1>, vector<16x128xf32>
      %193 = vector.extract_strided_slice %190 {offsets = [0, 0], sizes = [8, 128], strides = [1, 1]} : vector<16x128xf32> to vector<8x128xf32>
      %194 = arith.addf %arg8, %193 : vector<8x128xf32>
      %195 = vector.extract_strided_slice %190 {offsets = [8, 0], sizes = [8, 128], strides = [1, 1]} : vector<16x128xf32> to vector<8x128xf32>
      %196 = arith.addf %194, %195 : vector<8x128xf32>
      %197 = vector.extract_strided_slice %192 {offsets = [0, 0], sizes = [8, 128], strides = [1, 1]} : vector<16x128xf32> to vector<8x128xf32>
      %198 = arith.addf %arg18, %197 : vector<8x128xf32>
      %199 = vector.extract_strided_slice %192 {offsets = [8, 0], sizes = [8, 128], strides = [1, 1]} : vector<16x128xf32> to vector<8x128xf32>
      %200 = arith.addf %198, %199 : vector<8x128xf32>
      %201 = arith.xori %156, %158 : vector<16x128xi1>
      %cst_183 = arith.constant 1.000000e+00 : f32
      %cst_184 = arith.constant 0.000000e+00 : f32
      %202 = vector.broadcast %cst_183 : f32 to vector<16x128xf32>
      %203 = vector.broadcast %cst_184 : f32 to vector<16x128xf32>
      %204 = arith.select %201, %202, %203 : vector<16x128xi1>, vector<16x128xf32>
      %cst_185 = arith.constant 0.000000e+00 : f32
      %205 = vector.broadcast %cst_185 : f32 to vector<16x128xf32>
      %206 = arith.select %201, %147, %205 : vector<16x128xi1>, vector<16x128xf32>
      %207 = vector.extract_strided_slice %204 {offsets = [0, 0], sizes = [8, 128], strides = [1, 1]} : vector<16x128xf32> to vector<8x128xf32>
      %208 = arith.addf %arg9, %207 : vector<8x128xf32>
      %209 = vector.extract_strided_slice %204 {offsets = [8, 0], sizes = [8, 128], strides = [1, 1]} : vector<16x128xf32> to vector<8x128xf32>
      %210 = arith.addf %208, %209 : vector<8x128xf32>
      %211 = vector.extract_strided_slice %206 {offsets = [0, 0], sizes = [8, 128], strides = [1, 1]} : vector<16x128xf32> to vector<8x128xf32>
      %212 = arith.addf %arg19, %211 : vector<8x128xf32>
      %213 = vector.extract_strided_slice %206 {offsets = [8, 0], sizes = [8, 128], strides = [1, 1]} : vector<16x128xf32> to vector<8x128xf32>
      %214 = arith.addf %212, %213 : vector<8x128xf32>
      %215 = arith.xori %158, %160 : vector<16x128xi1>
      %cst_186 = arith.constant 1.000000e+00 : f32
      %cst_187 = arith.constant 0.000000e+00 : f32
      %216 = vector.broadcast %cst_186 : f32 to vector<16x128xf32>
      %217 = vector.broadcast %cst_187 : f32 to vector<16x128xf32>
      %218 = arith.select %215, %216, %217 : vector<16x128xi1>, vector<16x128xf32>
      %cst_188 = arith.constant 0.000000e+00 : f32
      %219 = vector.broadcast %cst_188 : f32 to vector<16x128xf32>
      %220 = arith.select %215, %147, %219 : vector<16x128xi1>, vector<16x128xf32>
      %221 = vector.extract_strided_slice %218 {offsets = [0, 0], sizes = [8, 128], strides = [1, 1]} : vector<16x128xf32> to vector<8x128xf32>
      %222 = arith.addf %arg10, %221 : vector<8x128xf32>
      %223 = vector.extract_strided_slice %218 {offsets = [8, 0], sizes = [8, 128], strides = [1, 1]} : vector<16x128xf32> to vector<8x128xf32>
      %224 = arith.addf %222, %223 : vector<8x128xf32>
      %225 = vector.extract_strided_slice %220 {offsets = [0, 0], sizes = [8, 128], strides = [1, 1]} : vector<16x128xf32> to vector<8x128xf32>
      %226 = arith.addf %arg20, %225 : vector<8x128xf32>
      %227 = vector.extract_strided_slice %220 {offsets = [8, 0], sizes = [8, 128], strides = [1, 1]} : vector<16x128xf32> to vector<8x128xf32>
      %228 = arith.addf %226, %227 : vector<8x128xf32>
      %229 = arith.xori %160, %162 : vector<16x128xi1>
      %cst_189 = arith.constant 1.000000e+00 : f32
      %cst_190 = arith.constant 0.000000e+00 : f32
      %230 = vector.broadcast %cst_189 : f32 to vector<16x128xf32>
      %231 = vector.broadcast %cst_190 : f32 to vector<16x128xf32>
      %232 = arith.select %229, %230, %231 : vector<16x128xi1>, vector<16x128xf32>
      %cst_191 = arith.constant 0.000000e+00 : f32
      %233 = vector.broadcast %cst_191 : f32 to vector<16x128xf32>
      %234 = arith.select %229, %147, %233 : vector<16x128xi1>, vector<16x128xf32>
      %235 = vector.extract_strided_slice %232 {offsets = [0, 0], sizes = [8, 128], strides = [1, 1]} : vector<16x128xf32> to vector<8x128xf32>
      %236 = arith.addf %arg11, %235 : vector<8x128xf32>
      %237 = vector.extract_strided_slice %232 {offsets = [8, 0], sizes = [8, 128], strides = [1, 1]} : vector<16x128xf32> to vector<8x128xf32>
      %238 = arith.addf %236, %237 : vector<8x128xf32>
      %239 = vector.extract_strided_slice %234 {offsets = [0, 0], sizes = [8, 128], strides = [1, 1]} : vector<16x128xf32> to vector<8x128xf32>
      %240 = arith.addf %arg21, %239 : vector<8x128xf32>
      %241 = vector.extract_strided_slice %234 {offsets = [8, 0], sizes = [8, 128], strides = [1, 1]} : vector<16x128xf32> to vector<8x128xf32>
      %242 = arith.addf %240, %241 : vector<8x128xf32>
      %243 = arith.xori %162, %164 : vector<16x128xi1>
      %cst_192 = arith.constant 1.000000e+00 : f32
      %cst_193 = arith.constant 0.000000e+00 : f32
      %244 = vector.broadcast %cst_192 : f32 to vector<16x128xf32>
      %245 = vector.broadcast %cst_193 : f32 to vector<16x128xf32>
      %246 = arith.select %243, %244, %245 : vector<16x128xi1>, vector<16x128xf32>
      %cst_194 = arith.constant 0.000000e+00 : f32
      %247 = vector.broadcast %cst_194 : f32 to vector<16x128xf32>
      %248 = arith.select %243, %147, %247 : vector<16x128xi1>, vector<16x128xf32>
      %249 = vector.extract_strided_slice %246 {offsets = [0, 0], sizes = [8, 128], strides = [1, 1]} : vector<16x128xf32> to vector<8x128xf32>
      %250 = arith.addf %arg12, %249 : vector<8x128xf32>
      %251 = vector.extract_strided_slice %246 {offsets = [8, 0], sizes = [8, 128], strides = [1, 1]} : vector<16x128xf32> to vector<8x128xf32>
      %252 = arith.addf %250, %251 : vector<8x128xf32>
      %253 = vector.extract_strided_slice %248 {offsets = [0, 0], sizes = [8, 128], strides = [1, 1]} : vector<16x128xf32> to vector<8x128xf32>
      %254 = arith.addf %arg22, %253 : vector<8x128xf32>
      %255 = vector.extract_strided_slice %248 {offsets = [8, 0], sizes = [8, 128], strides = [1, 1]} : vector<16x128xf32> to vector<8x128xf32>
      %256 = arith.addf %254, %255 : vector<8x128xf32>
      %257 = arith.xori %164, %166 : vector<16x128xi1>
      %cst_195 = arith.constant 1.000000e+00 : f32
      %cst_196 = arith.constant 0.000000e+00 : f32
      %258 = vector.broadcast %cst_195 : f32 to vector<16x128xf32>
      %259 = vector.broadcast %cst_196 : f32 to vector<16x128xf32>
      %260 = arith.select %257, %258, %259 : vector<16x128xi1>, vector<16x128xf32>
      %cst_197 = arith.constant 0.000000e+00 : f32
      %261 = vector.broadcast %cst_197 : f32 to vector<16x128xf32>
      %262 = arith.select %257, %147, %261 : vector<16x128xi1>, vector<16x128xf32>
      %263 = vector.extract_strided_slice %260 {offsets = [0, 0], sizes = [8, 128], strides = [1, 1]} : vector<16x128xf32> to vector<8x128xf32>
      %264 = arith.addf %arg13, %263 : vector<8x128xf32>
      %265 = vector.extract_strided_slice %260 {offsets = [8, 0], sizes = [8, 128], strides = [1, 1]} : vector<16x128xf32> to vector<8x128xf32>
      %266 = arith.addf %264, %265 : vector<8x128xf32>
      %267 = vector.extract_strided_slice %262 {offsets = [0, 0], sizes = [8, 128], strides = [1, 1]} : vector<16x128xf32> to vector<8x128xf32>
      %268 = arith.addf %arg23, %267 : vector<8x128xf32>
      %269 = vector.extract_strided_slice %262 {offsets = [8, 0], sizes = [8, 128], strides = [1, 1]} : vector<16x128xf32> to vector<8x128xf32>
      %270 = arith.addf %268, %269 : vector<8x128xf32>
      %271 = arith.xori %166, %168 : vector<16x128xi1>
      %cst_198 = arith.constant 1.000000e+00 : f32
      %cst_199 = arith.constant 0.000000e+00 : f32
      %272 = vector.broadcast %cst_198 : f32 to vector<16x128xf32>
      %273 = vector.broadcast %cst_199 : f32 to vector<16x128xf32>
      %274 = arith.select %271, %272, %273 : vector<16x128xi1>, vector<16x128xf32>
      %cst_200 = arith.constant 0.000000e+00 : f32
      %275 = vector.broadcast %cst_200 : f32 to vector<16x128xf32>
      %276 = arith.select %271, %147, %275 : vector<16x128xi1>, vector<16x128xf32>
      %277 = vector.extract_strided_slice %274 {offsets = [0, 0], sizes = [8, 128], strides = [1, 1]} : vector<16x128xf32> to vector<8x128xf32>
      %278 = arith.addf %arg14, %277 : vector<8x128xf32>
      %279 = vector.extract_strided_slice %274 {offsets = [8, 0], sizes = [8, 128], strides = [1, 1]} : vector<16x128xf32> to vector<8x128xf32>
      %280 = arith.addf %278, %279 : vector<8x128xf32>
      %281 = vector.extract_strided_slice %276 {offsets = [0, 0], sizes = [8, 128], strides = [1, 1]} : vector<16x128xf32> to vector<8x128xf32>
      %282 = arith.addf %arg24, %281 : vector<8x128xf32>
      %283 = vector.extract_strided_slice %276 {offsets = [8, 0], sizes = [8, 128], strides = [1, 1]} : vector<16x128xf32> to vector<8x128xf32>
      %284 = arith.addf %282, %283 : vector<8x128xf32>
      %285 = arith.xori %168, %170 : vector<16x128xi1>
      %cst_201 = arith.constant 1.000000e+00 : f32
      %cst_202 = arith.constant 0.000000e+00 : f32
      %286 = vector.broadcast %cst_201 : f32 to vector<16x128xf32>
      %287 = vector.broadcast %cst_202 : f32 to vector<16x128xf32>
      %288 = arith.select %285, %286, %287 : vector<16x128xi1>, vector<16x128xf32>
      %cst_203 = arith.constant 0.000000e+00 : f32
      %289 = vector.broadcast %cst_203 : f32 to vector<16x128xf32>
      %290 = arith.select %285, %147, %289 : vector<16x128xi1>, vector<16x128xf32>
      %291 = vector.extract_strided_slice %288 {offsets = [0, 0], sizes = [8, 128], strides = [1, 1]} : vector<16x128xf32> to vector<8x128xf32>
      %292 = arith.addf %arg15, %291 : vector<8x128xf32>
      %293 = vector.extract_strided_slice %288 {offsets = [8, 0], sizes = [8, 128], strides = [1, 1]} : vector<16x128xf32> to vector<8x128xf32>
      %294 = arith.addf %292, %293 : vector<8x128xf32>
      %295 = vector.extract_strided_slice %290 {offsets = [0, 0], sizes = [8, 128], strides = [1, 1]} : vector<16x128xf32> to vector<8x128xf32>
      %296 = arith.addf %arg25, %295 : vector<8x128xf32>
      %297 = vector.extract_strided_slice %290 {offsets = [8, 0], sizes = [8, 128], strides = [1, 1]} : vector<16x128xf32> to vector<8x128xf32>
      %298 = arith.addf %296, %297 : vector<8x128xf32>
      %299 = arith.xori %170, %172 : vector<16x128xi1>
      %cst_204 = arith.constant 1.000000e+00 : f32
      %cst_205 = arith.constant 0.000000e+00 : f32
      %300 = vector.broadcast %cst_204 : f32 to vector<16x128xf32>
      %301 = vector.broadcast %cst_205 : f32 to vector<16x128xf32>
      %302 = arith.select %299, %300, %301 : vector<16x128xi1>, vector<16x128xf32>
      %cst_206 = arith.constant 0.000000e+00 : f32
      %303 = vector.broadcast %cst_206 : f32 to vector<16x128xf32>
      %304 = arith.select %299, %147, %303 : vector<16x128xi1>, vector<16x128xf32>
      %305 = vector.extract_strided_slice %302 {offsets = [0, 0], sizes = [8, 128], strides = [1, 1]} : vector<16x128xf32> to vector<8x128xf32>
      %306 = arith.addf %arg16, %305 : vector<8x128xf32>
      %307 = vector.extract_strided_slice %302 {offsets = [8, 0], sizes = [8, 128], strides = [1, 1]} : vector<16x128xf32> to vector<8x128xf32>
      %308 = arith.addf %306, %307 : vector<8x128xf32>
      %309 = vector.extract_strided_slice %304 {offsets = [0, 0], sizes = [8, 128], strides = [1, 1]} : vector<16x128xf32> to vector<8x128xf32>
      %310 = arith.addf %arg26, %309 : vector<8x128xf32>
      %311 = vector.extract_strided_slice %304 {offsets = [8, 0], sizes = [8, 128], strides = [1, 1]} : vector<16x128xf32> to vector<8x128xf32>
      %312 = arith.addf %310, %311 : vector<8x128xf32>
      scf.yield %182, %196, %210, %224, %238, %252, %266, %280, %294, %308, %186, %200, %214, %228, %242, %256, %270, %284, %298, %312 : vector<8x128xf32>, vector<8x128xf32>, vector<8x128xf32>, vector<8x128xf32>, vector<8x128xf32>, vector<8x128xf32>, vector<8x128xf32>, vector<8x128xf32>, vector<8x128xf32>, vector<8x128xf32>, vector<8x128xf32>, vector<8x128xf32>, vector<8x128xf32>, vector<8x128xf32>, vector<8x128xf32>, vector<8x128xf32>, vector<8x128xf32>, vector<8x128xf32>, vector<8x128xf32>, vector<8x128xf32>
    }
    %c2_i32_11 = arith.constant 2 : i32
    %c0 = arith.constant 0 : index
    %c0_12 = arith.constant 0 : index
    %c0_13 = arith.constant 0 : index
    %c0_14 = arith.constant 0 : index
    %15 = vector.load %arg4[%c0, %c0_12, %c0_13, %c0_14] : memref<1x10x8x128xf32, #tpu.memory_space<vmem>>, vector<1x1x8x128xf32>
    %16 = vector.shape_cast %15 : vector<1x1x8x128xf32> to vector<8x128xf32>
    %17 = arith.addf %16, %14#0 : vector<8x128xf32>
    %c0_15 = arith.constant 0 : index
    %c0_16 = arith.constant 0 : index
    %c0_17 = arith.constant 0 : index
    %c0_18 = arith.constant 0 : index
    %18 = vector.load %arg4[%c0_15, %c0_16, %c0_17, %c0_18] : memref<1x10x8x128xf32, #tpu.memory_space<vmem>>, vector<1x1x8x128xf32>
    %19 = vector.shape_cast %18 : vector<1x1x8x128xf32> to vector<8x128xf32>
    %20 = vector.shape_cast %17 : vector<8x128xf32> to vector<1x1x8x128xf32>
    tpu.vector_store %arg4[%c0_15, %c0_16, %c0_17, %c0_18], %20 {strides = array<i32>} : memref<1x10x8x128xf32, #tpu.memory_space<vmem>>, vector<1x1x8x128xf32>,
    %c0_19 = arith.constant 0 : index
    %c0_20 = arith.constant 0 : index
    %c0_21 = arith.constant 0 : index
    %c0_22 = arith.constant 0 : index
    %21 = vector.load %arg5[%c0_19, %c0_20, %c0_21, %c0_22] : memref<1x10x8x128xf32, #tpu.memory_space<vmem>>, vector<1x1x8x128xf32>
    %22 = vector.shape_cast %21 : vector<1x1x8x128xf32> to vector<8x128xf32>
    %23 = arith.addf %22, %14#10 : vector<8x128xf32>
    %c0_23 = arith.constant 0 : index
    %c0_24 = arith.constant 0 : index
    %c0_25 = arith.constant 0 : index
    %c0_26 = arith.constant 0 : index
    %24 = vector.load %arg5[%c0_23, %c0_24, %c0_25, %c0_26] : memref<1x10x8x128xf32, #tpu.memory_space<vmem>>, vector<1x1x8x128xf32>
    %25 = vector.shape_cast %24 : vector<1x1x8x128xf32> to vector<8x128xf32>
    %26 = vector.shape_cast %23 : vector<8x128xf32> to vector<1x1x8x128xf32>
    tpu.vector_store %arg5[%c0_23, %c0_24, %c0_25, %c0_26], %26 {strides = array<i32>} : memref<1x10x8x128xf32, #tpu.memory_space<vmem>>, vector<1x1x8x128xf32>,
    %c0_27 = arith.constant 0 : index
    %c1 = arith.constant 1 : index
    %c0_28 = arith.constant 0 : index
    %c0_29 = arith.constant 0 : index
    %27 = vector.load %arg4[%c0_27, %c1, %c0_28, %c0_29] : memref<1x10x8x128xf32, #tpu.memory_space<vmem>>, vector<1x1x8x128xf32>
    %28 = vector.shape_cast %27 : vector<1x1x8x128xf32> to vector<8x128xf32>
    %29 = arith.addf %28, %14#1 : vector<8x128xf32>
    %c0_30 = arith.constant 0 : index
    %c1_31 = arith.constant 1 : index
    %c0_32 = arith.constant 0 : index
    %c0_33 = arith.constant 0 : index
    %30 = vector.load %arg4[%c0_30, %c1_31, %c0_32, %c0_33] : memref<1x10x8x128xf32, #tpu.memory_space<vmem>>, vector<1x1x8x128xf32>
    %31 = vector.shape_cast %30 : vector<1x1x8x128xf32> to vector<8x128xf32>
    %32 = vector.shape_cast %29 : vector<8x128xf32> to vector<1x1x8x128xf32>
    tpu.vector_store %arg4[%c0_30, %c1_31, %c0_32, %c0_33], %32 {strides = array<i32>} : memref<1x10x8x128xf32, #tpu.memory_space<vmem>>, vector<1x1x8x128xf32>,
    %c0_34 = arith.constant 0 : index
    %c1_35 = arith.constant 1 : index
    %c0_36 = arith.constant 0 : index
    %c0_37 = arith.constant 0 : index
    %33 = vector.load %arg5[%c0_34, %c1_35, %c0_36, %c0_37] : memref<1x10x8x128xf32, #tpu.memory_space<vmem>>, vector<1x1x8x128xf32>
    %34 = vector.shape_cast %33 : vector<1x1x8x128xf32> to vector<8x128xf32>
    %35 = arith.addf %34, %14#11 : vector<8x128xf32>
    %c0_38 = arith.constant 0 : index
    %c1_39 = arith.constant 1 : index
    %c0_40 = arith.constant 0 : index
    %c0_41 = arith.constant 0 : index
    %36 = vector.load %arg5[%c0_38, %c1_39, %c0_40, %c0_41] : memref<1x10x8x128xf32, #tpu.memory_space<vmem>>, vector<1x1x8x128xf32>
    %37 = vector.shape_cast %36 : vector<1x1x8x128xf32> to vector<8x128xf32>
    %38 = vector.shape_cast %35 : vector<8x128xf32> to vector<1x1x8x128xf32>
    tpu.vector_store %arg5[%c0_38, %c1_39, %c0_40, %c0_41], %38 {strides = array<i32>} : memref<1x10x8x128xf32, #tpu.memory_space<vmem>>, vector<1x1x8x128xf32>,
    %c0_42 = arith.constant 0 : index
    %c2 = arith.constant 2 : index
    %c0_43 = arith.constant 0 : index
    %c0_44 = arith.constant 0 : index
    %39 = vector.load %arg4[%c0_42, %c2, %c0_43, %c0_44] : memref<1x10x8x128xf32, #tpu.memory_space<vmem>>, vector<1x1x8x128xf32>
    %40 = vector.shape_cast %39 : vector<1x1x8x128xf32> to vector<8x128xf32>
    %41 = arith.addf %40, %14#2 : vector<8x128xf32>
    %c0_45 = arith.constant 0 : index
    %c2_46 = arith.constant 2 : index
    %c0_47 = arith.constant 0 : index
    %c0_48 = arith.constant 0 : index
    %42 = vector.load %arg4[%c0_45, %c2_46, %c0_47, %c0_48] : memref<1x10x8x128xf32, #tpu.memory_space<vmem>>, vector<1x1x8x128xf32>
    %43 = vector.shape_cast %42 : vector<1x1x8x128xf32> to vector<8x128xf32>
    %44 = vector.shape_cast %41 : vector<8x128xf32> to vector<1x1x8x128xf32>
    tpu.vector_store %arg4[%c0_45, %c2_46, %c0_47, %c0_48], %44 {strides = array<i32>} : memref<1x10x8x128xf32, #tpu.memory_space<vmem>>, vector<1x1x8x128xf32>,
    %c0_49 = arith.constant 0 : index
    %c2_50 = arith.constant 2 : index
    %c0_51 = arith.constant 0 : index
    %c0_52 = arith.constant 0 : index
    %45 = vector.load %arg5[%c0_49, %c2_50, %c0_51, %c0_52] : memref<1x10x8x128xf32, #tpu.memory_space<vmem>>, vector<1x1x8x128xf32>
    %46 = vector.shape_cast %45 : vector<1x1x8x128xf32> to vector<8x128xf32>
    %47 = arith.addf %46, %14#12 : vector<8x128xf32>
    %c0_53 = arith.constant 0 : index
    %c2_54 = arith.constant 2 : index
    %c0_55 = arith.constant 0 : index
    %c0_56 = arith.constant 0 : index
    %48 = vector.load %arg5[%c0_53, %c2_54, %c0_55, %c0_56] : memref<1x10x8x128xf32, #tpu.memory_space<vmem>>, vector<1x1x8x128xf32>
    %49 = vector.shape_cast %48 : vector<1x1x8x128xf32> to vector<8x128xf32>
    %50 = vector.shape_cast %47 : vector<8x128xf32> to vector<1x1x8x128xf32>
    tpu.vector_store %arg5[%c0_53, %c2_54, %c0_55, %c0_56], %50 {strides = array<i32>} : memref<1x10x8x128xf32, #tpu.memory_space<vmem>>, vector<1x1x8x128xf32>,
    %c0_57 = arith.constant 0 : index
    %c3 = arith.constant 3 : index
    %c0_58 = arith.constant 0 : index
    %c0_59 = arith.constant 0 : index
    %51 = vector.load %arg4[%c0_57, %c3, %c0_58, %c0_59] : memref<1x10x8x128xf32, #tpu.memory_space<vmem>>, vector<1x1x8x128xf32>
    %52 = vector.shape_cast %51 : vector<1x1x8x128xf32> to vector<8x128xf32>
    %53 = arith.addf %52, %14#3 : vector<8x128xf32>
    %c0_60 = arith.constant 0 : index
    %c3_61 = arith.constant 3 : index
    %c0_62 = arith.constant 0 : index
    %c0_63 = arith.constant 0 : index
    %54 = vector.load %arg4[%c0_60, %c3_61, %c0_62, %c0_63] : memref<1x10x8x128xf32, #tpu.memory_space<vmem>>, vector<1x1x8x128xf32>
    %55 = vector.shape_cast %54 : vector<1x1x8x128xf32> to vector<8x128xf32>
    %56 = vector.shape_cast %53 : vector<8x128xf32> to vector<1x1x8x128xf32>
    tpu.vector_store %arg4[%c0_60, %c3_61, %c0_62, %c0_63], %56 {strides = array<i32>} : memref<1x10x8x128xf32, #tpu.memory_space<vmem>>, vector<1x1x8x128xf32>,
    %c0_64 = arith.constant 0 : index
    %c3_65 = arith.constant 3 : index
    %c0_66 = arith.constant 0 : index
    %c0_67 = arith.constant 0 : index
    %57 = vector.load %arg5[%c0_64, %c3_65, %c0_66, %c0_67] : memref<1x10x8x128xf32, #tpu.memory_space<vmem>>, vector<1x1x8x128xf32>
    %58 = vector.shape_cast %57 : vector<1x1x8x128xf32> to vector<8x128xf32>
    %59 = arith.addf %58, %14#13 : vector<8x128xf32>
    %c0_68 = arith.constant 0 : index
    %c3_69 = arith.constant 3 : index
    %c0_70 = arith.constant 0 : index
    %c0_71 = arith.constant 0 : index
    %60 = vector.load %arg5[%c0_68, %c3_69, %c0_70, %c0_71] : memref<1x10x8x128xf32, #tpu.memory_space<vmem>>, vector<1x1x8x128xf32>
    %61 = vector.shape_cast %60 : vector<1x1x8x128xf32> to vector<8x128xf32>
    %62 = vector.shape_cast %59 : vector<8x128xf32> to vector<1x1x8x128xf32>
    tpu.vector_store %arg5[%c0_68, %c3_69, %c0_70, %c0_71], %62 {strides = array<i32>} : memref<1x10x8x128xf32, #tpu.memory_space<vmem>>, vector<1x1x8x128xf32>,
    %c0_72 = arith.constant 0 : index
    %c4 = arith.constant 4 : index
    %c0_73 = arith.constant 0 : index
    %c0_74 = arith.constant 0 : index
    %63 = vector.load %arg4[%c0_72, %c4, %c0_73, %c0_74] : memref<1x10x8x128xf32, #tpu.memory_space<vmem>>, vector<1x1x8x128xf32>
    %64 = vector.shape_cast %63 : vector<1x1x8x128xf32> to vector<8x128xf32>
    %65 = arith.addf %64, %14#4 : vector<8x128xf32>
    %c0_75 = arith.constant 0 : index
    %c4_76 = arith.constant 4 : index
    %c0_77 = arith.constant 0 : index
    %c0_78 = arith.constant 0 : index
    %66 = vector.load %arg4[%c0_75, %c4_76, %c0_77, %c0_78] : memref<1x10x8x128xf32, #tpu.memory_space<vmem>>, vector<1x1x8x128xf32>
    %67 = vector.shape_cast %66 : vector<1x1x8x128xf32> to vector<8x128xf32>
    %68 = vector.shape_cast %65 : vector<8x128xf32> to vector<1x1x8x128xf32>
    tpu.vector_store %arg4[%c0_75, %c4_76, %c0_77, %c0_78], %68 {strides = array<i32>} : memref<1x10x8x128xf32, #tpu.memory_space<vmem>>, vector<1x1x8x128xf32>,
    %c0_79 = arith.constant 0 : index
    %c4_80 = arith.constant 4 : index
    %c0_81 = arith.constant 0 : index
    %c0_82 = arith.constant 0 : index
    %69 = vector.load %arg5[%c0_79, %c4_80, %c0_81, %c0_82] : memref<1x10x8x128xf32, #tpu.memory_space<vmem>>, vector<1x1x8x128xf32>
    %70 = vector.shape_cast %69 : vector<1x1x8x128xf32> to vector<8x128xf32>
    %71 = arith.addf %70, %14#14 : vector<8x128xf32>
    %c0_83 = arith.constant 0 : index
    %c4_84 = arith.constant 4 : index
    %c0_85 = arith.constant 0 : index
    %c0_86 = arith.constant 0 : index
    %72 = vector.load %arg5[%c0_83, %c4_84, %c0_85, %c0_86] : memref<1x10x8x128xf32, #tpu.memory_space<vmem>>, vector<1x1x8x128xf32>
    %73 = vector.shape_cast %72 : vector<1x1x8x128xf32> to vector<8x128xf32>
    %74 = vector.shape_cast %71 : vector<8x128xf32> to vector<1x1x8x128xf32>
    tpu.vector_store %arg5[%c0_83, %c4_84, %c0_85, %c0_86], %74 {strides = array<i32>} : memref<1x10x8x128xf32, #tpu.memory_space<vmem>>, vector<1x1x8x128xf32>,
    %c0_87 = arith.constant 0 : index
    %c5 = arith.constant 5 : index
    %c0_88 = arith.constant 0 : index
    %c0_89 = arith.constant 0 : index
    %75 = vector.load %arg4[%c0_87, %c5, %c0_88, %c0_89] : memref<1x10x8x128xf32, #tpu.memory_space<vmem>>, vector<1x1x8x128xf32>
    %76 = vector.shape_cast %75 : vector<1x1x8x128xf32> to vector<8x128xf32>
    %77 = arith.addf %76, %14#5 : vector<8x128xf32>
    %c0_90 = arith.constant 0 : index
    %c5_91 = arith.constant 5 : index
    %c0_92 = arith.constant 0 : index
    %c0_93 = arith.constant 0 : index
    %78 = vector.load %arg4[%c0_90, %c5_91, %c0_92, %c0_93] : memref<1x10x8x128xf32, #tpu.memory_space<vmem>>, vector<1x1x8x128xf32>
    %79 = vector.shape_cast %78 : vector<1x1x8x128xf32> to vector<8x128xf32>
    %80 = vector.shape_cast %77 : vector<8x128xf32> to vector<1x1x8x128xf32>
    tpu.vector_store %arg4[%c0_90, %c5_91, %c0_92, %c0_93], %80 {strides = array<i32>} : memref<1x10x8x128xf32, #tpu.memory_space<vmem>>, vector<1x1x8x128xf32>,
    %c0_94 = arith.constant 0 : index
    %c5_95 = arith.constant 5 : index
    %c0_96 = arith.constant 0 : index
    %c0_97 = arith.constant 0 : index
    %81 = vector.load %arg5[%c0_94, %c5_95, %c0_96, %c0_97] : memref<1x10x8x128xf32, #tpu.memory_space<vmem>>, vector<1x1x8x128xf32>
    %82 = vector.shape_cast %81 : vector<1x1x8x128xf32> to vector<8x128xf32>
    %83 = arith.addf %82, %14#15 : vector<8x128xf32>
    %c0_98 = arith.constant 0 : index
    %c5_99 = arith.constant 5 : index
    %c0_100 = arith.constant 0 : index
    %c0_101 = arith.constant 0 : index
    %84 = vector.load %arg5[%c0_98, %c5_99, %c0_100, %c0_101] : memref<1x10x8x128xf32, #tpu.memory_space<vmem>>, vector<1x1x8x128xf32>
    %85 = vector.shape_cast %84 : vector<1x1x8x128xf32> to vector<8x128xf32>
    %86 = vector.shape_cast %83 : vector<8x128xf32> to vector<1x1x8x128xf32>
    tpu.vector_store %arg5[%c0_98, %c5_99, %c0_100, %c0_101], %86 {strides = array<i32>} : memref<1x10x8x128xf32, #tpu.memory_space<vmem>>, vector<1x1x8x128xf32>,
    %c0_102 = arith.constant 0 : index
    %c6 = arith.constant 6 : index
    %c0_103 = arith.constant 0 : index
    %c0_104 = arith.constant 0 : index
    %87 = vector.load %arg4[%c0_102, %c6, %c0_103, %c0_104] : memref<1x10x8x128xf32, #tpu.memory_space<vmem>>, vector<1x1x8x128xf32>
    %88 = vector.shape_cast %87 : vector<1x1x8x128xf32> to vector<8x128xf32>
    %89 = arith.addf %88, %14#6 : vector<8x128xf32>
    %c0_105 = arith.constant 0 : index
    %c6_106 = arith.constant 6 : index
    %c0_107 = arith.constant 0 : index
    %c0_108 = arith.constant 0 : index
    %90 = vector.load %arg4[%c0_105, %c6_106, %c0_107, %c0_108] : memref<1x10x8x128xf32, #tpu.memory_space<vmem>>, vector<1x1x8x128xf32>
    %91 = vector.shape_cast %90 : vector<1x1x8x128xf32> to vector<8x128xf32>
    %92 = vector.shape_cast %89 : vector<8x128xf32> to vector<1x1x8x128xf32>
    tpu.vector_store %arg4[%c0_105, %c6_106, %c0_107, %c0_108], %92 {strides = array<i32>} : memref<1x10x8x128xf32, #tpu.memory_space<vmem>>, vector<1x1x8x128xf32>,
    %c0_109 = arith.constant 0 : index
    %c6_110 = arith.constant 6 : index
    %c0_111 = arith.constant 0 : index
    %c0_112 = arith.constant 0 : index
    %93 = vector.load %arg5[%c0_109, %c6_110, %c0_111, %c0_112] : memref<1x10x8x128xf32, #tpu.memory_space<vmem>>, vector<1x1x8x128xf32>
    %94 = vector.shape_cast %93 : vector<1x1x8x128xf32> to vector<8x128xf32>
    %95 = arith.addf %94, %14#16 : vector<8x128xf32>
    %c0_113 = arith.constant 0 : index
    %c6_114 = arith.constant 6 : index
    %c0_115 = arith.constant 0 : index
    %c0_116 = arith.constant 0 : index
    %96 = vector.load %arg5[%c0_113, %c6_114, %c0_115, %c0_116] : memref<1x10x8x128xf32, #tpu.memory_space<vmem>>, vector<1x1x8x128xf32>
    %97 = vector.shape_cast %96 : vector<1x1x8x128xf32> to vector<8x128xf32>
    %98 = vector.shape_cast %95 : vector<8x128xf32> to vector<1x1x8x128xf32>
    tpu.vector_store %arg5[%c0_113, %c6_114, %c0_115, %c0_116], %98 {strides = array<i32>} : memref<1x10x8x128xf32, #tpu.memory_space<vmem>>, vector<1x1x8x128xf32>,
    %c0_117 = arith.constant 0 : index
    %c7 = arith.constant 7 : index
    %c0_118 = arith.constant 0 : index
    %c0_119 = arith.constant 0 : index
    %99 = vector.load %arg4[%c0_117, %c7, %c0_118, %c0_119] : memref<1x10x8x128xf32, #tpu.memory_space<vmem>>, vector<1x1x8x128xf32>
    %100 = vector.shape_cast %99 : vector<1x1x8x128xf32> to vector<8x128xf32>
    %101 = arith.addf %100, %14#7 : vector<8x128xf32>
    %c0_120 = arith.constant 0 : index
    %c7_121 = arith.constant 7 : index
    %c0_122 = arith.constant 0 : index
    %c0_123 = arith.constant 0 : index
    %102 = vector.load %arg4[%c0_120, %c7_121, %c0_122, %c0_123] : memref<1x10x8x128xf32, #tpu.memory_space<vmem>>, vector<1x1x8x128xf32>
    %103 = vector.shape_cast %102 : vector<1x1x8x128xf32> to vector<8x128xf32>
    %104 = vector.shape_cast %101 : vector<8x128xf32> to vector<1x1x8x128xf32>
    tpu.vector_store %arg4[%c0_120, %c7_121, %c0_122, %c0_123], %104 {strides = array<i32>} : memref<1x10x8x128xf32, #tpu.memory_space<vmem>>, vector<1x1x8x128xf32>,
    %c0_124 = arith.constant 0 : index
    %c7_125 = arith.constant 7 : index
    %c0_126 = arith.constant 0 : index
    %c0_127 = arith.constant 0 : index
    %105 = vector.load %arg5[%c0_124, %c7_125, %c0_126, %c0_127] : memref<1x10x8x128xf32, #tpu.memory_space<vmem>>, vector<1x1x8x128xf32>
    %106 = vector.shape_cast %105 : vector<1x1x8x128xf32> to vector<8x128xf32>
    %107 = arith.addf %106, %14#17 : vector<8x128xf32>
    %c0_128 = arith.constant 0 : index
    %c7_129 = arith.constant 7 : index
    %c0_130 = arith.constant 0 : index
    %c0_131 = arith.constant 0 : index
    %108 = vector.load %arg5[%c0_128, %c7_129, %c0_130, %c0_131] : memref<1x10x8x128xf32, #tpu.memory_space<vmem>>, vector<1x1x8x128xf32>
    %109 = vector.shape_cast %108 : vector<1x1x8x128xf32> to vector<8x128xf32>
    %110 = vector.shape_cast %107 : vector<8x128xf32> to vector<1x1x8x128xf32>
    tpu.vector_store %arg5[%c0_128, %c7_129, %c0_130, %c0_131], %110 {strides = array<i32>} : memref<1x10x8x128xf32, #tpu.memory_space<vmem>>, vector<1x1x8x128xf32>,
    %c0_132 = arith.constant 0 : index
    %c8 = arith.constant 8 : index
    %c0_133 = arith.constant 0 : index
    %c0_134 = arith.constant 0 : index
    %111 = vector.load %arg4[%c0_132, %c8, %c0_133, %c0_134] : memref<1x10x8x128xf32, #tpu.memory_space<vmem>>, vector<1x1x8x128xf32>
    %112 = vector.shape_cast %111 : vector<1x1x8x128xf32> to vector<8x128xf32>
    %113 = arith.addf %112, %14#8 : vector<8x128xf32>
    %c0_135 = arith.constant 0 : index
    %c8_136 = arith.constant 8 : index
    %c0_137 = arith.constant 0 : index
    %c0_138 = arith.constant 0 : index
    %114 = vector.load %arg4[%c0_135, %c8_136, %c0_137, %c0_138] : memref<1x10x8x128xf32, #tpu.memory_space<vmem>>, vector<1x1x8x128xf32>
    %115 = vector.shape_cast %114 : vector<1x1x8x128xf32> to vector<8x128xf32>
    %116 = vector.shape_cast %113 : vector<8x128xf32> to vector<1x1x8x128xf32>
    tpu.vector_store %arg4[%c0_135, %c8_136, %c0_137, %c0_138], %116 {strides = array<i32>} : memref<1x10x8x128xf32, #tpu.memory_space<vmem>>, vector<1x1x8x128xf32>,
    %c0_139 = arith.constant 0 : index
    %c8_140 = arith.constant 8 : index
    %c0_141 = arith.constant 0 : index
    %c0_142 = arith.constant 0 : index
    %117 = vector.load %arg5[%c0_139, %c8_140, %c0_141, %c0_142] : memref<1x10x8x128xf32, #tpu.memory_space<vmem>>, vector<1x1x8x128xf32>
    %118 = vector.shape_cast %117 : vector<1x1x8x128xf32> to vector<8x128xf32>
    %119 = arith.addf %118, %14#18 : vector<8x128xf32>
    %c0_143 = arith.constant 0 : index
    %c8_144 = arith.constant 8 : index
    %c0_145 = arith.constant 0 : index
    %c0_146 = arith.constant 0 : index
    %120 = vector.load %arg5[%c0_143, %c8_144, %c0_145, %c0_146] : memref<1x10x8x128xf32, #tpu.memory_space<vmem>>, vector<1x1x8x128xf32>
    %121 = vector.shape_cast %120 : vector<1x1x8x128xf32> to vector<8x128xf32>
    %122 = vector.shape_cast %119 : vector<8x128xf32> to vector<1x1x8x128xf32>
    tpu.vector_store %arg5[%c0_143, %c8_144, %c0_145, %c0_146], %122 {strides = array<i32>} : memref<1x10x8x128xf32, #tpu.memory_space<vmem>>, vector<1x1x8x128xf32>,
    %c0_147 = arith.constant 0 : index
    %c9 = arith.constant 9 : index
    %c0_148 = arith.constant 0 : index
    %c0_149 = arith.constant 0 : index
    %123 = vector.load %arg4[%c0_147, %c9, %c0_148, %c0_149] : memref<1x10x8x128xf32, #tpu.memory_space<vmem>>, vector<1x1x8x128xf32>
    %124 = vector.shape_cast %123 : vector<1x1x8x128xf32> to vector<8x128xf32>
    %125 = arith.addf %124, %14#9 : vector<8x128xf32>
    %c0_150 = arith.constant 0 : index
    %c9_151 = arith.constant 9 : index
    %c0_152 = arith.constant 0 : index
    %c0_153 = arith.constant 0 : index
    %126 = vector.load %arg4[%c0_150, %c9_151, %c0_152, %c0_153] : memref<1x10x8x128xf32, #tpu.memory_space<vmem>>, vector<1x1x8x128xf32>
    %127 = vector.shape_cast %126 : vector<1x1x8x128xf32> to vector<8x128xf32>
    %128 = vector.shape_cast %125 : vector<8x128xf32> to vector<1x1x8x128xf32>
    tpu.vector_store %arg4[%c0_150, %c9_151, %c0_152, %c0_153], %128 {strides = array<i32>} : memref<1x10x8x128xf32, #tpu.memory_space<vmem>>, vector<1x1x8x128xf32>,
    %c0_154 = arith.constant 0 : index
    %c9_155 = arith.constant 9 : index
    %c0_156 = arith.constant 0 : index
    %c0_157 = arith.constant 0 : index
    %129 = vector.load %arg5[%c0_154, %c9_155, %c0_156, %c0_157] : memref<1x10x8x128xf32, #tpu.memory_space<vmem>>, vector<1x1x8x128xf32>
    %130 = vector.shape_cast %129 : vector<1x1x8x128xf32> to vector<8x128xf32>
    %131 = arith.addf %130, %14#19 : vector<8x128xf32>
    %c0_158 = arith.constant 0 : index
    %c9_159 = arith.constant 9 : index
    %c0_160 = arith.constant 0 : index
    %c0_161 = arith.constant 0 : index
    %132 = vector.load %arg5[%c0_158, %c9_159, %c0_160, %c0_161] : memref<1x10x8x128xf32, #tpu.memory_space<vmem>>, vector<1x1x8x128xf32>
    %133 = vector.shape_cast %132 : vector<1x1x8x128xf32> to vector<8x128xf32>
    %134 = vector.shape_cast %131 : vector<8x128xf32> to vector<1x1x8x128xf32>
    tpu.vector_store %arg5[%c0_158, %c9_159, %c0_160, %c0_161], %134 {strides = array<i32>} : memref<1x10x8x128xf32, #tpu.memory_space<vmem>>, vector<1x1x8x128xf32>,
    return
  }
  func.func @transform_0(%arg0: i32, %arg1: i32) -> (i32, i32) {
    %c1_i32 = arith.constant 1 : i32
    %0 = arith.muli %arg0, %c1_i32 : i32
    %1 = arith.addi %0, %arg1 : i32
    %c0_i32 = arith.constant 0 : i32
    %c0_i32_0 = arith.constant 0 : i32
    return %1, %c0_i32 : i32, i32
  }
  func.func @transform_1(%arg0: i32, %arg1: i32) -> (i32, i32) {
    %c1_i32 = arith.constant 1 : i32
    %0 = arith.muli %arg0, %c1_i32 : i32
    %1 = arith.addi %0, %arg1 : i32
    %c0_i32 = arith.constant 0 : i32
    %c0_i32_0 = arith.constant 0 : i32
    return %1, %c0_i32 : i32, i32
  }
  func.func @transform_2(%arg0: i32, %arg1: i32) -> (i32, i32, i32, i32) {
    %c0_i32 = arith.constant 0 : i32
    %c0_i32_0 = arith.constant 0 : i32
    %c0_i32_1 = arith.constant 0 : i32
    %c0_i32_2 = arith.constant 0 : i32
    return %arg0, %c0_i32, %c0_i32_0, %c0_i32_1 : i32, i32, i32, i32
  }
  func.func @transform_3(%arg0: i32, %arg1: i32) -> (i32, i32, i32, i32) {
    %c0_i32 = arith.constant 0 : i32
    %c0_i32_0 = arith.constant 0 : i32
    %c0_i32_1 = arith.constant 0 : i32
    %c0_i32_2 = arith.constant 0 : i32
    return %arg0, %c0_i32, %c0_i32_0, %c0_i32_1 : i32, i32, i32, i32
  }
}

module attributes {stable_mosaic.version = 11 : i64} {
  func.func @kernel(%arg0: i32, %arg1: i32, %arg2: memref<32x128xf32, #tpu.memory_space<vmem>>, %arg3: memref<32x128xbf16, #tpu.memory_space<vmem>>, %arg4: memref<1x10x8x128xf32, #tpu.memory_space<vmem>>, %arg5: memref<1x10x8x128xf32, #tpu.memory_space<vmem>>) attributes {dimension_semantics = [#tpu.dimension_semantics<parallel>, #tpu.dimension_semantics<arbitrary>], iteration_bounds = array<i64: 1, 1>, scalar_prefetch = 0 : i64, scratch_operands = 0 : i64, tpu.core_type = #tpu.core_type<tc>, window_params = [{transform_indices = @transform_0, window_bounds = array<i64: 32, 128>}, {transform_indices = @transform_1, window_bounds = array<i64: 32, 128>}, {transform_indices = @transform_2, window_bounds = array<i64: 1, 10, 8, 128>}, {transform_indices = @transform_3, window_bounds = array<i64: 1, 10, 8, 128>}]} {
    %c0_i32 = arith.constant 0 : i32
    %0 = arith.cmpi eq, %arg1, %c0_i32 : i32
    %1 = arith.extui %0 : i1 to i32
    %c0_i32_0 = arith.constant 0 : i32
    %2 = arith.cmpi ne, %1, %c0_i32_0 : i32
    scf.if %2 {
      %cst_162 = arith.constant 0.000000e+00 : f32
      %135 = vector.broadcast %cst_162 : f32 to vector<1x10x8x128xf32>
      %c0_163 = arith.constant 0 : index
      %c0_164 = arith.constant 0 : index
      %c0_165 = arith.constant 0 : index
      %c0_166 = arith.constant 0 : index
      %136 = vector.load %arg4[%c0_163, %c0_164, %c0_165, %c0_166] : memref<1x10x8x128xf32, #tpu.memory_space<vmem>>, vector<1x10x8x128xf32>
      tpu.vector_store %arg4[%c0_163, %c0_164, %c0_165, %c0_166], %135 {strides = array<i32>} : memref<1x10x8x128xf32, #tpu.memory_space<vmem>>, vector<1x10x8x128xf32>,
      %cst_167 = arith.constant 0.000000e+00 : f32
      %137 = vector.broadcast %cst_167 : f32 to vector<1x10x8x128xf32>
      %c0_168 = arith.constant 0 : index
      %c0_169 = arith.constant 0 : index
      %c0_170 = arith.constant 0 : index
      %c0_171 = arith.constant 0 : index
      %138 = vector.load %arg5[%c0_168, %c0_169, %c0_170, %c0_171] : memref<1x10x8x128xf32, #tpu.memory_space<vmem>>, vector<1x10x8x128xf32>
      tpu.vector_store %arg5[%c0_168, %c0_169, %c0_170, %c0_171], %137 {strides = array<i32>} : memref<1x10x8x128xf32, #tpu.memory_space<vmem>>, vector<1x10x8x128xf32>,
    } else {
    }
    %cst = arith.constant 0.000000e+00 : f32
    %3 = vector.broadcast %cst : f32 to vector<8x128xf32>
    %cst_1 = arith.constant 0.000000e+00 : f32
    %4 = vector.broadcast %cst_1 : f32 to vector<8x128xf32>
    %cst_2 = arith.constant 0.000000e+00 : f32
    %5 = vector.broadcast %cst_2 : f32 to vector<8x128xf32>
    %cst_3 = arith.constant 0.000000e+00 : f32
    %6 = vector.broadcast %cst_3 : f32 to vector<8x128xf32>
    %cst_4 = arith.constant 0.000000e+00 : f32
    %7 = vector.broadcast %cst_4 : f32 to vector<8x128xf32>
    %cst_5 = arith.constant 0.000000e+00 : f32
    %8 = vector.broadcast %cst_5 : f32 to vector<8x128xf32>
    %cst_6 = arith.constant 0.000000e+00 : f32
    %9 = vector.broadcast %cst_6 : f32 to vector<8x128xf32>
    %cst_7 = arith.constant 0.000000e+00 : f32
    %10 = vector.broadcast %cst_7 : f32 to vector<8x128xf32>
    %cst_8 = arith.constant 0.000000e+00 : f32
    %11 = vector.broadcast %cst_8 : f32 to vector<8x128xf32>
    %cst_9 = arith.constant 0.000000e+00 : f32
    %12 = vector.broadcast %cst_9 : f32 to vector<8x128xf32>
    %c0_i32_10 = arith.constant 0 : i32
    %c2_i32 = arith.constant 2 : i32
    %13 = arith.addi %c0_i32_10, %c2_i32 : i32
    %c1_i32 = arith.constant 1 : i32
    %14:20 = scf.for %arg6 = %c0_i32_10 to %13 step %c1_i32 iter_args(%arg7 = %3, %arg8 = %4, %arg9 = %5, %arg10 = %6, %arg11 = %7, %arg12 = %8, %arg13 = %9, %arg14 = %10, %arg15 = %11, %arg16 = %12, %arg17 = %3, %arg18 = %4, %arg19 = %5, %arg20 = %6, %arg21 = %7, %arg22 = %8, %arg23 = %9, %arg24 = %10, %arg25 = %11, %arg26 = %12) -> (vector<8x128xf32>, vector<8x128xf32>, vector<8x128xf32>, vector<8x128xf32>, vector<8x128xf32>, vector<8x128xf32>, vector<8x128xf32>, vector<8x128xf32>, vector<8x128xf32>, vector<8x128xf32>, vector<8x128xf32>, vector<8x128xf32>, vector<8x128xf32>, vector<8x128xf32>, vector<8x128xf32>, vector<8x128xf32>, vector<8x128xf32>, vector<8x128xf32>, vector<8x128xf32>, vector<8x128xf32>)  : i32 {
      %c16_i32 = arith.constant 16 : i32
      %135 = arith.muli %arg6, %c16_i32 : i32
      %136 = tpu.assume_multiple %135, 16 : i32
      %137 = arith.index_cast %136 : i32 to index
      %c0_162 = arith.constant 0 : index
      %138 = vector.load %arg2[%137, %c0_162] : memref<32x128xf32, #tpu.memory_space<vmem>>, vector<16x128xf32>
      %139 = arith.index_cast %136 : i32 to index
      %c0_163 = arith.constant 0 : index
      %140 = vector.load %arg3[%139, %c0_163] : memref<32x128xbf16, #tpu.memory_space<vmem>>, vector<16x128xbf16>
      %141 = arith.extf %140 : vector<16x128xbf16> to vector<16x128xf32>
      %142 = math.absf %138 : vector<16x128xf32>
      %cst_164 = arith.constant 0.000000e+00 : f32
      %143 = vector.broadcast %cst_164 : f32 to vector<16x128xf32>
      %144 = arith.subf %143, %142 : vector<16x128xf32>
      %145 = math.exp %144 : vector<16x128xf32>
      %cst_165 = arith.constant 1.000000e+00 : f32
      %146 = vector.broadcast %cst_165 : f32 to vector<16x128xf32>
      %147 = arith.addf %146, %145 : vector<16x128xf32>
      %cst_166 = arith.constant 0.000000e+00 : f32
      %148 = vector.broadcast %cst_166 : f32 to vector<16x128xf32>
      %149 = arith.cmpf oge, %138, %148 : vector<16x128xf32>
      %cst_167 = arith.constant 1.000000e+00 : f32
      %150 = vector.broadcast %cst_167 : f32 to vector<16x128xf32>
      %151 = arith.select %149, %150, %145 : vector<16x128xi1>, vector<16x128xf32>
      %152 = arith.divf %151, %147 : vector<16x128xf32>
      %cst_168 = arith.constant 0.000000e+00 : f32
      %153 = vector.broadcast %cst_168 : f32 to vector<16x128xf32>
      %154 = arith.maximumf %138, %153 : vector<16x128xf32>
      %155 = arith.mulf %138, %141 : vector<16x128xf32>
      %156 = arith.subf %154, %155 : vector<16x128xf32>
      %157 = math.log %147 : vector<16x128xf32>
      %158 = arith.addf %156, %157 : vector<16x128xf32>
      %159 = arith.subf %152, %141 : vector<16x128xf32>
      %160 = math.absf %159 : vector<16x128xf32>
      %cst_169 = arith.constant 0.000000e+00 : f32
      %161 = vector.broadcast %cst_169 : f32 to vector<16x128xf32>
      %162 = arith.cmpf oge, %160, %161 : vector<16x128xf32>
      %cst_170 = arith.constant 1.000000e-01 : f32
      %163 = vector.broadcast %cst_170 : f32 to vector<16x128xf32>
      %164 = arith.cmpf oge, %160, %163 : vector<16x128xf32>
      %cst_171 = arith.constant 2.000000e-01 : f32
      %165 = vector.broadcast %cst_171 : f32 to vector<16x128xf32>
      %166 = arith.cmpf oge, %160, %165 : vector<16x128xf32>
      %cst_172 = arith.constant 3.000000e-01 : f32
      %167 = vector.broadcast %cst_172 : f32 to vector<16x128xf32>
      %168 = arith.cmpf oge, %160, %167 : vector<16x128xf32>
      %cst_173 = arith.constant 4.000000e-01 : f32
      %169 = vector.broadcast %cst_173 : f32 to vector<16x128xf32>
      %170 = arith.cmpf oge, %160, %169 : vector<16x128xf32>
      %cst_174 = arith.constant 5.000000e-01 : f32
      %171 = vector.broadcast %cst_174 : f32 to vector<16x128xf32>
      %172 = arith.cmpf oge, %160, %171 : vector<16x128xf32>
      %cst_175 = arith.constant 6.000000e-01 : f32
      %173 = vector.broadcast %cst_175 : f32 to vector<16x128xf32>
      %174 = arith.cmpf oge, %160, %173 : vector<16x128xf32>
      %cst_176 = arith.constant 0.699999988 : f32
      %175 = vector.broadcast %cst_176 : f32 to vector<16x128xf32>
      %176 = arith.cmpf oge, %160, %175 : vector<16x128xf32>
      %cst_177 = arith.constant 8.000000e-01 : f32
      %177 = vector.broadcast %cst_177 : f32 to vector<16x128xf32>
      %178 = arith.cmpf oge, %160, %177 : vector<16x128xf32>
      %cst_178 = arith.constant 0.899999976 : f32
      %179 = vector.broadcast %cst_178 : f32 to vector<16x128xf32>
      %180 = arith.cmpf oge, %160, %179 : vector<16x128xf32>
      %cst_179 = arith.constant 1.00000095 : f32
      %181 = vector.broadcast %cst_179 : f32 to vector<16x128xf32>
      %182 = arith.cmpf oge, %160, %181 : vector<16x128xf32>
      %183 = arith.xori %162, %164 : vector<16x128xi1>
      %cst_180 = arith.constant 1.000000e+00 : f32
      %cst_181 = arith.constant 0.000000e+00 : f32
      %184 = vector.broadcast %cst_180 : f32 to vector<16x128xf32>
      %185 = vector.broadcast %cst_181 : f32 to vector<16x128xf32>
      %186 = arith.select %183, %184, %185 : vector<16x128xi1>, vector<16x128xf32>
      %cst_182 = arith.constant 0.000000e+00 : f32
      %187 = vector.broadcast %cst_182 : f32 to vector<16x128xf32>
      %188 = arith.select %183, %158, %187 : vector<16x128xi1>, vector<16x128xf32>
      %189 = vector.extract_strided_slice %186 {offsets = [0, 0], sizes = [8, 128], strides = [1, 1]} : vector<16x128xf32> to vector<8x128xf32>
      %190 = arith.addf %arg7, %189 : vector<8x128xf32>
      %191 = vector.extract_strided_slice %186 {offsets = [8, 0], sizes = [8, 128], strides = [1, 1]} : vector<16x128xf32> to vector<8x128xf32>
      %192 = arith.addf %190, %191 : vector<8x128xf32>
      %193 = vector.extract_strided_slice %188 {offsets = [0, 0], sizes = [8, 128], strides = [1, 1]} : vector<16x128xf32> to vector<8x128xf32>
      %194 = arith.addf %arg17, %193 : vector<8x128xf32>
      %195 = vector.extract_strided_slice %188 {offsets = [8, 0], sizes = [8, 128], strides = [1, 1]} : vector<16x128xf32> to vector<8x128xf32>
      %196 = arith.addf %194, %195 : vector<8x128xf32>
      %197 = arith.xori %164, %166 : vector<16x128xi1>
      %cst_183 = arith.constant 1.000000e+00 : f32
      %cst_184 = arith.constant 0.000000e+00 : f32
      %198 = vector.broadcast %cst_183 : f32 to vector<16x128xf32>
      %199 = vector.broadcast %cst_184 : f32 to vector<16x128xf32>
      %200 = arith.select %197, %198, %199 : vector<16x128xi1>, vector<16x128xf32>
      %cst_185 = arith.constant 0.000000e+00 : f32
      %201 = vector.broadcast %cst_185 : f32 to vector<16x128xf32>
      %202 = arith.select %197, %158, %201 : vector<16x128xi1>, vector<16x128xf32>
      %203 = vector.extract_strided_slice %200 {offsets = [0, 0], sizes = [8, 128], strides = [1, 1]} : vector<16x128xf32> to vector<8x128xf32>
      %204 = arith.addf %arg8, %203 : vector<8x128xf32>
      %205 = vector.extract_strided_slice %200 {offsets = [8, 0], sizes = [8, 128], strides = [1, 1]} : vector<16x128xf32> to vector<8x128xf32>
      %206 = arith.addf %204, %205 : vector<8x128xf32>
      %207 = vector.extract_strided_slice %202 {offsets = [0, 0], sizes = [8, 128], strides = [1, 1]} : vector<16x128xf32> to vector<8x128xf32>
      %208 = arith.addf %arg18, %207 : vector<8x128xf32>
      %209 = vector.extract_strided_slice %202 {offsets = [8, 0], sizes = [8, 128], strides = [1, 1]} : vector<16x128xf32> to vector<8x128xf32>
      %210 = arith.addf %208, %209 : vector<8x128xf32>
      %211 = arith.xori %166, %168 : vector<16x128xi1>
      %cst_186 = arith.constant 1.000000e+00 : f32
      %cst_187 = arith.constant 0.000000e+00 : f32
      %212 = vector.broadcast %cst_186 : f32 to vector<16x128xf32>
      %213 = vector.broadcast %cst_187 : f32 to vector<16x128xf32>
      %214 = arith.select %211, %212, %213 : vector<16x128xi1>, vector<16x128xf32>
      %cst_188 = arith.constant 0.000000e+00 : f32
      %215 = vector.broadcast %cst_188 : f32 to vector<16x128xf32>
      %216 = arith.select %211, %158, %215 : vector<16x128xi1>, vector<16x128xf32>
      %217 = vector.extract_strided_slice %214 {offsets = [0, 0], sizes = [8, 128], strides = [1, 1]} : vector<16x128xf32> to vector<8x128xf32>
      %218 = arith.addf %arg9, %217 : vector<8x128xf32>
      %219 = vector.extract_strided_slice %214 {offsets = [8, 0], sizes = [8, 128], strides = [1, 1]} : vector<16x128xf32> to vector<8x128xf32>
      %220 = arith.addf %218, %219 : vector<8x128xf32>
      %221 = vector.extract_strided_slice %216 {offsets = [0, 0], sizes = [8, 128], strides = [1, 1]} : vector<16x128xf32> to vector<8x128xf32>
      %222 = arith.addf %arg19, %221 : vector<8x128xf32>
      %223 = vector.extract_strided_slice %216 {offsets = [8, 0], sizes = [8, 128], strides = [1, 1]} : vector<16x128xf32> to vector<8x128xf32>
      %224 = arith.addf %222, %223 : vector<8x128xf32>
      %225 = arith.xori %168, %170 : vector<16x128xi1>
      %cst_189 = arith.constant 1.000000e+00 : f32
      %cst_190 = arith.constant 0.000000e+00 : f32
      %226 = vector.broadcast %cst_189 : f32 to vector<16x128xf32>
      %227 = vector.broadcast %cst_190 : f32 to vector<16x128xf32>
      %228 = arith.select %225, %226, %227 : vector<16x128xi1>, vector<16x128xf32>
      %cst_191 = arith.constant 0.000000e+00 : f32
      %229 = vector.broadcast %cst_191 : f32 to vector<16x128xf32>
      %230 = arith.select %225, %158, %229 : vector<16x128xi1>, vector<16x128xf32>
      %231 = vector.extract_strided_slice %228 {offsets = [0, 0], sizes = [8, 128], strides = [1, 1]} : vector<16x128xf32> to vector<8x128xf32>
      %232 = arith.addf %arg10, %231 : vector<8x128xf32>
      %233 = vector.extract_strided_slice %228 {offsets = [8, 0], sizes = [8, 128], strides = [1, 1]} : vector<16x128xf32> to vector<8x128xf32>
      %234 = arith.addf %232, %233 : vector<8x128xf32>
      %235 = vector.extract_strided_slice %230 {offsets = [0, 0], sizes = [8, 128], strides = [1, 1]} : vector<16x128xf32> to vector<8x128xf32>
      %236 = arith.addf %arg20, %235 : vector<8x128xf32>
      %237 = vector.extract_strided_slice %230 {offsets = [8, 0], sizes = [8, 128], strides = [1, 1]} : vector<16x128xf32> to vector<8x128xf32>
      %238 = arith.addf %236, %237 : vector<8x128xf32>
      %239 = arith.xori %170, %172 : vector<16x128xi1>
      %cst_192 = arith.constant 1.000000e+00 : f32
      %cst_193 = arith.constant 0.000000e+00 : f32
      %240 = vector.broadcast %cst_192 : f32 to vector<16x128xf32>
      %241 = vector.broadcast %cst_193 : f32 to vector<16x128xf32>
      %242 = arith.select %239, %240, %241 : vector<16x128xi1>, vector<16x128xf32>
      %cst_194 = arith.constant 0.000000e+00 : f32
      %243 = vector.broadcast %cst_194 : f32 to vector<16x128xf32>
      %244 = arith.select %239, %158, %243 : vector<16x128xi1>, vector<16x128xf32>
      %245 = vector.extract_strided_slice %242 {offsets = [0, 0], sizes = [8, 128], strides = [1, 1]} : vector<16x128xf32> to vector<8x128xf32>
      %246 = arith.addf %arg11, %245 : vector<8x128xf32>
      %247 = vector.extract_strided_slice %242 {offsets = [8, 0], sizes = [8, 128], strides = [1, 1]} : vector<16x128xf32> to vector<8x128xf32>
      %248 = arith.addf %246, %247 : vector<8x128xf32>
      %249 = vector.extract_strided_slice %244 {offsets = [0, 0], sizes = [8, 128], strides = [1, 1]} : vector<16x128xf32> to vector<8x128xf32>
      %250 = arith.addf %arg21, %249 : vector<8x128xf32>
      %251 = vector.extract_strided_slice %244 {offsets = [8, 0], sizes = [8, 128], strides = [1, 1]} : vector<16x128xf32> to vector<8x128xf32>
      %252 = arith.addf %250, %251 : vector<8x128xf32>
      %253 = arith.xori %172, %174 : vector<16x128xi1>
      %cst_195 = arith.constant 1.000000e+00 : f32
      %cst_196 = arith.constant 0.000000e+00 : f32
      %254 = vector.broadcast %cst_195 : f32 to vector<16x128xf32>
      %255 = vector.broadcast %cst_196 : f32 to vector<16x128xf32>
      %256 = arith.select %253, %254, %255 : vector<16x128xi1>, vector<16x128xf32>
      %cst_197 = arith.constant 0.000000e+00 : f32
      %257 = vector.broadcast %cst_197 : f32 to vector<16x128xf32>
      %258 = arith.select %253, %158, %257 : vector<16x128xi1>, vector<16x128xf32>
      %259 = vector.extract_strided_slice %256 {offsets = [0, 0], sizes = [8, 128], strides = [1, 1]} : vector<16x128xf32> to vector<8x128xf32>
      %260 = arith.addf %arg12, %259 : vector<8x128xf32>
      %261 = vector.extract_strided_slice %256 {offsets = [8, 0], sizes = [8, 128], strides = [1, 1]} : vector<16x128xf32> to vector<8x128xf32>
      %262 = arith.addf %260, %261 : vector<8x128xf32>
      %263 = vector.extract_strided_slice %258 {offsets = [0, 0], sizes = [8, 128], strides = [1, 1]} : vector<16x128xf32> to vector<8x128xf32>
      %264 = arith.addf %arg22, %263 : vector<8x128xf32>
      %265 = vector.extract_strided_slice %258 {offsets = [8, 0], sizes = [8, 128], strides = [1, 1]} : vector<16x128xf32> to vector<8x128xf32>
      %266 = arith.addf %264, %265 : vector<8x128xf32>
      %267 = arith.xori %174, %176 : vector<16x128xi1>
      %cst_198 = arith.constant 1.000000e+00 : f32
      %cst_199 = arith.constant 0.000000e+00 : f32
      %268 = vector.broadcast %cst_198 : f32 to vector<16x128xf32>
      %269 = vector.broadcast %cst_199 : f32 to vector<16x128xf32>
      %270 = arith.select %267, %268, %269 : vector<16x128xi1>, vector<16x128xf32>
      %cst_200 = arith.constant 0.000000e+00 : f32
      %271 = vector.broadcast %cst_200 : f32 to vector<16x128xf32>
      %272 = arith.select %267, %158, %271 : vector<16x128xi1>, vector<16x128xf32>
      %273 = vector.extract_strided_slice %270 {offsets = [0, 0], sizes = [8, 128], strides = [1, 1]} : vector<16x128xf32> to vector<8x128xf32>
      %274 = arith.addf %arg13, %273 : vector<8x128xf32>
      %275 = vector.extract_strided_slice %270 {offsets = [8, 0], sizes = [8, 128], strides = [1, 1]} : vector<16x128xf32> to vector<8x128xf32>
      %276 = arith.addf %274, %275 : vector<8x128xf32>
      %277 = vector.extract_strided_slice %272 {offsets = [0, 0], sizes = [8, 128], strides = [1, 1]} : vector<16x128xf32> to vector<8x128xf32>
      %278 = arith.addf %arg23, %277 : vector<8x128xf32>
      %279 = vector.extract_strided_slice %272 {offsets = [8, 0], sizes = [8, 128], strides = [1, 1]} : vector<16x128xf32> to vector<8x128xf32>
      %280 = arith.addf %278, %279 : vector<8x128xf32>
      %281 = arith.xori %176, %178 : vector<16x128xi1>
      %cst_201 = arith.constant 1.000000e+00 : f32
      %cst_202 = arith.constant 0.000000e+00 : f32
      %282 = vector.broadcast %cst_201 : f32 to vector<16x128xf32>
      %283 = vector.broadcast %cst_202 : f32 to vector<16x128xf32>
      %284 = arith.select %281, %282, %283 : vector<16x128xi1>, vector<16x128xf32>
      %cst_203 = arith.constant 0.000000e+00 : f32
      %285 = vector.broadcast %cst_203 : f32 to vector<16x128xf32>
      %286 = arith.select %281, %158, %285 : vector<16x128xi1>, vector<16x128xf32>
      %287 = vector.extract_strided_slice %284 {offsets = [0, 0], sizes = [8, 128], strides = [1, 1]} : vector<16x128xf32> to vector<8x128xf32>
      %288 = arith.addf %arg14, %287 : vector<8x128xf32>
      %289 = vector.extract_strided_slice %284 {offsets = [8, 0], sizes = [8, 128], strides = [1, 1]} : vector<16x128xf32> to vector<8x128xf32>
      %290 = arith.addf %288, %289 : vector<8x128xf32>
      %291 = vector.extract_strided_slice %286 {offsets = [0, 0], sizes = [8, 128], strides = [1, 1]} : vector<16x128xf32> to vector<8x128xf32>
      %292 = arith.addf %arg24, %291 : vector<8x128xf32>
      %293 = vector.extract_strided_slice %286 {offsets = [8, 0], sizes = [8, 128], strides = [1, 1]} : vector<16x128xf32> to vector<8x128xf32>
      %294 = arith.addf %292, %293 : vector<8x128xf32>
      %295 = arith.xori %178, %180 : vector<16x128xi1>
      %cst_204 = arith.constant 1.000000e+00 : f32
      %cst_205 = arith.constant 0.000000e+00 : f32
      %296 = vector.broadcast %cst_204 : f32 to vector<16x128xf32>
      %297 = vector.broadcast %cst_205 : f32 to vector<16x128xf32>
      %298 = arith.select %295, %296, %297 : vector<16x128xi1>, vector<16x128xf32>
      %cst_206 = arith.constant 0.000000e+00 : f32
      %299 = vector.broadcast %cst_206 : f32 to vector<16x128xf32>
      %300 = arith.select %295, %158, %299 : vector<16x128xi1>, vector<16x128xf32>
      %301 = vector.extract_strided_slice %298 {offsets = [0, 0], sizes = [8, 128], strides = [1, 1]} : vector<16x128xf32> to vector<8x128xf32>
      %302 = arith.addf %arg15, %301 : vector<8x128xf32>
      %303 = vector.extract_strided_slice %298 {offsets = [8, 0], sizes = [8, 128], strides = [1, 1]} : vector<16x128xf32> to vector<8x128xf32>
      %304 = arith.addf %302, %303 : vector<8x128xf32>
      %305 = vector.extract_strided_slice %300 {offsets = [0, 0], sizes = [8, 128], strides = [1, 1]} : vector<16x128xf32> to vector<8x128xf32>
      %306 = arith.addf %arg25, %305 : vector<8x128xf32>
      %307 = vector.extract_strided_slice %300 {offsets = [8, 0], sizes = [8, 128], strides = [1, 1]} : vector<16x128xf32> to vector<8x128xf32>
      %308 = arith.addf %306, %307 : vector<8x128xf32>
      %309 = arith.xori %180, %182 : vector<16x128xi1>
      %cst_207 = arith.constant 1.000000e+00 : f32
      %cst_208 = arith.constant 0.000000e+00 : f32
      %310 = vector.broadcast %cst_207 : f32 to vector<16x128xf32>
      %311 = vector.broadcast %cst_208 : f32 to vector<16x128xf32>
      %312 = arith.select %309, %310, %311 : vector<16x128xi1>, vector<16x128xf32>
      %cst_209 = arith.constant 0.000000e+00 : f32
      %313 = vector.broadcast %cst_209 : f32 to vector<16x128xf32>
      %314 = arith.select %309, %158, %313 : vector<16x128xi1>, vector<16x128xf32>
      %315 = vector.extract_strided_slice %312 {offsets = [0, 0], sizes = [8, 128], strides = [1, 1]} : vector<16x128xf32> to vector<8x128xf32>
      %316 = arith.addf %arg16, %315 : vector<8x128xf32>
      %317 = vector.extract_strided_slice %312 {offsets = [8, 0], sizes = [8, 128], strides = [1, 1]} : vector<16x128xf32> to vector<8x128xf32>
      %318 = arith.addf %316, %317 : vector<8x128xf32>
      %319 = vector.extract_strided_slice %314 {offsets = [0, 0], sizes = [8, 128], strides = [1, 1]} : vector<16x128xf32> to vector<8x128xf32>
      %320 = arith.addf %arg26, %319 : vector<8x128xf32>
      %321 = vector.extract_strided_slice %314 {offsets = [8, 0], sizes = [8, 128], strides = [1, 1]} : vector<16x128xf32> to vector<8x128xf32>
      %322 = arith.addf %320, %321 : vector<8x128xf32>
      scf.yield %192, %206, %220, %234, %248, %262, %276, %290, %304, %318, %196, %210, %224, %238, %252, %266, %280, %294, %308, %322 : vector<8x128xf32>, vector<8x128xf32>, vector<8x128xf32>, vector<8x128xf32>, vector<8x128xf32>, vector<8x128xf32>, vector<8x128xf32>, vector<8x128xf32>, vector<8x128xf32>, vector<8x128xf32>, vector<8x128xf32>, vector<8x128xf32>, vector<8x128xf32>, vector<8x128xf32>, vector<8x128xf32>, vector<8x128xf32>, vector<8x128xf32>, vector<8x128xf32>, vector<8x128xf32>, vector<8x128xf32>
    }
    %c2_i32_11 = arith.constant 2 : i32
    %c0 = arith.constant 0 : index
    %c0_12 = arith.constant 0 : index
    %c0_13 = arith.constant 0 : index
    %c0_14 = arith.constant 0 : index
    %15 = vector.load %arg4[%c0, %c0_12, %c0_13, %c0_14] : memref<1x10x8x128xf32, #tpu.memory_space<vmem>>, vector<1x1x8x128xf32>
    %16 = vector.shape_cast %15 : vector<1x1x8x128xf32> to vector<8x128xf32>
    %17 = arith.addf %16, %14#0 : vector<8x128xf32>
    %c0_15 = arith.constant 0 : index
    %c0_16 = arith.constant 0 : index
    %c0_17 = arith.constant 0 : index
    %c0_18 = arith.constant 0 : index
    %18 = vector.load %arg4[%c0_15, %c0_16, %c0_17, %c0_18] : memref<1x10x8x128xf32, #tpu.memory_space<vmem>>, vector<1x1x8x128xf32>
    %19 = vector.shape_cast %18 : vector<1x1x8x128xf32> to vector<8x128xf32>
    %20 = vector.shape_cast %17 : vector<8x128xf32> to vector<1x1x8x128xf32>
    tpu.vector_store %arg4[%c0_15, %c0_16, %c0_17, %c0_18], %20 {strides = array<i32>} : memref<1x10x8x128xf32, #tpu.memory_space<vmem>>, vector<1x1x8x128xf32>,
    %c0_19 = arith.constant 0 : index
    %c0_20 = arith.constant 0 : index
    %c0_21 = arith.constant 0 : index
    %c0_22 = arith.constant 0 : index
    %21 = vector.load %arg5[%c0_19, %c0_20, %c0_21, %c0_22] : memref<1x10x8x128xf32, #tpu.memory_space<vmem>>, vector<1x1x8x128xf32>
    %22 = vector.shape_cast %21 : vector<1x1x8x128xf32> to vector<8x128xf32>
    %23 = arith.addf %22, %14#10 : vector<8x128xf32>
    %c0_23 = arith.constant 0 : index
    %c0_24 = arith.constant 0 : index
    %c0_25 = arith.constant 0 : index
    %c0_26 = arith.constant 0 : index
    %24 = vector.load %arg5[%c0_23, %c0_24, %c0_25, %c0_26] : memref<1x10x8x128xf32, #tpu.memory_space<vmem>>, vector<1x1x8x128xf32>
    %25 = vector.shape_cast %24 : vector<1x1x8x128xf32> to vector<8x128xf32>
    %26 = vector.shape_cast %23 : vector<8x128xf32> to vector<1x1x8x128xf32>
    tpu.vector_store %arg5[%c0_23, %c0_24, %c0_25, %c0_26], %26 {strides = array<i32>} : memref<1x10x8x128xf32, #tpu.memory_space<vmem>>, vector<1x1x8x128xf32>,
    %c0_27 = arith.constant 0 : index
    %c1 = arith.constant 1 : index
    %c0_28 = arith.constant 0 : index
    %c0_29 = arith.constant 0 : index
    %27 = vector.load %arg4[%c0_27, %c1, %c0_28, %c0_29] : memref<1x10x8x128xf32, #tpu.memory_space<vmem>>, vector<1x1x8x128xf32>
    %28 = vector.shape_cast %27 : vector<1x1x8x128xf32> to vector<8x128xf32>
    %29 = arith.addf %28, %14#1 : vector<8x128xf32>
    %c0_30 = arith.constant 0 : index
    %c1_31 = arith.constant 1 : index
    %c0_32 = arith.constant 0 : index
    %c0_33 = arith.constant 0 : index
    %30 = vector.load %arg4[%c0_30, %c1_31, %c0_32, %c0_33] : memref<1x10x8x128xf32, #tpu.memory_space<vmem>>, vector<1x1x8x128xf32>
    %31 = vector.shape_cast %30 : vector<1x1x8x128xf32> to vector<8x128xf32>
    %32 = vector.shape_cast %29 : vector<8x128xf32> to vector<1x1x8x128xf32>
    tpu.vector_store %arg4[%c0_30, %c1_31, %c0_32, %c0_33], %32 {strides = array<i32>} : memref<1x10x8x128xf32, #tpu.memory_space<vmem>>, vector<1x1x8x128xf32>,
    %c0_34 = arith.constant 0 : index
    %c1_35 = arith.constant 1 : index
    %c0_36 = arith.constant 0 : index
    %c0_37 = arith.constant 0 : index
    %33 = vector.load %arg5[%c0_34, %c1_35, %c0_36, %c0_37] : memref<1x10x8x128xf32, #tpu.memory_space<vmem>>, vector<1x1x8x128xf32>
    %34 = vector.shape_cast %33 : vector<1x1x8x128xf32> to vector<8x128xf32>
    %35 = arith.addf %34, %14#11 : vector<8x128xf32>
    %c0_38 = arith.constant 0 : index
    %c1_39 = arith.constant 1 : index
    %c0_40 = arith.constant 0 : index
    %c0_41 = arith.constant 0 : index
    %36 = vector.load %arg5[%c0_38, %c1_39, %c0_40, %c0_41] : memref<1x10x8x128xf32, #tpu.memory_space<vmem>>, vector<1x1x8x128xf32>
    %37 = vector.shape_cast %36 : vector<1x1x8x128xf32> to vector<8x128xf32>
    %38 = vector.shape_cast %35 : vector<8x128xf32> to vector<1x1x8x128xf32>
    tpu.vector_store %arg5[%c0_38, %c1_39, %c0_40, %c0_41], %38 {strides = array<i32>} : memref<1x10x8x128xf32, #tpu.memory_space<vmem>>, vector<1x1x8x128xf32>,
    %c0_42 = arith.constant 0 : index
    %c2 = arith.constant 2 : index
    %c0_43 = arith.constant 0 : index
    %c0_44 = arith.constant 0 : index
    %39 = vector.load %arg4[%c0_42, %c2, %c0_43, %c0_44] : memref<1x10x8x128xf32, #tpu.memory_space<vmem>>, vector<1x1x8x128xf32>
    %40 = vector.shape_cast %39 : vector<1x1x8x128xf32> to vector<8x128xf32>
    %41 = arith.addf %40, %14#2 : vector<8x128xf32>
    %c0_45 = arith.constant 0 : index
    %c2_46 = arith.constant 2 : index
    %c0_47 = arith.constant 0 : index
    %c0_48 = arith.constant 0 : index
    %42 = vector.load %arg4[%c0_45, %c2_46, %c0_47, %c0_48] : memref<1x10x8x128xf32, #tpu.memory_space<vmem>>, vector<1x1x8x128xf32>
    %43 = vector.shape_cast %42 : vector<1x1x8x128xf32> to vector<8x128xf32>
    %44 = vector.shape_cast %41 : vector<8x128xf32> to vector<1x1x8x128xf32>
    tpu.vector_store %arg4[%c0_45, %c2_46, %c0_47, %c0_48], %44 {strides = array<i32>} : memref<1x10x8x128xf32, #tpu.memory_space<vmem>>, vector<1x1x8x128xf32>,
    %c0_49 = arith.constant 0 : index
    %c2_50 = arith.constant 2 : index
    %c0_51 = arith.constant 0 : index
    %c0_52 = arith.constant 0 : index
    %45 = vector.load %arg5[%c0_49, %c2_50, %c0_51, %c0_52] : memref<1x10x8x128xf32, #tpu.memory_space<vmem>>, vector<1x1x8x128xf32>
    %46 = vector.shape_cast %45 : vector<1x1x8x128xf32> to vector<8x128xf32>
    %47 = arith.addf %46, %14#12 : vector<8x128xf32>
    %c0_53 = arith.constant 0 : index
    %c2_54 = arith.constant 2 : index
    %c0_55 = arith.constant 0 : index
    %c0_56 = arith.constant 0 : index
    %48 = vector.load %arg5[%c0_53, %c2_54, %c0_55, %c0_56] : memref<1x10x8x128xf32, #tpu.memory_space<vmem>>, vector<1x1x8x128xf32>
    %49 = vector.shape_cast %48 : vector<1x1x8x128xf32> to vector<8x128xf32>
    %50 = vector.shape_cast %47 : vector<8x128xf32> to vector<1x1x8x128xf32>
    tpu.vector_store %arg5[%c0_53, %c2_54, %c0_55, %c0_56], %50 {strides = array<i32>} : memref<1x10x8x128xf32, #tpu.memory_space<vmem>>, vector<1x1x8x128xf32>,
    %c0_57 = arith.constant 0 : index
    %c3 = arith.constant 3 : index
    %c0_58 = arith.constant 0 : index
    %c0_59 = arith.constant 0 : index
    %51 = vector.load %arg4[%c0_57, %c3, %c0_58, %c0_59] : memref<1x10x8x128xf32, #tpu.memory_space<vmem>>, vector<1x1x8x128xf32>
    %52 = vector.shape_cast %51 : vector<1x1x8x128xf32> to vector<8x128xf32>
    %53 = arith.addf %52, %14#3 : vector<8x128xf32>
    %c0_60 = arith.constant 0 : index
    %c3_61 = arith.constant 3 : index
    %c0_62 = arith.constant 0 : index
    %c0_63 = arith.constant 0 : index
    %54 = vector.load %arg4[%c0_60, %c3_61, %c0_62, %c0_63] : memref<1x10x8x128xf32, #tpu.memory_space<vmem>>, vector<1x1x8x128xf32>
    %55 = vector.shape_cast %54 : vector<1x1x8x128xf32> to vector<8x128xf32>
    %56 = vector.shape_cast %53 : vector<8x128xf32> to vector<1x1x8x128xf32>
    tpu.vector_store %arg4[%c0_60, %c3_61, %c0_62, %c0_63], %56 {strides = array<i32>} : memref<1x10x8x128xf32, #tpu.memory_space<vmem>>, vector<1x1x8x128xf32>,
    %c0_64 = arith.constant 0 : index
    %c3_65 = arith.constant 3 : index
    %c0_66 = arith.constant 0 : index
    %c0_67 = arith.constant 0 : index
    %57 = vector.load %arg5[%c0_64, %c3_65, %c0_66, %c0_67] : memref<1x10x8x128xf32, #tpu.memory_space<vmem>>, vector<1x1x8x128xf32>
    %58 = vector.shape_cast %57 : vector<1x1x8x128xf32> to vector<8x128xf32>
    %59 = arith.addf %58, %14#13 : vector<8x128xf32>
    %c0_68 = arith.constant 0 : index
    %c3_69 = arith.constant 3 : index
    %c0_70 = arith.constant 0 : index
    %c0_71 = arith.constant 0 : index
    %60 = vector.load %arg5[%c0_68, %c3_69, %c0_70, %c0_71] : memref<1x10x8x128xf32, #tpu.memory_space<vmem>>, vector<1x1x8x128xf32>
    %61 = vector.shape_cast %60 : vector<1x1x8x128xf32> to vector<8x128xf32>
    %62 = vector.shape_cast %59 : vector<8x128xf32> to vector<1x1x8x128xf32>
    tpu.vector_store %arg5[%c0_68, %c3_69, %c0_70, %c0_71], %62 {strides = array<i32>} : memref<1x10x8x128xf32, #tpu.memory_space<vmem>>, vector<1x1x8x128xf32>,
    %c0_72 = arith.constant 0 : index
    %c4 = arith.constant 4 : index
    %c0_73 = arith.constant 0 : index
    %c0_74 = arith.constant 0 : index
    %63 = vector.load %arg4[%c0_72, %c4, %c0_73, %c0_74] : memref<1x10x8x128xf32, #tpu.memory_space<vmem>>, vector<1x1x8x128xf32>
    %64 = vector.shape_cast %63 : vector<1x1x8x128xf32> to vector<8x128xf32>
    %65 = arith.addf %64, %14#4 : vector<8x128xf32>
    %c0_75 = arith.constant 0 : index
    %c4_76 = arith.constant 4 : index
    %c0_77 = arith.constant 0 : index
    %c0_78 = arith.constant 0 : index
    %66 = vector.load %arg4[%c0_75, %c4_76, %c0_77, %c0_78] : memref<1x10x8x128xf32, #tpu.memory_space<vmem>>, vector<1x1x8x128xf32>
    %67 = vector.shape_cast %66 : vector<1x1x8x128xf32> to vector<8x128xf32>
    %68 = vector.shape_cast %65 : vector<8x128xf32> to vector<1x1x8x128xf32>
    tpu.vector_store %arg4[%c0_75, %c4_76, %c0_77, %c0_78], %68 {strides = array<i32>} : memref<1x10x8x128xf32, #tpu.memory_space<vmem>>, vector<1x1x8x128xf32>,
    %c0_79 = arith.constant 0 : index
    %c4_80 = arith.constant 4 : index
    %c0_81 = arith.constant 0 : index
    %c0_82 = arith.constant 0 : index
    %69 = vector.load %arg5[%c0_79, %c4_80, %c0_81, %c0_82] : memref<1x10x8x128xf32, #tpu.memory_space<vmem>>, vector<1x1x8x128xf32>
    %70 = vector.shape_cast %69 : vector<1x1x8x128xf32> to vector<8x128xf32>
    %71 = arith.addf %70, %14#14 : vector<8x128xf32>
    %c0_83 = arith.constant 0 : index
    %c4_84 = arith.constant 4 : index
    %c0_85 = arith.constant 0 : index
    %c0_86 = arith.constant 0 : index
    %72 = vector.load %arg5[%c0_83, %c4_84, %c0_85, %c0_86] : memref<1x10x8x128xf32, #tpu.memory_space<vmem>>, vector<1x1x8x128xf32>
    %73 = vector.shape_cast %72 : vector<1x1x8x128xf32> to vector<8x128xf32>
    %74 = vector.shape_cast %71 : vector<8x128xf32> to vector<1x1x8x128xf32>
    tpu.vector_store %arg5[%c0_83, %c4_84, %c0_85, %c0_86], %74 {strides = array<i32>} : memref<1x10x8x128xf32, #tpu.memory_space<vmem>>, vector<1x1x8x128xf32>,
    %c0_87 = arith.constant 0 : index
    %c5 = arith.constant 5 : index
    %c0_88 = arith.constant 0 : index
    %c0_89 = arith.constant 0 : index
    %75 = vector.load %arg4[%c0_87, %c5, %c0_88, %c0_89] : memref<1x10x8x128xf32, #tpu.memory_space<vmem>>, vector<1x1x8x128xf32>
    %76 = vector.shape_cast %75 : vector<1x1x8x128xf32> to vector<8x128xf32>
    %77 = arith.addf %76, %14#5 : vector<8x128xf32>
    %c0_90 = arith.constant 0 : index
    %c5_91 = arith.constant 5 : index
    %c0_92 = arith.constant 0 : index
    %c0_93 = arith.constant 0 : index
    %78 = vector.load %arg4[%c0_90, %c5_91, %c0_92, %c0_93] : memref<1x10x8x128xf32, #tpu.memory_space<vmem>>, vector<1x1x8x128xf32>
    %79 = vector.shape_cast %78 : vector<1x1x8x128xf32> to vector<8x128xf32>
    %80 = vector.shape_cast %77 : vector<8x128xf32> to vector<1x1x8x128xf32>
    tpu.vector_store %arg4[%c0_90, %c5_91, %c0_92, %c0_93], %80 {strides = array<i32>} : memref<1x10x8x128xf32, #tpu.memory_space<vmem>>, vector<1x1x8x128xf32>,
    %c0_94 = arith.constant 0 : index
    %c5_95 = arith.constant 5 : index
    %c0_96 = arith.constant 0 : index
    %c0_97 = arith.constant 0 : index
    %81 = vector.load %arg5[%c0_94, %c5_95, %c0_96, %c0_97] : memref<1x10x8x128xf32, #tpu.memory_space<vmem>>, vector<1x1x8x128xf32>
    %82 = vector.shape_cast %81 : vector<1x1x8x128xf32> to vector<8x128xf32>
    %83 = arith.addf %82, %14#15 : vector<8x128xf32>
    %c0_98 = arith.constant 0 : index
    %c5_99 = arith.constant 5 : index
    %c0_100 = arith.constant 0 : index
    %c0_101 = arith.constant 0 : index
    %84 = vector.load %arg5[%c0_98, %c5_99, %c0_100, %c0_101] : memref<1x10x8x128xf32, #tpu.memory_space<vmem>>, vector<1x1x8x128xf32>
    %85 = vector.shape_cast %84 : vector<1x1x8x128xf32> to vector<8x128xf32>
    %86 = vector.shape_cast %83 : vector<8x128xf32> to vector<1x1x8x128xf32>
    tpu.vector_store %arg5[%c0_98, %c5_99, %c0_100, %c0_101], %86 {strides = array<i32>} : memref<1x10x8x128xf32, #tpu.memory_space<vmem>>, vector<1x1x8x128xf32>,
    %c0_102 = arith.constant 0 : index
    %c6 = arith.constant 6 : index
    %c0_103 = arith.constant 0 : index
    %c0_104 = arith.constant 0 : index
    %87 = vector.load %arg4[%c0_102, %c6, %c0_103, %c0_104] : memref<1x10x8x128xf32, #tpu.memory_space<vmem>>, vector<1x1x8x128xf32>
    %88 = vector.shape_cast %87 : vector<1x1x8x128xf32> to vector<8x128xf32>
    %89 = arith.addf %88, %14#6 : vector<8x128xf32>
    %c0_105 = arith.constant 0 : index
    %c6_106 = arith.constant 6 : index
    %c0_107 = arith.constant 0 : index
    %c0_108 = arith.constant 0 : index
    %90 = vector.load %arg4[%c0_105, %c6_106, %c0_107, %c0_108] : memref<1x10x8x128xf32, #tpu.memory_space<vmem>>, vector<1x1x8x128xf32>
    %91 = vector.shape_cast %90 : vector<1x1x8x128xf32> to vector<8x128xf32>
    %92 = vector.shape_cast %89 : vector<8x128xf32> to vector<1x1x8x128xf32>
    tpu.vector_store %arg4[%c0_105, %c6_106, %c0_107, %c0_108], %92 {strides = array<i32>} : memref<1x10x8x128xf32, #tpu.memory_space<vmem>>, vector<1x1x8x128xf32>,
    %c0_109 = arith.constant 0 : index
    %c6_110 = arith.constant 6 : index
    %c0_111 = arith.constant 0 : index
    %c0_112 = arith.constant 0 : index
    %93 = vector.load %arg5[%c0_109, %c6_110, %c0_111, %c0_112] : memref<1x10x8x128xf32, #tpu.memory_space<vmem>>, vector<1x1x8x128xf32>
    %94 = vector.shape_cast %93 : vector<1x1x8x128xf32> to vector<8x128xf32>
    %95 = arith.addf %94, %14#16 : vector<8x128xf32>
    %c0_113 = arith.constant 0 : index
    %c6_114 = arith.constant 6 : index
    %c0_115 = arith.constant 0 : index
    %c0_116 = arith.constant 0 : index
    %96 = vector.load %arg5[%c0_113, %c6_114, %c0_115, %c0_116] : memref<1x10x8x128xf32, #tpu.memory_space<vmem>>, vector<1x1x8x128xf32>
    %97 = vector.shape_cast %96 : vector<1x1x8x128xf32> to vector<8x128xf32>
    %98 = vector.shape_cast %95 : vector<8x128xf32> to vector<1x1x8x128xf32>
    tpu.vector_store %arg5[%c0_113, %c6_114, %c0_115, %c0_116], %98 {strides = array<i32>} : memref<1x10x8x128xf32, #tpu.memory_space<vmem>>, vector<1x1x8x128xf32>,
    %c0_117 = arith.constant 0 : index
    %c7 = arith.constant 7 : index
    %c0_118 = arith.constant 0 : index
    %c0_119 = arith.constant 0 : index
    %99 = vector.load %arg4[%c0_117, %c7, %c0_118, %c0_119] : memref<1x10x8x128xf32, #tpu.memory_space<vmem>>, vector<1x1x8x128xf32>
    %100 = vector.shape_cast %99 : vector<1x1x8x128xf32> to vector<8x128xf32>
    %101 = arith.addf %100, %14#7 : vector<8x128xf32>
    %c0_120 = arith.constant 0 : index
    %c7_121 = arith.constant 7 : index
    %c0_122 = arith.constant 0 : index
    %c0_123 = arith.constant 0 : index
    %102 = vector.load %arg4[%c0_120, %c7_121, %c0_122, %c0_123] : memref<1x10x8x128xf32, #tpu.memory_space<vmem>>, vector<1x1x8x128xf32>
    %103 = vector.shape_cast %102 : vector<1x1x8x128xf32> to vector<8x128xf32>
    %104 = vector.shape_cast %101 : vector<8x128xf32> to vector<1x1x8x128xf32>
    tpu.vector_store %arg4[%c0_120, %c7_121, %c0_122, %c0_123], %104 {strides = array<i32>} : memref<1x10x8x128xf32, #tpu.memory_space<vmem>>, vector<1x1x8x128xf32>,
    %c0_124 = arith.constant 0 : index
    %c7_125 = arith.constant 7 : index
    %c0_126 = arith.constant 0 : index
    %c0_127 = arith.constant 0 : index
    %105 = vector.load %arg5[%c0_124, %c7_125, %c0_126, %c0_127] : memref<1x10x8x128xf32, #tpu.memory_space<vmem>>, vector<1x1x8x128xf32>
    %106 = vector.shape_cast %105 : vector<1x1x8x128xf32> to vector<8x128xf32>
    %107 = arith.addf %106, %14#17 : vector<8x128xf32>
    %c0_128 = arith.constant 0 : index
    %c7_129 = arith.constant 7 : index
    %c0_130 = arith.constant 0 : index
    %c0_131 = arith.constant 0 : index
    %108 = vector.load %arg5[%c0_128, %c7_129, %c0_130, %c0_131] : memref<1x10x8x128xf32, #tpu.memory_space<vmem>>, vector<1x1x8x128xf32>
    %109 = vector.shape_cast %108 : vector<1x1x8x128xf32> to vector<8x128xf32>
    %110 = vector.shape_cast %107 : vector<8x128xf32> to vector<1x1x8x128xf32>
    tpu.vector_store %arg5[%c0_128, %c7_129, %c0_130, %c0_131], %110 {strides = array<i32>} : memref<1x10x8x128xf32, #tpu.memory_space<vmem>>, vector<1x1x8x128xf32>,
    %c0_132 = arith.constant 0 : index
    %c8 = arith.constant 8 : index
    %c0_133 = arith.constant 0 : index
    %c0_134 = arith.constant 0 : index
    %111 = vector.load %arg4[%c0_132, %c8, %c0_133, %c0_134] : memref<1x10x8x128xf32, #tpu.memory_space<vmem>>, vector<1x1x8x128xf32>
    %112 = vector.shape_cast %111 : vector<1x1x8x128xf32> to vector<8x128xf32>
    %113 = arith.addf %112, %14#8 : vector<8x128xf32>
    %c0_135 = arith.constant 0 : index
    %c8_136 = arith.constant 8 : index
    %c0_137 = arith.constant 0 : index
    %c0_138 = arith.constant 0 : index
    %114 = vector.load %arg4[%c0_135, %c8_136, %c0_137, %c0_138] : memref<1x10x8x128xf32, #tpu.memory_space<vmem>>, vector<1x1x8x128xf32>
    %115 = vector.shape_cast %114 : vector<1x1x8x128xf32> to vector<8x128xf32>
    %116 = vector.shape_cast %113 : vector<8x128xf32> to vector<1x1x8x128xf32>
    tpu.vector_store %arg4[%c0_135, %c8_136, %c0_137, %c0_138], %116 {strides = array<i32>} : memref<1x10x8x128xf32, #tpu.memory_space<vmem>>, vector<1x1x8x128xf32>,
    %c0_139 = arith.constant 0 : index
    %c8_140 = arith.constant 8 : index
    %c0_141 = arith.constant 0 : index
    %c0_142 = arith.constant 0 : index
    %117 = vector.load %arg5[%c0_139, %c8_140, %c0_141, %c0_142] : memref<1x10x8x128xf32, #tpu.memory_space<vmem>>, vector<1x1x8x128xf32>
    %118 = vector.shape_cast %117 : vector<1x1x8x128xf32> to vector<8x128xf32>
    %119 = arith.addf %118, %14#18 : vector<8x128xf32>
    %c0_143 = arith.constant 0 : index
    %c8_144 = arith.constant 8 : index
    %c0_145 = arith.constant 0 : index
    %c0_146 = arith.constant 0 : index
    %120 = vector.load %arg5[%c0_143, %c8_144, %c0_145, %c0_146] : memref<1x10x8x128xf32, #tpu.memory_space<vmem>>, vector<1x1x8x128xf32>
    %121 = vector.shape_cast %120 : vector<1x1x8x128xf32> to vector<8x128xf32>
    %122 = vector.shape_cast %119 : vector<8x128xf32> to vector<1x1x8x128xf32>
    tpu.vector_store %arg5[%c0_143, %c8_144, %c0_145, %c0_146], %122 {strides = array<i32>} : memref<1x10x8x128xf32, #tpu.memory_space<vmem>>, vector<1x1x8x128xf32>,
    %c0_147 = arith.constant 0 : index
    %c9 = arith.constant 9 : index
    %c0_148 = arith.constant 0 : index
    %c0_149 = arith.constant 0 : index
    %123 = vector.load %arg4[%c0_147, %c9, %c0_148, %c0_149] : memref<1x10x8x128xf32, #tpu.memory_space<vmem>>, vector<1x1x8x128xf32>
    %124 = vector.shape_cast %123 : vector<1x1x8x128xf32> to vector<8x128xf32>
    %125 = arith.addf %124, %14#9 : vector<8x128xf32>
    %c0_150 = arith.constant 0 : index
    %c9_151 = arith.constant 9 : index
    %c0_152 = arith.constant 0 : index
    %c0_153 = arith.constant 0 : index
    %126 = vector.load %arg4[%c0_150, %c9_151, %c0_152, %c0_153] : memref<1x10x8x128xf32, #tpu.memory_space<vmem>>, vector<1x1x8x128xf32>
    %127 = vector.shape_cast %126 : vector<1x1x8x128xf32> to vector<8x128xf32>
    %128 = vector.shape_cast %125 : vector<8x128xf32> to vector<1x1x8x128xf32>
    tpu.vector_store %arg4[%c0_150, %c9_151, %c0_152, %c0_153], %128 {strides = array<i32>} : memref<1x10x8x128xf32, #tpu.memory_space<vmem>>, vector<1x1x8x128xf32>,
    %c0_154 = arith.constant 0 : index
    %c9_155 = arith.constant 9 : index
    %c0_156 = arith.constant 0 : index
    %c0_157 = arith.constant 0 : index
    %129 = vector.load %arg5[%c0_154, %c9_155, %c0_156, %c0_157] : memref<1x10x8x128xf32, #tpu.memory_space<vmem>>, vector<1x1x8x128xf32>
    %130 = vector.shape_cast %129 : vector<1x1x8x128xf32> to vector<8x128xf32>
    %131 = arith.addf %130, %14#19 : vector<8x128xf32>
    %c0_158 = arith.constant 0 : index
    %c9_159 = arith.constant 9 : index
    %c0_160 = arith.constant 0 : index
    %c0_161 = arith.constant 0 : index
    %132 = vector.load %arg5[%c0_158, %c9_159, %c0_160, %c0_161] : memref<1x10x8x128xf32, #tpu.memory_space<vmem>>, vector<1x1x8x128xf32>
    %133 = vector.shape_cast %132 : vector<1x1x8x128xf32> to vector<8x128xf32>
    %134 = vector.shape_cast %131 : vector<8x128xf32> to vector<1x1x8x128xf32>
    tpu.vector_store %arg5[%c0_158, %c9_159, %c0_160, %c0_161], %134 {strides = array<i32>} : memref<1x10x8x128xf32, #tpu.memory_space<vmem>>, vector<1x1x8x128xf32>,
    return
  }
  func.func @transform_0(%arg0: i32, %arg1: i32) -> (i32, i32) {
    %c1_i32 = arith.constant 1 : i32
    %0 = arith.muli %arg0, %c1_i32 : i32
    %1 = arith.addi %0, %arg1 : i32
    %c0_i32 = arith.constant 0 : i32
    %c0_i32_0 = arith.constant 0 : i32
    return %1, %c0_i32 : i32, i32
  }
  func.func @transform_1(%arg0: i32, %arg1: i32) -> (i32, i32) {
    %c1_i32 = arith.constant 1 : i32
    %0 = arith.muli %arg0, %c1_i32 : i32
    %1 = arith.addi %0, %arg1 : i32
    %c0_i32 = arith.constant 0 : i32
    %c0_i32_0 = arith.constant 0 : i32
    return %1, %c0_i32 : i32, i32
  }
  func.func @transform_2(%arg0: i32, %arg1: i32) -> (i32, i32, i32, i32) {
    %c0_i32 = arith.constant 0 : i32
    %c0_i32_0 = arith.constant 0 : i32
    %c0_i32_1 = arith.constant 0 : i32
    %c0_i32_2 = arith.constant 0 : i32
    return %arg0, %c0_i32, %c0_i32_0, %c0_i32_1 : i32, i32, i32, i32
  }
  func.func @transform_3(%arg0: i32, %arg1: i32) -> (i32, i32, i32, i32) {
    %c0_i32 = arith.constant 0 : i32
    %c0_i32_0 = arith.constant 0 : i32
    %c0_i32_1 = arith.constant 0 : i32
    %c0_i32_2 = arith.constant 0 : i32
    return %arg0, %c0_i32, %c0_i32_0, %c0_i32_1 : i32, i32, i32, i32
  }
}

</mosaic_0001>

<llo_original>
// kernel: loss_fn.3
$region0: #{loss_fn.3}
  #allocation0 [shape = 'u32[]', space=smem, size = 0x4, offset = 0x4, fixed_abs, tag = 'smem constant byte address 0x4 - core index']
  #allocation1 [shape = 'u32[72,128]{1,0:T(1,128)}', space=vmem, size = 0x9000, scoped, tag = 'internal scratch']
  #allocation2 [shape = 'f32[3,1]{1,0:T(4,128)}', space=vmem, size = 0x800, scoped, tag = 'scratch operand']
  #allocation3 [shape = 'f32[3,1]{1,0:T(4,128)}', space=vmem, size = 0x800, scoped, tag = 'scratch operand']
  %s0 = inlined_call_operand.vmem [shape: f32[2,3,4], index: 0, kind: input, shape index: {}]
  %s1 = inlined_call_operand.vmem [shape: f32[4,256], index: 1, kind: input, shape index: {}]
  %s2 = inlined_call_operand.vmem [shape: f32[2,1,256], index: 2, kind: output, shape index: {0}]
  %s3 = inlined_call_operand.vmem [shape: s32[2,1,256], index: 3, kind: output, shape index: {1}]
  %s4 = inlined_call_operand.vmem [shape: s32[2,3,1], index: 4, kind: output, shape index: {2}]
  %5 = xla_tuple %s2, %s3, %s4
  %s6 = sld [smem:[#allocation0]]
  $region65: #{loss_fn.3} parent=0
    _
  %s8 = ssub.s32 1, %s6
  %s9 = scalar_select 0, %s8, %s6
  loop: start=0, step=1, limit=4
  $region2: #{loss_fn.3} parent=0 // loop_pre_header
    _
  $region3: #{loss_fn.3} parent=0 // loop_header
    %s11 = sphi 0, %s15
    %p12 = scmp.ge.s32.totalorder %s11, 4
    %s18 = sphi 0, %s30
    %s19 = sphi 0, %s26
    %s20 = sphi 0, %s18
    %s21 = sphi 0, %s19
    %s22 = sphi 0, %s20
    %s23 = sphi 0, %s21
    %s33 = sphi 0, %s35
    %s36 = sphi 0, %s33
    %s37 = sphi 0, %s36
    %s53 = sphi 0, %s37
    %s59 = sphi 0, %s61
    %s62 = sphi 0, %s59
    %s63 = sphi 0, %s62
    %s79 = sphi 0, %s63
    %s87 = sphi 0, %s89
    %s90 = sphi 0, %s87
    %s91 = sphi 0, %s90
    %s107 = sphi 0, %s91
    %s115 = sphi 0, %s117
    %s118 = sphi 0, %s115
    %s119 = sphi 0, %s118
    %s135 = sphi 0, %s119
    %s141 = sphi 0, %s143
    %s144 = sphi 0, %s141
    %s145 = sphi 0, %s144
    %s161 = sphi 0, %s145
  $region4: #{loss_fn.3} parent=0 // loop_header_branch
    %14 = sbr.rel (%p12) target = $region8
  $region5: #{loss_fn.3} parent=0 // loop_body
    %s16 = ssub.s32 %s11, 1
    %s17 = ssub.s32 %s11, 2
    %s24 = sadd.s32 1, %s19
    %p25 = scmp.ge.s32.totalorder %s24, 1
    %s26 = scalar_select %p25, 0, %s24
    %s27 = sadd.s32 1, %s18
    %s28 = scalar_select %p25, %s27, %s18
    %p29 = scmp.ge.s32.totalorder %s28, 2
    %s30 = scalar_select %p29, 0, %s28
    %s31 = ssub.s32 %s18, %s30
    %p32 = scmp.eq.s32.totalorder %s31, 0
    %s34 = sadd.s32 %s33, 1
    %s35 = scalar_select %p32, %s33, %s34
    %p38 = pneg %p32
    %p39 = scmp.eq.s32.totalorder %s11, 1
    %p40 = por %p38, %p39
    %p41 = scmp.ne.s32.totalorder %s33, %s36
    %p42 = scmp.eq.s32.totalorder %s11, 0
    %p43 = por %p41, %p42
    %p44 = scmp.ne.s32.totalorder %s33, %s36
    %p45 = scmp.eq.s32.totalorder %s16, 1
    %p46 = por %p44, %p45
    %p47 = scmp.ne.s32.totalorder %s36, %s37
    %p48 = scmp.eq.s32.totalorder %s16, 0
    %p49 = por %p47, %p48
    %p50 = scmp.ne.s32.totalorder %s36, %s37
    %p51 = scmp.eq.s32.totalorder %s17, 1
    %p52 = por %p50, %p51
    %p54 = scmp.ne.s32.totalorder %s37, %s53
    %p55 = scmp.eq.s32.totalorder %s17, 0
    %p56 = por %p54, %p55
    %s57 = ssub.s32 %s19, %s26
    %p58 = scmp.eq.s32.totalorder %s57, 0
    %s60 = sadd.s32 %s59, 1
    %s61 = scalar_select %p58, %s59, %s60
    %p64 = pneg %p58
    %p65 = scmp.eq.s32.totalorder %s11, 1
    %p66 = por %p64, %p65
    %p67 = scmp.ne.s32.totalorder %s59, %s62
    %p68 = scmp.eq.s32.totalorder %s11, 0
    %p69 = por %p67, %p68
    %p70 = scmp.ne.s32.totalorder %s59, %s62
    %p71 = scmp.eq.s32.totalorder %s16, 1
    %p72 = por %p70, %p71
    %p73 = scmp.ne.s32.totalorder %s62, %s63
    %p74 = scmp.eq.s32.totalorder %s16, 0
    %p75 = por %p73, %p74
    %p76 = scmp.ne.s32.totalorder %s62, %s63
    %p77 = scmp.eq.s32.totalorder %s17, 1
    %p78 = por %p76, %p77
    %p80 = scmp.ne.s32.totalorder %s63, %s79
    %p81 = scmp.eq.s32.totalorder %s17, 0
    %p82 = por %p80, %p81
    %s83 = ssub.s32 %s18, %s30
    %s84 = ssub.s32 %s19, %s26
    %s85 = sor.u32 %s83, %s84
    %p86 = scmp.eq.s32.totalorder %s85, 0
    %s88 = sadd.s32 %s87, 1
    %s89 = scalar_select %p86, %s87, %s88
    %p92 = pneg %p86
    %p93 = scmp.eq.s32.totalorder %s11, 1
    %p94 = por %p92, %p93
    %p95 = scmp.ne.s32.totalorder %s87, %s90
    %p96 = scmp.eq.s32.totalorder %s11, 0
    %p97 = por %p95, %p96
    %p98 = scmp.ne.s32.totalorder %s87, %s90
    %p99 = scmp.eq.s32.totalorder %s16, 1
    %p100 = por %p98, %p99
    %p101 = scmp.ne.s32.totalorder %s90, %s91
    %p102 = scmp.eq.s32.totalorder %s16, 0
    %p103 = por %p101, %p102
    %p104 = scmp.ne.s32.totalorder %s90, %s91
    %p105 = scmp.eq.s32.totalorder %s17, 1
    %p106 = por %p104, %p105
    %p108 = scmp.ne.s32.totalorder %s91, %s107
    %p109 = scmp.eq.s32.totalorder %s17, 0
    %p110 = por %p108, %p109
    %s111 = ssub.s32 %s18, %s30
    %s112 = ssub.s32 %s19, %s26
    %s113 = sor.u32 %s111, %s112
    %p114 = scmp.eq.s32.totalorder %s113, 0
    %s116 = sadd.s32 %s115, 1
    %s117 = scalar_select %p114, %s115, %s116
    %p120 = pneg %p114
    %p121 = scmp.eq.s32.totalorder %s11, 1
    %p122 = por %p120, %p121
    %p123 = scmp.ne.s32.totalorder %s115, %s118
    %p124 = scmp.eq.s32.totalorder %s11, 0
    %p125 = por %p123, %p124
    %p126 = scmp.ne.s32.totalorder %s115, %s118
    %p127 = scmp.eq.s32.totalorder %s16, 1
    %p128 = por %p126, %p127
    %p129 = scmp.ne.s32.totalorder %s118, %s119
    %p130 = scmp.eq.s32.totalorder %s16, 0
    %p131 = por %p129, %p130
    %p132 = scmp.ne.s32.totalorder %s118, %s119
    %p133 = scmp.eq.s32.totalorder %s17, 1
    %p134 = por %p132, %p133
    %p136 = scmp.ne.s32.totalorder %s119, %s135
    %p137 = scmp.eq.s32.totalorder %s17, 0
    %p138 = por %p136, %p137
    %s139 = ssub.s32 %s18, %s30
    %p140 = scmp.eq.s32.totalorder %s139, 0
    %s142 = sadd.s32 %s141, 1
    %s143 = scalar_select %p140, %s141, %s142
    %p146 = pneg %p140
    %p147 = scmp.eq.s32.totalorder %s11, 1
    %p148 = por %p146, %p147
    %p149 = scmp.ne.s32.totalorder %s141, %s144
    %p150 = scmp.eq.s32.totalorder %s11, 0
    %p151 = por %p149, %p150
    %p152 = scmp.ne.s32.totalorder %s141, %s144
    %p153 = scmp.eq.s32.totalorder %s16, 1
    %p154 = por %p152, %p153
    %p155 = scmp.ne.s32.totalorder %s144, %s145
    %p156 = scmp.eq.s32.totalorder %s16, 0
    %p157 = por %p155, %p156
    %p158 = scmp.ne.s32.totalorder %s144, %s145
    %p159 = scmp.eq.s32.totalorder %s17, 1
    %p160 = por %p158, %p159
    %p162 = scmp.ne.s32.totalorder %s145, %s161
    %p163 = scmp.eq.s32.totalorder %s17, 0
    %p164 = por %p162, %p163
    %p165 = scmp.le.s32.totalorder 1, %s11
    %p166 = scmp.lt.s32.totalorder %s11, 3
    %p167 = pnand %p165, %p166
    %p168 = pneg %p167
    // Predicated region
    $region9: #{loss_fn.3} parent=5 // pred_check
      _
    $region10: #{loss_fn.3} parent=5 // pred_check_branch
      %170 = sbr.rel (%p167) target = $region12
    $region11: #{loss_fn.3} parent=5 // pred_region
      %s171 = ssub.s32 %s11, 1
      // Predicated region
      $region13: #{loss_fn.3} parent=11 // pred_check
        %p172 = pneg %p75
      $region14: #{loss_fn.3} parent=11 // pred_check_branch
        %174 = sbr.rel (%p172) target = $region16
      $region15: #{loss_fn.3} parent=11 // pred_region
        %s175 = smul.u32 2, %s21
        %p176 = scmp.lt.s32.totalorder %s175, 1
        %s177 = scalar_select %p176, %s175, 1
        %s178 = smul.addr %s177, 4
        %s179 = scalar_lea.vmem %s1, %s178
        %s180 = smul.u32 2, %s21
      $region16: #{loss_fn.3} parent=11 // pred_fallthru
        _
    $region12: #{loss_fn.3} parent=5 // pred_fallthru
      _
    %p181 = scmp.lt.s32.totalorder %s11, 2
    // Predicated region
    $region17: #{loss_fn.3} parent=5 // pred_check
      %p182 = pneg %p181
    $region18: #{loss_fn.3} parent=5 // pred_check_branch
      %184 = sbr.rel (%p182) target = $region20
    $region19: #{loss_fn.3} parent=5 // pred_region
      // Predicated region
      $region21: #{loss_fn.3} parent=19 // pred_check
        %p185 = pneg %p43
      $region22: #{loss_fn.3} parent=19 // pred_check_branch
        %187 = sbr.rel (%p185) target = $region24
      $region23: #{loss_fn.3} parent=19 // pred_region
        %p188 = scmp.lt.s32.totalorder %s18, 1
        %s189 = scalar_select %p188, %s18, 1
        %s190 = smul.addr %s189, 4
        %s191 = scalar_lea.vmem %s0, %s190
      $region24: #{loss_fn.3} parent=19 // pred_fallthru
        _
    $region20: #{loss_fn.3} parent=5 // pred_fallthru
      _
    %p192 = scmp.le.s32.totalorder 1, %s11
    %p193 = scmp.lt.s32.totalorder %s11, 3
    %p194 = pnand %p192, %p193
    %p195 = pneg %p194
    // Predicated region
    $region25: #{loss_fn.3} parent=5 // pred_check
      _
    $region26: #{loss_fn.3} parent=5 // pred_check_branch
      %197 = sbr.rel (%p194) target = $region28
    $region27: #{loss_fn.3} parent=5 // pred_region
      %s198 = ssub.s32 %s11, 1
      %p199 = scmp.lt.s32.totalorder %s20, 1
      %s200 = scalar_select %p199, %s20, 1
      %s201 = smul.addr %s200, 4
      %s202 = scalar_lea.vmem %s0, %s201
      %p203 = pneg %p49
      %p204 = pneg %p46
      %s205 = smul.u32 2, %s21
      %p206 = scmp.lt.s32.totalorder %s205, 1
      %s207 = scalar_select %p206, %s205, 1
      %s208 = smul.addr %s207, 4
      %s209 = scalar_lea.vmem %s1, %s208
      %p210 = pneg %p75
      %p211 = pneg %p72
      %p212 = pneg %p103
      %p213 = pneg %p100
      %s214 = smul.u32 2, %s21
      %p215 = scmp.lt.s32.totalorder %s20, 1
      %s216 = scalar_select %p215, %s20, 1
      %p217 = scmp.lt.s32.totalorder %s214, 1
      %s218 = scalar_select %p217, %s214, 1
      %s219 = smul.addr %s216, 2
      %s220 = sadd.s32 %s218, %s219
      %s221 = scalar_lea.vmem %s2, %s220
      %p222 = pneg %p131
      %p223 = pneg %p128
      %s224 = smul.u32 2, %s21
      %p225 = scmp.lt.s32.totalorder %s20, 1
      %s226 = scalar_select %p225, %s20, 1
      %p227 = scmp.lt.s32.totalorder %s224, 1
      %s228 = scalar_select %p227, %s224, 1
      %s229 = smul.addr %s226, 2
      %s230 = sadd.s32 %s228, %s229
      %s231 = scalar_lea.vmem %s3, %s230
      %p232 = pneg %p157
      %p233 = pneg %p154
      %p234 = scmp.lt.s32.totalorder %s20, 1
      %s235 = scalar_select %p234, %s20, 1
      %s236 = smul.addr %s235, 4
      %s237 = scalar_lea.vmem %s4, %s236
      %p238 = scmp.lt.s32.totalorder %s20, 1
      %s239 = scalar_select %p238, %s20, 1
      %s240 = smul.addr %s239, 4
      %s241 = scalar_lea.vmem %s0, %s240
      %s242 = smul.u32 2, %s21
      %p243 = scmp.lt.s32.totalorder %s242, 1
      %s244 = scalar_select %p243, %s242, 1
      %s245 = smul.addr %s244, 4
      %s246 = scalar_lea.vmem %s1, %s245
      %s247 = smul.u32 2, %s21
      %s248 = smul.u32 2, %s21
      %p249 = scmp.lt.s32.totalorder %s20, 1
      %s250 = scalar_select %p249, %s20, 1
      %p251 = scmp.lt.s32.totalorder %s248, 1
      %s252 = scalar_select %p251, %s248, 1
      %s253 = smul.addr %s250, 2
      %s254 = sadd.s32 %s252, %s253
      %s255 = scalar_lea.vmem %s2, %s254
      %s256 = smul.u32 2, %s21
      %s257 = smul.u32 2, %s21
      %p258 = scmp.lt.s32.totalorder %s20, 1
      %s259 = scalar_select %p258, %s20, 1
      %p260 = scmp.lt.s32.totalorder %s257, 1
      %s261 = scalar_select %p260, %s257, 1
      %s262 = smul.addr %s259, 2
      %s263 = sadd.s32 %s261, %s262
      %s264 = scalar_lea.vmem %s3, %s263
      %s265 = smul.u32 2, %s21
      %p266 = scmp.lt.s32.totalorder %s20, 1
      %s267 = scalar_select %p266, %s20, 1
      %s268 = smul.addr %s267, 4
      %s269 = scalar_lea.vmem %s4, %s268
      %v270 = vld [vmem:[%s241] sm:$0x7]
      %v271 = vld [vmem:[%s246] ss:$4 sm:$0x3]
      %s272 = scalar_lea.vmem %s246, 1
      %v273 = vld [vmem:[%s272] ss:$4 sm:$0x3]
      %s274 = scalar_lea.vmem %s246, 2
      %v275 = vld [vmem:[%s274] ss:$4 sm:$0x3]
      %s276 = scalar_lea.vmem %s246, 3
      %v277 = vld [vmem:[%s276] ss:$4 sm:$0x3]
      %279 = vset.pattern.permute.xlu0 2
      %280 = vperm.xlu0 %279, %v270
      %v281 = vpop.permute.xlu0 %280
      %v284 = vperm.slane %v275, 0
      %v285 = vperm.slane %v275, 1
      %v288 = vmin.f32 %v281, %v284
      %v289 = vmin.f32 %v281, %v285
      %290 = vset.pattern.permute.xlu0 0
      %291 = vperm.xlu0 %290, %v270
      %v292 = vpop.permute.xlu0 %291
      %v295 = vperm.slane %v271, 0
      %v296 = vperm.slane %v271, 1
      %v299 = vmax.f32 %v292, %v295
      %v300 = vmax.f32 %v292, %v296
      %v301 = vsub.f32 %v288, %v299
      %v302 = vsub.f32 %v289, %v300
      %v303 = vmax.f32 %v301, 0.0
      %v304 = vmax.f32 %v302, 0.0
      %305 = vset.pattern.permute.xlu0 3
      %306 = vperm.xlu0 %305, %v270
      %v307 = vpop.permute.xlu0 %306
      %v310 = vperm.slane %v277, 0
      %v311 = vperm.slane %v277, 1
      %v314 = vmin.f32 %v307, %v310
      %v315 = vmin.f32 %v307, %v311
      %316 = vset.pattern.permute.xlu0 1
      %317 = vperm.xlu0 %316, %v270
      %v318 = vpop.permute.xlu0 %317
      %v321 = vperm.slane %v273, 0
      %v322 = vperm.slane %v273, 1
      %v325 = vmax.f32 %v318, %v321
      %v326 = vmax.f32 %v318, %v322
      %v327 = vsub.f32 %v314, %v325
      %v328 = vsub.f32 %v315, %v326
      %v329 = vmax.f32 %v327, 0.0
      %v330 = vmax.f32 %v328, 0.0
      %v331 = vmul.f32 %v303, %v329
      %v332 = vmul.f32 %v304, %v330
      %333 = vrot.lane.b32.xlu0 %v270, 2
      %v334 = vpop.permute.xlu0 %333
      %v336 = vsub.f32 %v270, %v334
      %338 = vrot.lane.b32.xlu0 %v336, 127
      %v339 = vpop.permute.xlu0 %338
      %v341 = vmul.f32 %v336, %v339
      %v342 = vsub.f32 %v275, %v271
      %v343 = vsub.f32 %v277, %v273
      %v344 = vmul.f32 %v342, %v343
      %346 = vset.pattern.permute.xlu0 2
      %347 = vperm.xlu0 %346, %v341
      %v348 = vpop.permute.xlu0 %347
      %v351 = vperm.slane %v344, 0
      %v352 = vperm.slane %v344, 1
      %v355 = vadd.f32 %v348, %v351
      %v356 = vadd.f32 %v348, %v352
      %v357 = vsub.f32 %v355, %v331
      %v358 = vsub.f32 %v356, %v332
      %v359 = vmax.f32 %v357, 1e-12
      %v360 = vmax.f32 %v358, 1e-12
      %v361 = vrcp.pop %v359
      %v362 = vmul.f32 %v359, %v361
      %v363 = vsub.f32 1.0, %v362
      %v364 = vmul.f32 %v361, %v363
      %v365 = vadd.f32 %v361, %v364
      %vm366 = vweird.f32 %v359
      %vm367 = vweird.f32 %v361
      %vm368 = vmor %vm366, %vm367
      %v369 = vsel %vm368, %v361, %v365
      %v370 = vand.u32 2147483647, %v359
      %vm371 = vcmp.eq.f32.partialorder %v370, 8.507059e+37
      %v372 = vand.u32 %v359, 2147483648
      %v373 = vor.u32 1.1754944e-38, %v372
      %v374 = vsel %vm371, %v373, %v369
      %v375 = vmul.f32 %v331, %v374
      %v376 = vrcp.pop %v360
      %v377 = vmul.f32 %v360, %v376
      %v378 = vsub.f32 1.0, %v377
      %v379 = vmul.f32 %v376, %v378
      %v380 = vadd.f32 %v376, %v379
      %vm381 = vweird.f32 %v360
      %vm382 = vweird.f32 %v376
      %vm383 = vmor %vm381, %vm382
      %v384 = vsel %vm383, %v376, %v380
      %v385 = vand.u32 2147483647, %v360
      %vm386 = vcmp.eq.f32.partialorder %v385, 8.507059e+37
      %v387 = vand.u32 %v360, 2147483648
      %v388 = vor.u32 1.1754944e-38, %v387
      %v389 = vsel %vm386, %v388, %v384
      %v390 = vmul.f32 %v332, %v389
      %vm391 = vcmask 1042432
      %v392 = vsel %vm391, %v375, -inf
      %v393 = vrot.slane %v392, 4
      %v394 = vmax.f32 %v392, %v393
      %v395 = vrot.slane %v394, 2
      %v396 = vmax.f32 %v394, %v395
      %v397 = vrot.slane %v396, 1
      %v398 = vmax.f32 %v396, %v397
      %v399 = vsel %vm391, %v390, -inf
      %v400 = vrot.slane %v399, 4
      %v401 = vmax.f32 %v399, %v400
      %v402 = vrot.slane %v401, 2
      %v403 = vmax.f32 %v401, %v402
      %v404 = vrot.slane %v403, 1
      %v405 = vmax.f32 %v403, %v404
      %v406 = vlaneseq
      %v407 = vshrl.u32 %v406, 7
      %v408 = vcvt.s32.f32 %v407
      %vm409 = vcmp.ge.f32.partialorder %v375, %v398
      %vm410 = vcmp.ge.f32.partialorder %v390, %v405
      %v411 = vsel %vm409, %v408, 3.0
      %v412 = vsel %vm410, %v408, 3.0
      %v413 = vsel %vm391, %v411, inf
      %v414 = vrot.slane %v413, 4
      %v415 = vmin.f32 %v413, %v414
      %v416 = vrot.slane %v415, 2
      %v417 = vmin.f32 %v415, %v416
      %v418 = vrot.slane %v417, 1
      %v419 = vmin.f32 %v417, %v418
      %v420 = vsel %vm391, %v412, inf
      %v421 = vrot.slane %v420, 4
      %v422 = vmin.f32 %v420, %v421
      %v423 = vrot.slane %v422, 2
      %v424 = vmin.f32 %v422, %v423
      %v425 = vrot.slane %v424, 1
      %v426 = vmin.f32 %v424, %v425
      %v429 = vrot.slane %v405, 7
      %vm430 = vcmask 1040384
      %v431 = vsel %vm430, %v398, %v429
      %v433 = vlaneseq
      %vm434 = vcmp.ge.s32.totalorder %v433, 0
      %vm435 = vcmp.lt.s32.totalorder %v433, 256
      %vm436 = vmand %vm434, %vm435
      %437 = vst.msk [vmem:[%s255] sm:$0x3] %vm436, %v431
      %v438 = vcvt.f32.s32.to.zero.pseudo %v419
      %v439 = vcvt.f32.s32.to.zero.pseudo %v426
      %v440 = vrot.slane %v439, 7
      %v441 = vsel %vm430, %v438, %v440
      %442 = vst.msk [vmem:[%s264] sm:$0x3] %vm436, %v441
      %p443 = scmp.eq.s32.totalorder %s21, 0
      // Predicated region
      $region29: #{loss_fn.3} parent=27 // pred_check
        %p444 = pneg %p443
      $region30: #{loss_fn.3} parent=27 // pred_check_branch
        %446 = sbr.rel (%p444) target = $region32
      $region31: #{loss_fn.3} parent=27 // pred_region
        %vm447 = vcmask 2048
        %448 = vst.msk [vmem:[#allocation2] sm:$0x7] %vm447, -1.0
        %449 = vst.msk [vmem:[#allocation3] sm:$0x7] %vm447, 0.0
      $region32: #{loss_fn.3} parent=27 // pred_fallthru
        _
      %v450 = vmax.f32 %v392, %v399
      %451 = vmax.xlane.f32.xlu0 %v450
      %v452 = vpop.xlane.xlu0 %451
      %v453 = vlaneseq
      %v454 = vand.u32 %v453, 127
      %v455 = vadd.s32 %v454, 128
      %v456 = vcvt.s32.f32 %v454
      %v457 = vcvt.s32.f32 %v455
      %vm458 = vcmp.ge.f32.partialorder %v375, %v452
      %vm459 = vcmp.ge.f32.partialorder %v390, %v452
      %v460 = vsel %vm458, %v456, 256.0
      %v461 = vsel %vm459, %v457, 256.0
      %v462 = vsel %vm391, %v460, inf
      %v463 = vsel %vm391, %v461, inf
      %v464 = vmin.f32 %v462, %v463
      %465 = vmin.xlane.f32.xlu0 %v464
      %v466 = vpop.xlane.xlu0 %465
      %s467 = smul.u32 %s21, 256
      %s468 = scvt.s32.f32 %s467
      %v469 = vstv %s468
      %v470 = vadd.f32 %v466, %v469
      %v471 = vld [vmem:[#allocation2] sm:$0x7]
      %vm472 = vcmp.gt.f32.partialorder %v452, %v471
      %v473 = vsel %vm472, %v452, %v471
      %vm474 = vcmask 2048
      %475 = vst.msk [vmem:[#allocation2] sm:$0x7] %vm474, %v473
      %v476 = vld [vmem:[#allocation3] sm:$0x7]
      %v477 = vsel %vm472, %v470, %v476
      %478 = vst.msk [vmem:[#allocation3] sm:$0x7] %vm474, %v477
      // Predicated region
      $region33: #{loss_fn.3} parent=27 // pred_check
        %p479 = pneg %p443
      $region34: #{loss_fn.3} parent=27 // pred_check_branch
        %481 = sbr.rel (%p479) target = $region36
      $region35: #{loss_fn.3} parent=27 // pred_region
        %v482 = vld [vmem:[#allocation3] sm:$0x7]
        %v483 = vcvt.f32.s32.to.zero.pseudo %v482
        %484 = vst.msk [vmem:[%s269] sm:$0x7] %vm474, %v483
      $region36: #{loss_fn.3} parent=27 // pred_fallthru
        _
      %s485 = smul.u32 2, %s21
      %p486 = scmp.lt.s32.totalorder %s20, 1
      %s487 = scalar_select %p486, %s20, 1
      %p488 = scmp.lt.s32.totalorder %s485, 1
      %s489 = scalar_select %p488, %s485, 1
      %s490 = smul.addr %s487, 2
      %s491 = sadd.s32 %s489, %s490
      %s492 = scalar_lea.vmem %s2, %s491
      %s493 = smul.u32 2, %s21
      %p494 = scmp.lt.s32.totalorder %s20, 1
      %s495 = scalar_select %p494, %s20, 1
      %p496 = scmp.lt.s32.totalorder %s493, 1
      %s497 = scalar_select %p496, %s493, 1
      %s498 = smul.addr %s495, 2
      %s499 = sadd.s32 %s497, %s498
      %s500 = scalar_lea.vmem %s3, %s499
      %p501 = scmp.lt.s32.totalorder %s20, 1
      %s502 = scalar_select %p501, %s20, 1
      %s503 = smul.addr %s502, 4
      %s504 = scalar_lea.vmem %s4, %s503
      // Predicated region
      $region37: #{loss_fn.3} parent=27 // pred_check
        %p505 = pneg %p100
      $region38: #{loss_fn.3} parent=27 // pred_check_branch
        %507 = sbr.rel (%p505) target = $region40
      $region39: #{loss_fn.3} parent=27 // pred_region
        %s508 = smul.u32 2, %s21
      $region40: #{loss_fn.3} parent=27 // pred_fallthru
        _
      // Predicated region
      $region41: #{loss_fn.3} parent=27 // pred_check
        %p509 = pneg %p128
      $region42: #{loss_fn.3} parent=27 // pred_check_branch
        %511 = sbr.rel (%p509) target = $region44
      $region43: #{loss_fn.3} parent=27 // pred_region
        %s512 = smul.u32 2, %s21
      $region44: #{loss_fn.3} parent=27 // pred_fallthru
        _
      // Predicated region
      $region45: #{loss_fn.3} parent=27 // pred_check
        %p513 = pneg %p154
      $region46: #{loss_fn.3} parent=27 // pred_check_branch
        %515 = sbr.rel (%p513) target = $region48
      $region47: #{loss_fn.3} parent=27 // pred_region
        _
      $region48: #{loss_fn.3} parent=27 // pred_fallthru
        _
    $region28: #{loss_fn.3} parent=5 // pred_fallthru
      _
    %p516 = scmp.le.s32.totalorder 2, %s11
    // Predicated region
    $region49: #{loss_fn.3} parent=5 // pred_check
      %p517 = pneg %p516
    $region50: #{loss_fn.3} parent=5 // pred_check_branch
      %519 = sbr.rel (%p517) target = $region52
    $region51: #{loss_fn.3} parent=5 // pred_region
      %s520 = ssub.s32 %s11, 2
      // Predicated region
      $region53: #{loss_fn.3} parent=51 // pred_check
        %p521 = pneg %p106
      $region54: #{loss_fn.3} parent=51 // pred_check_branch
        %523 = sbr.rel (%p521) target = $region56
      $region55: #{loss_fn.3} parent=51 // pred_region
        %s524 = smul.u32 2, %s23
        %p525 = scmp.lt.s32.totalorder %s22, 1
        %s526 = scalar_select %p525, %s22, 1
        %p527 = scmp.lt.s32.totalorder %s524, 1
        %s528 = scalar_select %p527, %s524, 1
        %s529 = smul.addr %s526, 2
        %s530 = sadd.s32 %s528, %s529
        %s531 = scalar_lea.vmem %s2, %s530
      $region56: #{loss_fn.3} parent=51 // pred_fallthru
        _
      // Predicated region
      $region57: #{loss_fn.3} parent=51 // pred_check
        %p532 = pneg %p134
      $region58: #{loss_fn.3} parent=51 // pred_check_branch
        %534 = sbr.rel (%p532) target = $region60
      $region59: #{loss_fn.3} parent=51 // pred_region
        %s535 = smul.u32 2, %s23
        %p536 = scmp.lt.s32.totalorder %s22, 1
        %s537 = scalar_select %p536, %s22, 1
        %p538 = scmp.lt.s32.totalorder %s535, 1
        %s539 = scalar_select %p538, %s535, 1
        %s540 = smul.addr %s537, 2
        %s541 = sadd.s32 %s539, %s540
        %s542 = scalar_lea.vmem %s3, %s541
      $region60: #{loss_fn.3} parent=51 // pred_fallthru
        _
      // Predicated region
      $region61: #{loss_fn.3} parent=51 // pred_check
        %p543 = pneg %p160
      $region62: #{loss_fn.3} parent=51 // pred_check_branch
        %545 = sbr.rel (%p543) target = $region64
      $region63: #{loss_fn.3} parent=51 // pred_region
        %p546 = scmp.lt.s32.totalorder %s22, 1
        %s547 = scalar_select %p546, %s22, 1
        %s548 = smul.addr %s547, 4
        %s549 = scalar_lea.vmem %s4, %s548
      $region64: #{loss_fn.3} parent=51 // pred_fallthru
        _
    $region52: #{loss_fn.3} parent=5 // pred_fallthru
      _
  $region6: #{loss_fn.3} parent=0 // loop_footer
    %s15 = sadd.s32 1, %s11
  $region7: #{loss_fn.3} parent=0 // loop_footer_branch
    %10 = sbr.rel target = $region3
  $region8: #{loss_fn.3} parent=0 // loop_exit
    _

// kernel: loss_fn.4
$region0: #{loss_fn.4}
  #allocation0 [shape = 'u32[]', space=smem, size = 0x4, offset = 0x4, fixed_abs, tag = 'smem constant byte address 0x4 - core index']
  #allocation1 [shape = 'u32[72,128]{1,0:T(1,128)}', space=vmem, size = 0x9000, scoped, tag = 'internal scratch']
  %s0 = inlined_call_operand.vmem [shape: f32[32,128], index: 0, kind: input, shape index: {}]
  %s1 = inlined_call_operand.vmem [shape: f32[32,128], index: 1, kind: input, shape index: {}]
  %s2 = inlined_call_operand.vmem [shape: f32[1,10,8,128], index: 2, kind: output, shape index: {0}]
  %s3 = inlined_call_operand.vmem [shape: f32[1,10,8,128], index: 3, kind: output, shape index: {1}]
  %4 = xla_tuple %s2, %s3
  %s5 = sld [smem:[#allocation0]]
  $region37: #{loss_fn.4} parent=0
    _
  %s7 = ssub.s32 1, %s5
  %s8 = scalar_select 0, %s7, %s5
  // Predicated region
  $region2: #{loss_fn.4} parent=0 // pred_check
    _
  $region3: #{loss_fn.4} parent=0 // pred_check_branch
    %10 = sbr.rel (0) target = $region5
  $region4: #{loss_fn.4} parent=0 // pred_region
    %s11 = sadd.s32 0, 0
    %s12 = smul.u32 4, %s11
    %p13 = scmp.lt.s32.totalorder %s12, 3
    %s14 = scalar_select %p13, %s12, 3
    %s15 = smul.addr %s14, 8
    %s16 = scalar_lea.vmem %s0, %s15
    %s17 = sadd.s32 0, 0
    %s18 = smul.u32 4, %s17
  $region5: #{loss_fn.4} parent=0 // pred_fallthru
    _
  // Predicated region
  $region6: #{loss_fn.4} parent=0 // pred_check
    _
  $region7: #{loss_fn.4} parent=0 // pred_check_branch
    %20 = sbr.rel (0) target = $region9
  $region8: #{loss_fn.4} parent=0 // pred_region
    %s21 = sadd.s32 0, 0
    %s22 = smul.u32 4, %s21
    %p23 = scmp.lt.s32.totalorder %s22, 3
    %s24 = scalar_select %p23, %s22, 3
    %s25 = smul.addr %s24, 8
    %s26 = scalar_lea.vmem %s1, %s25
    %s27 = sadd.s32 0, 0
    %s28 = smul.u32 4, %s27
  $region9: #{loss_fn.4} parent=0 // pred_fallthru
    _
  %s29 = sadd.s32 0, 0
  %s30 = smul.u32 4, %s29
  %p31 = scmp.lt.s32.totalorder %s30, 3
  %s32 = scalar_select %p31, %s30, 3
  %s33 = smul.addr %s32, 8
  %s34 = scalar_lea.vmem %s0, %s33
  %s35 = sadd.s32 0, 0
  %s36 = smul.u32 4, %s35
  %p37 = scmp.lt.s32.totalorder %s36, 3
  %s38 = scalar_select %p37, %s36, 3
  %s39 = smul.addr %s38, 8
  %s40 = scalar_lea.vmem %s1, %s39
  %s41 = sadd.s32 0, 0
  %s42 = smul.u32 4, %s41
  %p43 = scmp.lt.s32.totalorder %s42, 3
  %s44 = scalar_select %p43, %s42, 3
  %s45 = smul.addr %s44, 8
  %s46 = scalar_lea.vmem %s0, %s45
  %s47 = sadd.s32 0, 0
  %s48 = smul.u32 4, %s47
  %s49 = sadd.s32 0, 0
  %s50 = smul.u32 4, %s49
  %p51 = scmp.lt.s32.totalorder %s50, 3
  %s52 = scalar_select %p51, %s50, 3
  %s53 = smul.addr %s52, 8
  %s54 = scalar_lea.vmem %s1, %s53
  %s55 = sadd.s32 0, 0
  %s56 = smul.u32 4, %s55
  %p57 = scmp.eq.s32.totalorder 0, 0
  // Predicated region
  $region10: #{loss_fn.4} parent=0 // pred_check
    %p58 = pneg %p57
  $region11: #{loss_fn.4} parent=0 // pred_check_branch
    %60 = sbr.rel (%p58) target = $region13
  $region12: #{loss_fn.4} parent=0 // pred_region
    %61 = vst [vmem:[%s2] sm:$0xff] 0.0
    %62 = vst [vmem:[%s2 + $0x8] sm:$0xff] 0.0
    %63 = vst [vmem:[%s2 + $0x10] sm:$0xff] 0.0
    %64 = vst [vmem:[%s2 + $0x18] sm:$0xff] 0.0
    %65 = vst [vmem:[%s2 + $0x20] sm:$0xff] 0.0
    %66 = vst [vmem:[%s2 + $0x28] sm:$0xff] 0.0
    %67 = vst [vmem:[%s2 + $0x30] sm:$0xff] 0.0
    %68 = vst [vmem:[%s2 + $0x38] sm:$0xff] 0.0
    %69 = vst [vmem:[%s2 + $0x40] sm:$0xff] 0.0
    %70 = vst [vmem:[%s2 + $0x48] sm:$0xff] 0.0
    %71 = vst [vmem:[%s3] sm:$0xff] 0.0
    %72 = vst [vmem:[%s3 + $0x8] sm:$0xff] 0.0
    %73 = vst [vmem:[%s3 + $0x10] sm:$0xff] 0.0
    %74 = vst [vmem:[%s3 + $0x18] sm:$0xff] 0.0
    %75 = vst [vmem:[%s3 + $0x20] sm:$0xff] 0.0
    %76 = vst [vmem:[%s3 + $0x28] sm:$0xff] 0.0
    %77 = vst [vmem:[%s3 + $0x30] sm:$0xff] 0.0
    %78 = vst [vmem:[%s3 + $0x38] sm:$0xff] 0.0
    %79 = vst [vmem:[%s3 + $0x40] sm:$0xff] 0.0
    %80 = vst [vmem:[%s3 + $0x48] sm:$0xff] 0.0
  $region13: #{loss_fn.4} parent=0 // pred_fallthru
    _
  loop: start=0, step=1, limit=2
  $region14: #{loss_fn.4} parent=0 // loop_pre_header
    _
  $region15: #{loss_fn.4} parent=0 // loop_header
    %s82 = sphi 0, %s86
    %p83 = scmp.ge.s32.totalorder %s82, 2
    %v87 = vphi 0.0, %v181
    %v88 = vphi 0.0, %v191
    %v89 = vphi 0.0, %v201
    %v90 = vphi 0.0, %v211
    %v91 = vphi 0.0, %v221
    %v92 = vphi 0.0, %v231
    %v93 = vphi 0.0, %v241
    %v94 = vphi 0.0, %v251
    %v95 = vphi 0.0, %v261
    %v96 = vphi 0.0, %v271
    %v97 = vphi 0.0, %v183
    %v98 = vphi 0.0, %v193
    %v99 = vphi 0.0, %v203
    %v100 = vphi 0.0, %v213
    %v101 = vphi 0.0, %v223
    %v102 = vphi 0.0, %v233
    %v103 = vphi 0.0, %v243
    %v104 = vphi 0.0, %v253
    %v105 = vphi 0.0, %v263
    %v106 = vphi 0.0, %v273
  $region16: #{loss_fn.4} parent=0 // loop_header_branch
    %85 = sbr.rel (%p83) target = $region20
  $region17: #{loss_fn.4} parent=0 // loop_body
    %s107 = smul.u32 %s82, 16
    %s108 = scalar_lea.vmem %s46, %s107
    %v109 = vld [vmem:[%s108] sm:$0xff]
    %v110 = vld [vmem:[%s108 + $0x8] sm:$0xff]
    %s111 = scalar_lea.vmem %s54, %s107
    %v112 = vld [vmem:[%s111] sm:$0xff]
    %v113 = vld [vmem:[%s111 + $0x8] sm:$0xff]
    %v114 = vsub.f32 %v109, %v112
    %v115 = vsub.f32 %v110, %v113
    %v116 = vmul.f32 %v114, %v114
    %v117 = vmul.f32 %v115, %v115
    %v118 = vadd.f32 %v116, 0.0004
    %v119 = vadd.f32 %v117, 0.0004
    %v120 = vrsqrt.pop %v118
    %v121 = vmul.f32 %v120, %v118
    %v122 = vmul.f32 %v121, %v120
    %v123 = vmul.f32 0.5, %v122
    %v124 = vsub.f32 1.5, %v123
    %v125 = vmul.f32 %v120, %v124
    %v126 = vmul.f32 %v118, %v125
    %vm127 = vcmp.eq.f32.partialorder %v118, inf
    %v128 = vsel %vm127, %v118, %v126
    %vm129 = vcmp.eq.f32.partialorder %v118, 0.0
    %v130 = vand.u32 %v118, 2147483648
    %v131 = vsel %vm129, %v130, %v128
    %v132 = vrsqrt.pop %v119
    %v133 = vmul.f32 %v132, %v119
    %v134 = vmul.f32 %v133, %v132
    %v135 = vmul.f32 0.5, %v134
    %v136 = vsub.f32 1.5, %v135
    %v137 = vmul.f32 %v132, %v136
    %v138 = vmul.f32 %v119, %v137
    %vm139 = vcmp.eq.f32.partialorder %v119, inf
    %v140 = vsel %vm139, %v119, %v138
    %vm141 = vcmp.eq.f32.partialorder %v119, 0.0
    %v142 = vand.u32 %v119, 2147483648
    %v143 = vsel %vm141, %v142, %v140
    %v144 = vsub.f32 %v131, 0.02
    %v145 = vsub.f32 %v143, 0.02
    %v146 = vand.u32 2147483647, %v114
    %v147 = vand.u32 2147483647, %v115
    %v148 = vrcp.pop %v131
    %v149 = vrcp.pop %v143
    %v150 = vmul.f32 %v146, %v148
    %v151 = vmul.f32 %v147, %v149
    %vm152 = vcmp.ge.f32.partialorder %v150, 0.0
    %vm153 = vcmp.ge.f32.partialorder %v151, 0.0
    %vm154 = vcmp.ge.f32.partialorder %v150, 0.1
    %vm155 = vcmp.ge.f32.partialorder %v151, 0.1
    %vm156 = vcmp.ge.f32.partialorder %v150, 0.2
    %vm157 = vcmp.ge.f32.partialorder %v151, 0.2
    %vm158 = vcmp.ge.f32.partialorder %v150, 0.3
    %vm159 = vcmp.ge.f32.partialorder %v151, 0.3
    %vm160 = vcmp.ge.f32.partialorder %v150, 0.4
    %vm161 = vcmp.ge.f32.partialorder %v151, 0.4
    %vm162 = vcmp.ge.f32.partialorder %v150, 0.5
    %vm163 = vcmp.ge.f32.partialorder %v151, 0.5
    %vm164 = vcmp.ge.f32.partialorder %v150, 0.6
    %vm165 = vcmp.ge.f32.partialorder %v151, 0.6
    %vm166 = vcmp.ge.f32.partialorder %v150, 0.7
    %vm167 = vcmp.ge.f32.partialorder %v151, 0.7
    %vm168 = vcmp.ge.f32.partialorder %v150, 0.8
    %vm169 = vcmp.ge.f32.partialorder %v151, 0.8
    %vm170 = vcmp.ge.f32.partialorder %v150, 0.9
    %vm171 = vcmp.ge.f32.partialorder %v151, 0.9
    %vm172 = vcmp.ge.f32.partialorder %v150, 1000.0
    %vm173 = vcmp.ge.f32.partialorder %v151, 1000.0
    %vm174 = vmxor %vm152, %vm154
    %vm175 = vmxor %vm153, %vm155
    %v176 = vsel %vm174, 1.0, 0.0
    %v177 = vsel %vm175, 1.0, 0.0
    %v178 = vsel %vm174, %v144, 0.0
    %v179 = vsel %vm175, %v145, 0.0
    %v180 = vadd.f32 %v87, %v176
    %v181 = vadd.f32 %v180, %v177
    %v182 = vadd.f32 %v97, %v178
    %v183 = vadd.f32 %v182, %v179
    %vm184 = vmxor %vm154, %vm156
    %vm185 = vmxor %vm155, %vm157
    %v186 = vsel %vm184, 1.0, 0.0
    %v187 = vsel %vm185, 1.0, 0.0
    %v188 = vsel %vm184, %v144, 0.0
    %v189 = vsel %vm185, %v145, 0.0
    %v190 = vadd.f32 %v88, %v186
    %v191 = vadd.f32 %v190, %v187
    %v192 = vadd.f32 %v98, %v188
    %v193 = vadd.f32 %v192, %v189
    %vm194 = vmxor %vm156, %vm158
    %vm195 = vmxor %vm157, %vm159
    %v196 = vsel %vm194, 1.0, 0.0
    %v197 = vsel %vm195, 1.0, 0.0
    %v198 = vsel %vm194, %v144, 0.0
    %v199 = vsel %vm195, %v145, 0.0
    %v200 = vadd.f32 %v89, %v196
    %v201 = vadd.f32 %v200, %v197
    %v202 = vadd.f32 %v99, %v198
    %v203 = vadd.f32 %v202, %v199
    %vm204 = vmxor %vm158, %vm160
    %vm205 = vmxor %vm159, %vm161
    %v206 = vsel %vm204, 1.0, 0.0
    %v207 = vsel %vm205, 1.0, 0.0
    %v208 = vsel %vm204, %v144, 0.0
    %v209 = vsel %vm205, %v145, 0.0
    %v210 = vadd.f32 %v90, %v206
    %v211 = vadd.f32 %v210, %v207
    %v212 = vadd.f32 %v100, %v208
    %v213 = vadd.f32 %v212, %v209
    %vm214 = vmxor %vm160, %vm162
    %vm215 = vmxor %vm161, %vm163
    %v216 = vsel %vm214, 1.0, 0.0
    %v217 = vsel %vm215, 1.0, 0.0
    %v218 = vsel %vm214, %v144, 0.0
    %v219 = vsel %vm215, %v145, 0.0
    %v220 = vadd.f32 %v91, %v216
    %v221 = vadd.f32 %v220, %v217
    %v222 = vadd.f32 %v101, %v218
    %v223 = vadd.f32 %v222, %v219
    %vm224 = vmxor %vm162, %vm164
    %vm225 = vmxor %vm163, %vm165
    %v226 = vsel %vm224, 1.0, 0.0
    %v227 = vsel %vm225, 1.0, 0.0
    %v228 = vsel %vm224, %v144, 0.0
    %v229 = vsel %vm225, %v145, 0.0
    %v230 = vadd.f32 %v92, %v226
    %v231 = vadd.f32 %v230, %v227
    %v232 = vadd.f32 %v102, %v228
    %v233 = vadd.f32 %v232, %v229
    %vm234 = vmxor %vm164, %vm166
    %vm235 = vmxor %vm165, %vm167
    %v236 = vsel %vm234, 1.0, 0.0
    %v237 = vsel %vm235, 1.0, 0.0
    %v238 = vsel %vm234, %v144, 0.0
    %v239 = vsel %vm235, %v145, 0.0
    %v240 = vadd.f32 %v93, %v236
    %v241 = vadd.f32 %v240, %v237
    %v242 = vadd.f32 %v103, %v238
    %v243 = vadd.f32 %v242, %v239
    %vm244 = vmxor %vm166, %vm168
    %vm245 = vmxor %vm167, %vm169
    %v246 = vsel %vm244, 1.0, 0.0
    %v247 = vsel %vm245, 1.0, 0.0
    %v248 = vsel %vm244, %v144, 0.0
    %v249 = vsel %vm245, %v145, 0.0
    %v250 = vadd.f32 %v94, %v246
    %v251 = vadd.f32 %v250, %v247
    %v252 = vadd.f32 %v104, %v248
    %v253 = vadd.f32 %v252, %v249
    %vm254 = vmxor %vm168, %vm170
    %vm255 = vmxor %vm169, %vm171
    %v256 = vsel %vm254, 1.0, 0.0
    %v257 = vsel %vm255, 1.0, 0.0
    %v258 = vsel %vm254, %v144, 0.0
    %v259 = vsel %vm255, %v145, 0.0
    %v260 = vadd.f32 %v95, %v256
    %v261 = vadd.f32 %v260, %v257
    %v262 = vadd.f32 %v105, %v258
    %v263 = vadd.f32 %v262, %v259
    %vm264 = vmxor %vm170, %vm172
    %vm265 = vmxor %vm171, %vm173
    %v266 = vsel %vm264, 1.0, 0.0
    %v267 = vsel %vm265, 1.0, 0.0
    %v268 = vsel %vm264, %v144, 0.0
    %v269 = vsel %vm265, %v145, 0.0
    %v270 = vadd.f32 %v96, %v266
    %v271 = vadd.f32 %v270, %v267
    %v272 = vadd.f32 %v106, %v268
    %v273 = vadd.f32 %v272, %v269
  $region18: #{loss_fn.4} parent=0 // loop_footer
    %s86 = sadd.s32 1, %s82
  $region19: #{loss_fn.4} parent=0 // loop_footer_branch
    %81 = sbr.rel target = $region15
  $region20: #{loss_fn.4} parent=0 // loop_exit
    _
  %v274 = vld [vmem:[%s2] sm:$0xff]
  %v275 = vadd.f32 %v274, %v87
  %276 = vst [vmem:[%s2] sm:$0xff] %v275
  %v277 = vld [vmem:[%s3] sm:$0xff]
  %v278 = vadd.f32 %v277, %v97
  %279 = vst [vmem:[%s3] sm:$0xff] %v278
  %s280 = scalar_lea.vmem %s2, 8
  %v281 = vld [vmem:[%s280] sm:$0xff]
  %v282 = vadd.f32 %v281, %v88
  %283 = vst [vmem:[%s280] sm:$0xff] %v282
  %s284 = scalar_lea.vmem %s3, 8
  %v285 = vld [vmem:[%s284] sm:$0xff]
  %v286 = vadd.f32 %v285, %v98
  %287 = vst [vmem:[%s284] sm:$0xff] %v286
  %s288 = scalar_lea.vmem %s2, 16
  %v289 = vld [vmem:[%s288] sm:$0xff]
  %v290 = vadd.f32 %v289, %v89
  %291 = vst [vmem:[%s288] sm:$0xff] %v290
  %s292 = scalar_lea.vmem %s3, 16
  %v293 = vld [vmem:[%s292] sm:$0xff]
  %v294 = vadd.f32 %v293, %v99
  %295 = vst [vmem:[%s292] sm:$0xff] %v294
  %s296 = scalar_lea.vmem %s2, 24
  %v297 = vld [vmem:[%s296] sm:$0xff]
  %v298 = vadd.f32 %v297, %v90
  %299 = vst [vmem:[%s296] sm:$0xff] %v298
  %s300 = scalar_lea.vmem %s3, 24
  %v301 = vld [vmem:[%s300] sm:$0xff]
  %v302 = vadd.f32 %v301, %v100
  %303 = vst [vmem:[%s300] sm:$0xff] %v302
  %s304 = scalar_lea.vmem %s2, 32
  %v305 = vld [vmem:[%s304] sm:$0xff]
  %v306 = vadd.f32 %v305, %v91
  %307 = vst [vmem:[%s304] sm:$0xff] %v306
  %s308 = scalar_lea.vmem %s3, 32
  %v309 = vld [vmem:[%s308] sm:$0xff]
  %v310 = vadd.f32 %v309, %v101
  %311 = vst [vmem:[%s308] sm:$0xff] %v310
  %s312 = scalar_lea.vmem %s2, 40
  %v313 = vld [vmem:[%s312] sm:$0xff]
  %v314 = vadd.f32 %v313, %v92
  %315 = vst [vmem:[%s312] sm:$0xff] %v314
  %s316 = scalar_lea.vmem %s3, 40
  %v317 = vld [vmem:[%s316] sm:$0xff]
  %v318 = vadd.f32 %v317, %v102
  %319 = vst [vmem:[%s316] sm:$0xff] %v318
  %s320 = scalar_lea.vmem %s2, 48
  %v321 = vld [vmem:[%s320] sm:$0xff]
  %v322 = vadd.f32 %v321, %v93
  %323 = vst [vmem:[%s320] sm:$0xff] %v322
  %s324 = scalar_lea.vmem %s3, 48
  %v325 = vld [vmem:[%s324] sm:$0xff]
  %v326 = vadd.f32 %v325, %v103
  %327 = vst [vmem:[%s324] sm:$0xff] %v326
  %s328 = scalar_lea.vmem %s2, 56
  %v329 = vld [vmem:[%s328] sm:$0xff]
  %v330 = vadd.f32 %v329, %v94
  %331 = vst [vmem:[%s328] sm:$0xff] %v330
  %s332 = scalar_lea.vmem %s3, 56
  %v333 = vld [vmem:[%s332] sm:$0xff]
  %v334 = vadd.f32 %v333, %v104
  %335 = vst [vmem:[%s332] sm:$0xff] %v334
  %s336 = scalar_lea.vmem %s2, 64
  %v337 = vld [vmem:[%s336] sm:$0xff]
  %v338 = vadd.f32 %v337, %v95
  %339 = vst [vmem:[%s336] sm:$0xff] %v338
  %s340 = scalar_lea.vmem %s3, 64
  %v341 = vld [vmem:[%s340] sm:$0xff]
  %v342 = vadd.f32 %v341, %v105
  %343 = vst [vmem:[%s340] sm:$0xff] %v342
  %s344 = scalar_lea.vmem %s2, 72
  %v345 = vld [vmem:[%s344] sm:$0xff]
  %v346 = vadd.f32 %v345, %v96
  %347 = vst [vmem:[%s344] sm:$0xff] %v346
  %s348 = scalar_lea.vmem %s3, 72
  %v349 = vld [vmem:[%s348] sm:$0xff]
  %v350 = vadd.f32 %v349, %v106
  %351 = vst [vmem:[%s348] sm:$0xff] %v350
  // Predicated region
  $region21: #{loss_fn.4} parent=0 // pred_check
    _
  $region22: #{loss_fn.4} parent=0 // pred_check_branch
    %353 = sbr.rel (0) target = $region24
  $region23: #{loss_fn.4} parent=0 // pred_region
    _
  $region24: #{loss_fn.4} parent=0 // pred_fallthru
    _
  // Predicated region
  $region25: #{loss_fn.4} parent=0 // pred_check
    _
  $region26: #{loss_fn.4} parent=0 // pred_check_branch
    %355 = sbr.rel (0) target = $region28
  $region27: #{loss_fn.4} parent=0 // pred_region
    _
  $region28: #{loss_fn.4} parent=0 // pred_fallthru
    _
  // Predicated region
  $region29: #{loss_fn.4} parent=0 // pred_check
    _
  $region30: #{loss_fn.4} parent=0 // pred_check_branch
    %357 = sbr.rel (0) target = $region32
  $region31: #{loss_fn.4} parent=0 // pred_region
    _
  $region32: #{loss_fn.4} parent=0 // pred_fallthru
    _
  // Predicated region
  $region33: #{loss_fn.4} parent=0 // pred_check
    _
  $region34: #{loss_fn.4} parent=0 // pred_check_branch
    %359 = sbr.rel (0) target = $region36
  $region35: #{loss_fn.4} parent=0 // pred_region
    _
  $region36: #{loss_fn.4} parent=0 // pred_fallthru
    _

// kernel: loss_fn.5
$region0: #{loss_fn.5}
  #allocation0 [shape = 'u32[]', space=smem, size = 0x4, offset = 0x4, fixed_abs, tag = 'smem constant byte address 0x4 - core index']
  #allocation1 [shape = 'u32[72,128]{1,0:T(1,128)}', space=vmem, size = 0x9000, scoped, tag = 'internal scratch']
  %s0 = inlined_call_operand.vmem [shape: f32[32,128], index: 0, kind: input, shape index: {}]
  %s1 = inlined_call_operand.vmem [shape: bf16[32,128], index: 1, kind: input, shape index: {}]
  %s2 = inlined_call_operand.vmem [shape: f32[1,10,8,128], index: 2, kind: output, shape index: {0}]
  %s3 = inlined_call_operand.vmem [shape: f32[1,10,8,128], index: 3, kind: output, shape index: {1}]
  %4 = xla_tuple %s2, %s3
  %s5 = sld [smem:[#allocation0]]
  $region37: #{loss_fn.5} parent=0
    _
  %s7 = ssub.s32 1, %s5
  %s8 = scalar_select 0, %s7, %s5
  // Predicated region
  $region2: #{loss_fn.5} parent=0 // pred_check
    _
  $region3: #{loss_fn.5} parent=0 // pred_check_branch
    %10 = sbr.rel (0) target = $region5
  $region4: #{loss_fn.5} parent=0 // pred_region
    %s11 = sadd.s32 0, 0
    %s12 = smul.u32 4, %s11
    %p13 = scmp.lt.s32.totalorder %s12, 3
    %s14 = scalar_select %p13, %s12, 3
    %s15 = smul.addr %s14, 8
    %s16 = scalar_lea.vmem %s0, %s15
    %s17 = sadd.s32 0, 0
    %s18 = smul.u32 4, %s17
  $region5: #{loss_fn.5} parent=0 // pred_fallthru
    _
  // Predicated region
  $region6: #{loss_fn.5} parent=0 // pred_check
    _
  $region7: #{loss_fn.5} parent=0 // pred_check_branch
    %20 = sbr.rel (0) target = $region9
  $region8: #{loss_fn.5} parent=0 // pred_region
    %s21 = sadd.s32 0, 0
    %s22 = smul.u32 4, %s21
    %p23 = scmp.lt.s32.totalorder %s22, 3
    %s24 = scalar_select %p23, %s22, 3
    %s25 = smul.addr %s24, 4
    %s26 = scalar_lea.vmem %s1, %s25
    %s27 = sadd.s32 0, 0
    %s28 = smul.u32 4, %s27
  $region9: #{loss_fn.5} parent=0 // pred_fallthru
    _
  %s29 = sadd.s32 0, 0
  %s30 = smul.u32 4, %s29
  %p31 = scmp.lt.s32.totalorder %s30, 3
  %s32 = scalar_select %p31, %s30, 3
  %s33 = smul.addr %s32, 8
  %s34 = scalar_lea.vmem %s0, %s33
  %s35 = sadd.s32 0, 0
  %s36 = smul.u32 4, %s35
  %p37 = scmp.lt.s32.totalorder %s36, 3
  %s38 = scalar_select %p37, %s36, 3
  %s39 = smul.addr %s38, 4
  %s40 = scalar_lea.vmem %s1, %s39
  %s41 = sadd.s32 0, 0
  %s42 = smul.u32 4, %s41
  %p43 = scmp.lt.s32.totalorder %s42, 3
  %s44 = scalar_select %p43, %s42, 3
  %s45 = smul.addr %s44, 8
  %s46 = scalar_lea.vmem %s0, %s45
  %s47 = sadd.s32 0, 0
  %s48 = smul.u32 4, %s47
  %s49 = sadd.s32 0, 0
  %s50 = smul.u32 4, %s49
  %p51 = scmp.lt.s32.totalorder %s50, 3
  %s52 = scalar_select %p51, %s50, 3
  %s53 = smul.addr %s52, 4
  %s54 = scalar_lea.vmem %s1, %s53
  %s55 = sadd.s32 0, 0
  %s56 = smul.u32 4, %s55
  %p57 = scmp.eq.s32.totalorder 0, 0
  // Predicated region
  $region10: #{loss_fn.5} parent=0 // pred_check
    %p58 = pneg %p57
  $region11: #{loss_fn.5} parent=0 // pred_check_branch
    %60 = sbr.rel (%p58) target = $region13
  $region12: #{loss_fn.5} parent=0 // pred_region
    %61 = vst [vmem:[%s2] sm:$0xff] 0.0
    %62 = vst [vmem:[%s2 + $0x8] sm:$0xff] 0.0
    %63 = vst [vmem:[%s2 + $0x10] sm:$0xff] 0.0
    %64 = vst [vmem:[%s2 + $0x18] sm:$0xff] 0.0
    %65 = vst [vmem:[%s2 + $0x20] sm:$0xff] 0.0
    %66 = vst [vmem:[%s2 + $0x28] sm:$0xff] 0.0
    %67 = vst [vmem:[%s2 + $0x30] sm:$0xff] 0.0
    %68 = vst [vmem:[%s2 + $0x38] sm:$0xff] 0.0
    %69 = vst [vmem:[%s2 + $0x40] sm:$0xff] 0.0
    %70 = vst [vmem:[%s2 + $0x48] sm:$0xff] 0.0
    %71 = vst [vmem:[%s3] sm:$0xff] 0.0
    %72 = vst [vmem:[%s3 + $0x8] sm:$0xff] 0.0
    %73 = vst [vmem:[%s3 + $0x10] sm:$0xff] 0.0
    %74 = vst [vmem:[%s3 + $0x18] sm:$0xff] 0.0
    %75 = vst [vmem:[%s3 + $0x20] sm:$0xff] 0.0
    %76 = vst [vmem:[%s3 + $0x28] sm:$0xff] 0.0
    %77 = vst [vmem:[%s3 + $0x30] sm:$0xff] 0.0
    %78 = vst [vmem:[%s3 + $0x38] sm:$0xff] 0.0
    %79 = vst [vmem:[%s3 + $0x40] sm:$0xff] 0.0
    %80 = vst [vmem:[%s3 + $0x48] sm:$0xff] 0.0
  $region13: #{loss_fn.5} parent=0 // pred_fallthru
    _
  loop: start=0, step=1, limit=2
  $region14: #{loss_fn.5} parent=0 // loop_pre_header
    _
  $region15: #{loss_fn.5} parent=0 // loop_header
    %s82 = sphi 0, %s86
    %p83 = scmp.ge.s32.totalorder %s82, 2
    %v87 = vphi 0.0, %v208
    %v88 = vphi 0.0, %v218
    %v89 = vphi 0.0, %v228
    %v90 = vphi 0.0, %v238
    %v91 = vphi 0.0, %v248
    %v92 = vphi 0.0, %v258
    %v93 = vphi 0.0, %v268
    %v94 = vphi 0.0, %v278
    %v95 = vphi 0.0, %v288
    %v96 = vphi 0.0, %v298
    %v97 = vphi 0.0, %v210
    %v98 = vphi 0.0, %v220
    %v99 = vphi 0.0, %v230
    %v100 = vphi 0.0, %v240
    %v101 = vphi 0.0, %v250
    %v102 = vphi 0.0, %v260
    %v103 = vphi 0.0, %v270
    %v104 = vphi 0.0, %v280
    %v105 = vphi 0.0, %v290
    %v106 = vphi 0.0, %v300
  $region16: #{loss_fn.5} parent=0 // loop_header_branch
    %85 = sbr.rel (%p83) target = $region20
  $region17: #{loss_fn.5} parent=0 // loop_body
    %s107 = smul.u32 %s82, 16
    %s108 = scalar_lea.vmem %s46, %s107
    %v109 = vld [vmem:[%s108] sm:$0xff]
    %v110 = vld [vmem:[%s108 + $0x8] sm:$0xff]
    %s111 = sshra.s32 %s107, 3
    %s112 = sand.u32 %s107, 7
    %s113 = smul.addr %s111, 4
    %s114 = scalar_lea.vmem %s54, %s113
    %v115 = vld [vmem:[%s114] sm:$0xf]
    %v116 = vld [vmem:[%s114 + $0x4] sm:$0xf]
    %v117 = vunpack.c.l.bf16 %v115
    %v118 = vunpack.c.l.bf16 %v116
    %v119 = vand.u32 2147483647, %v109
    %v120 = vand.u32 2147483647, %v110
    %v121 = vsub.f32 0.0, %v119
    %v122 = vsub.f32 0.0, %v120
    %v123 = vmul.f32 %v121, 1.442695
    %v124 = vpow.pop %v123
    %v125 = vmul.f32 %v122, 1.442695
    %v126 = vpow.pop %v125
    %v127 = vadd.f32 %v124, 1.0
    %v128 = vadd.f32 %v126, 1.0
    %vm129 = vcmp.ge.f32.partialorder %v109, 0.0
    %vm130 = vcmp.ge.f32.partialorder %v110, 0.0
    %v131 = vsel %vm129, 1.0, %v124
    %v132 = vsel %vm130, 1.0, %v126
    %v133 = vrcp.pop %v127
    %v134 = vmul.f32 %v127, %v133
    %v135 = vsub.f32 1.0, %v134
    %v136 = vmul.f32 %v133, %v135
    %v137 = vadd.f32 %v133, %v136
    %vm138 = vweird.f32 %v127
    %vm139 = vweird.f32 %v133
    %vm140 = vmor %vm138, %vm139
    %v141 = vsel %vm140, %v133, %v137
    %v142 = vand.u32 2147483647, %v127
    %vm143 = vcmp.eq.f32.partialorder %v142, 8.507059e+37
    %v144 = vand.u32 %v127, 2147483648
    %v145 = vor.u32 1.1754944e-38, %v144
    %v146 = vsel %vm143, %v145, %v141
    %v147 = vmul.f32 %v131, %v146
    %v148 = vrcp.pop %v128
    %v149 = vmul.f32 %v128, %v148
    %v150 = vsub.f32 1.0, %v149
    %v151 = vmul.f32 %v148, %v150
    %v152 = vadd.f32 %v148, %v151
    %vm153 = vweird.f32 %v128
    %vm154 = vweird.f32 %v148
    %vm155 = vmor %vm153, %vm154
    %v156 = vsel %vm155, %v148, %v152
    %v157 = vand.u32 2147483647, %v128
    %vm158 = vcmp.eq.f32.partialorder %v157, 8.507059e+37
    %v159 = vand.u32 %v128, 2147483648
    %v160 = vor.u32 1.1754944e-38, %v159
    %v161 = vsel %vm158, %v160, %v156
    %v162 = vmul.f32 %v132, %v161
    %v163 = vmax.f32 %v109, 0.0
    %v164 = vmax.f32 %v110, 0.0
    %v165 = vmul.f32 %v109, %v117
    %v166 = vmul.f32 %v110, %v118
    %v167 = vsub.f32 %v163, %v165
    %v168 = vsub.f32 %v164, %v166
    %v169 = vlog2.pop %v127
    %v170 = vmul.f32 %v169, 0.6931472
    %v171 = vlog2.pop %v128
    %v172 = vmul.f32 %v171, 0.6931472
    %v173 = vadd.f32 %v167, %v170
    %v174 = vadd.f32 %v168, %v172
    %v175 = vsub.f32 %v147, %v117
    %v176 = vsub.f32 %v162, %v118
    %v177 = vand.u32 2147483647, %v175
    %v178 = vand.u32 2147483647, %v176
    %vm179 = vcmp.ge.f32.partialorder %v177, 0.0
    %vm180 = vcmp.ge.f32.partialorder %v178, 0.0
    %vm181 = vcmp.ge.f32.partialorder %v177, 0.1
    %vm182 = vcmp.ge.f32.partialorder %v178, 0.1
    %vm183 = vcmp.ge.f32.partialorder %v177, 0.2
    %vm184 = vcmp.ge.f32.partialorder %v178, 0.2
    %vm185 = vcmp.ge.f32.partialorder %v177, 0.3
    %vm186 = vcmp.ge.f32.partialorder %v178, 0.3
    %vm187 = vcmp.ge.f32.partialorder %v177, 0.4
    %vm188 = vcmp.ge.f32.partialorder %v178, 0.4
    %vm189 = vcmp.ge.f32.partialorder %v177, 0.5
    %vm190 = vcmp.ge.f32.partialorder %v178, 0.5
    %vm191 = vcmp.ge.f32.partialorder %v177, 0.6
    %vm192 = vcmp.ge.f32.partialorder %v178, 0.6
    %vm193 = vcmp.ge.f32.partialorder %v177, 0.7
    %vm194 = vcmp.ge.f32.partialorder %v178, 0.7
    %vm195 = vcmp.ge.f32.partialorder %v177, 0.8
    %vm196 = vcmp.ge.f32.partialorder %v178, 0.8
    %vm197 = vcmp.ge.f32.partialorder %v177, 0.9
    %vm198 = vcmp.ge.f32.partialorder %v178, 0.9
    %vm199 = vcmp.ge.f32.partialorder %v177, 1.000001
    %vm200 = vcmp.ge.f32.partialorder %v178, 1.000001
    %vm201 = vmxor %vm179, %vm181
    %vm202 = vmxor %vm180, %vm182
    %v203 = vsel %vm201, 1.0, 0.0
    %v204 = vsel %vm202, 1.0, 0.0
    %v205 = vsel %vm201, %v173, 0.0
    %v206 = vsel %vm202, %v174, 0.0
    %v207 = vadd.f32 %v87, %v203
    %v208 = vadd.f32 %v207, %v204
    %v209 = vadd.f32 %v97, %v205
    %v210 = vadd.f32 %v209, %v206
    %vm211 = vmxor %vm181, %vm183
    %vm212 = vmxor %vm182, %vm184
    %v213 = vsel %vm211, 1.0, 0.0
    %v214 = vsel %vm212, 1.0, 0.0
    %v215 = vsel %vm211, %v173, 0.0
    %v216 = vsel %vm212, %v174, 0.0
    %v217 = vadd.f32 %v88, %v213
    %v218 = vadd.f32 %v217, %v214
    %v219 = vadd.f32 %v98, %v215
    %v220 = vadd.f32 %v219, %v216
    %vm221 = vmxor %vm183, %vm185
    %vm222 = vmxor %vm184, %vm186
    %v223 = vsel %vm221, 1.0, 0.0
    %v224 = vsel %vm222, 1.0, 0.0
    %v225 = vsel %vm221, %v173, 0.0
    %v226 = vsel %vm222, %v174, 0.0
    %v227 = vadd.f32 %v89, %v223
    %v228 = vadd.f32 %v227, %v224
    %v229 = vadd.f32 %v99, %v225
    %v230 = vadd.f32 %v229, %v226
    %vm231 = vmxor %vm185, %vm187
    %vm232 = vmxor %vm186, %vm188
    %v233 = vsel %vm231, 1.0, 0.0
    %v234 = vsel %vm232, 1.0, 0.0
    %v235 = vsel %vm231, %v173, 0.0
    %v236 = vsel %vm232, %v174, 0.0
    %v237 = vadd.f32 %v90, %v233
    %v238 = vadd.f32 %v237, %v234
    %v239 = vadd.f32 %v100, %v235
    %v240 = vadd.f32 %v239, %v236
    %vm241 = vmxor %vm187, %vm189
    %vm242 = vmxor %vm188, %vm190
    %v243 = vsel %vm241, 1.0, 0.0
    %v244 = vsel %vm242, 1.0, 0.0
    %v245 = vsel %vm241, %v173, 0.0
    %v246 = vsel %vm242, %v174, 0.0
    %v247 = vadd.f32 %v91, %v243
    %v248 = vadd.f32 %v247, %v244
    %v249 = vadd.f32 %v101, %v245
    %v250 = vadd.f32 %v249, %v246
    %vm251 = vmxor %vm189, %vm191
    %vm252 = vmxor %vm190, %vm192
    %v253 = vsel %vm251, 1.0, 0.0
    %v254 = vsel %vm252, 1.0, 0.0
    %v255 = vsel %vm251, %v173, 0.0
    %v256 = vsel %vm252, %v174, 0.0
    %v257 = vadd.f32 %v92, %v253
    %v258 = vadd.f32 %v257, %v254
    %v259 = vadd.f32 %v102, %v255
    %v260 = vadd.f32 %v259, %v256
    %vm261 = vmxor %vm191, %vm193
    %vm262 = vmxor %vm192, %vm194
    %v263 = vsel %vm261, 1.0, 0.0
    %v264 = vsel %vm262, 1.0, 0.0
    %v265 = vsel %vm261, %v173, 0.0
    %v266 = vsel %vm262, %v174, 0.0
    %v267 = vadd.f32 %v93, %v263
    %v268 = vadd.f32 %v267, %v264
    %v269 = vadd.f32 %v103, %v265
    %v270 = vadd.f32 %v269, %v266
    %vm271 = vmxor %vm193, %vm195
    %vm272 = vmxor %vm194, %vm196
    %v273 = vsel %vm271, 1.0, 0.0
    %v274 = vsel %vm272, 1.0, 0.0
    %v275 = vsel %vm271, %v173, 0.0
    %v276 = vsel %vm272, %v174, 0.0
    %v277 = vadd.f32 %v94, %v273
    %v278 = vadd.f32 %v277, %v274
    %v279 = vadd.f32 %v104, %v275
    %v280 = vadd.f32 %v279, %v276
    %vm281 = vmxor %vm195, %vm197
    %vm282 = vmxor %vm196, %vm198
    %v283 = vsel %vm281, 1.0, 0.0
    %v284 = vsel %vm282, 1.0, 0.0
    %v285 = vsel %vm281, %v173, 0.0
    %v286 = vsel %vm282, %v174, 0.0
    %v287 = vadd.f32 %v95, %v283
    %v288 = vadd.f32 %v287, %v284
    %v289 = vadd.f32 %v105, %v285
    %v290 = vadd.f32 %v289, %v286
    %vm291 = vmxor %vm197, %vm199
    %vm292 = vmxor %vm198, %vm200
    %v293 = vsel %vm291, 1.0, 0.0
    %v294 = vsel %vm292, 1.0, 0.0
    %v295 = vsel %vm291, %v173, 0.0
    %v296 = vsel %vm292, %v174, 0.0
    %v297 = vadd.f32 %v96, %v293
    %v298 = vadd.f32 %v297, %v294
    %v299 = vadd.f32 %v106, %v295
    %v300 = vadd.f32 %v299, %v296
  $region18: #{loss_fn.5} parent=0 // loop_footer
    %s86 = sadd.s32 1, %s82
  $region19: #{loss_fn.5} parent=0 // loop_footer_branch
    %81 = sbr.rel target = $region15
  $region20: #{loss_fn.5} parent=0 // loop_exit
    _
  %v301 = vld [vmem:[%s2] sm:$0xff]
  %v302 = vadd.f32 %v301, %v87
  %303 = vst [vmem:[%s2] sm:$0xff] %v302
  %v304 = vld [vmem:[%s3] sm:$0xff]
  %v305 = vadd.f32 %v304, %v97
  %306 = vst [vmem:[%s3] sm:$0xff] %v305
  %s307 = scalar_lea.vmem %s2, 8
  %v308 = vld [vmem:[%s307] sm:$0xff]
  %v309 = vadd.f32 %v308, %v88
  %310 = vst [vmem:[%s307] sm:$0xff] %v309
  %s311 = scalar_lea.vmem %s3, 8
  %v312 = vld [vmem:[%s311] sm:$0xff]
  %v313 = vadd.f32 %v312, %v98
  %314 = vst [vmem:[%s311] sm:$0xff] %v313
  %s315 = scalar_lea.vmem %s2, 16
  %v316 = vld [vmem:[%s315] sm:$0xff]
  %v317 = vadd.f32 %v316, %v89
  %318 = vst [vmem:[%s315] sm:$0xff] %v317
  %s319 = scalar_lea.vmem %s3, 16
  %v320 = vld [vmem:[%s319] sm:$0xff]
  %v321 = vadd.f32 %v320, %v99
  %322 = vst [vmem:[%s319] sm:$0xff] %v321
  %s323 = scalar_lea.vmem %s2, 24
  %v324 = vld [vmem:[%s323] sm:$0xff]
  %v325 = vadd.f32 %v324, %v90
  %326 = vst [vmem:[%s323] sm:$0xff] %v325
  %s327 = scalar_lea.vmem %s3, 24
  %v328 = vld [vmem:[%s327] sm:$0xff]
  %v329 = vadd.f32 %v328, %v100
  %330 = vst [vmem:[%s327] sm:$0xff] %v329
  %s331 = scalar_lea.vmem %s2, 32
  %v332 = vld [vmem:[%s331] sm:$0xff]
  %v333 = vadd.f32 %v332, %v91
  %334 = vst [vmem:[%s331] sm:$0xff] %v333
  %s335 = scalar_lea.vmem %s3, 32
  %v336 = vld [vmem:[%s335] sm:$0xff]
  %v337 = vadd.f32 %v336, %v101
  %338 = vst [vmem:[%s335] sm:$0xff] %v337
  %s339 = scalar_lea.vmem %s2, 40
  %v340 = vld [vmem:[%s339] sm:$0xff]
  %v341 = vadd.f32 %v340, %v92
  %342 = vst [vmem:[%s339] sm:$0xff] %v341
  %s343 = scalar_lea.vmem %s3, 40
  %v344 = vld [vmem:[%s343] sm:$0xff]
  %v345 = vadd.f32 %v344, %v102
  %346 = vst [vmem:[%s343] sm:$0xff] %v345
  %s347 = scalar_lea.vmem %s2, 48
  %v348 = vld [vmem:[%s347] sm:$0xff]
  %v349 = vadd.f32 %v348, %v93
  %350 = vst [vmem:[%s347] sm:$0xff] %v349
  %s351 = scalar_lea.vmem %s3, 48
  %v352 = vld [vmem:[%s351] sm:$0xff]
  %v353 = vadd.f32 %v352, %v103
  %354 = vst [vmem:[%s351] sm:$0xff] %v353
  %s355 = scalar_lea.vmem %s2, 56
  %v356 = vld [vmem:[%s355] sm:$0xff]
  %v357 = vadd.f32 %v356, %v94
  %358 = vst [vmem:[%s355] sm:$0xff] %v357
  %s359 = scalar_lea.vmem %s3, 56
  %v360 = vld [vmem:[%s359] sm:$0xff]
  %v361 = vadd.f32 %v360, %v104
  %362 = vst [vmem:[%s359] sm:$0xff] %v361
  %s363 = scalar_lea.vmem %s2, 64
  %v364 = vld [vmem:[%s363] sm:$0xff]
  %v365 = vadd.f32 %v364, %v95
  %366 = vst [vmem:[%s363] sm:$0xff] %v365
  %s367 = scalar_lea.vmem %s3, 64
  %v368 = vld [vmem:[%s367] sm:$0xff]
  %v369 = vadd.f32 %v368, %v105
  %370 = vst [vmem:[%s367] sm:$0xff] %v369
  %s371 = scalar_lea.vmem %s2, 72
  %v372 = vld [vmem:[%s371] sm:$0xff]
  %v373 = vadd.f32 %v372, %v96
  %374 = vst [vmem:[%s371] sm:$0xff] %v373
  %s375 = scalar_lea.vmem %s3, 72
  %v376 = vld [vmem:[%s375] sm:$0xff]
  %v377 = vadd.f32 %v376, %v106
  %378 = vst [vmem:[%s375] sm:$0xff] %v377
  // Predicated region
  $region21: #{loss_fn.5} parent=0 // pred_check
    _
  $region22: #{loss_fn.5} parent=0 // pred_check_branch
    %380 = sbr.rel (0) target = $region24
  $region23: #{loss_fn.5} parent=0 // pred_region
    _
  $region24: #{loss_fn.5} parent=0 // pred_fallthru
    _
  // Predicated region
  $region25: #{loss_fn.5} parent=0 // pred_check
    _
  $region26: #{loss_fn.5} parent=0 // pred_check_branch
    %382 = sbr.rel (0) target = $region28
  $region27: #{loss_fn.5} parent=0 // pred_region
    _
  $region28: #{loss_fn.5} parent=0 // pred_fallthru
    _
  // Predicated region
  $region29: #{loss_fn.5} parent=0 // pred_check
    _
  $region30: #{loss_fn.5} parent=0 // pred_check_branch
    %384 = sbr.rel (0) target = $region32
  $region31: #{loss_fn.5} parent=0 // pred_region
    _
  $region32: #{loss_fn.5} parent=0 // pred_fallthru
    _
  // Predicated region
  $region33: #{loss_fn.5} parent=0 // pred_check
    _
  $region34: #{loss_fn.5} parent=0 // pred_check_branch
    %386 = sbr.rel (0) target = $region36
  $region35: #{loss_fn.5} parent=0 // pred_region
    _
  $region36: #{loss_fn.5} parent=0 // pred_fallthru
    _

</llo_original>
